<compile_context>
chip_gen: v7x
topology: tpu7x:2x2x1
jax: 0.10.0
libtpu: 0.0.40
codegen_flags: <defaults>
</compile_context>

<pallas_src>
import functools

import jax
import jax.numpy as jnp
from jax.experimental import pallas as pl
from jax.experimental.pallas import tpu as pltpu


# ----------------------------------------------------------------------------
# Kernel A: fused conv1 (1x1) + conv2 (3x3, SAME) + gate channel-sums
#   inputs  (per image, channel-major):
#     x1   : (Cx, S)   bf16     S = H*W
#     xf   : (Cf, S)   bf16     Cf = 256
#     xcol : (1, S)    int32    column index (s mod W), precomputed in wrapper
#     w1t  : (C1, Cx)  f32      conv1 weight^T with BN scale folded in
#     b1   : (C1, 1)   f32      conv1 folded BN shift
#     w2t  : (9, C2, Cf) bf16   conv2 per-tap weight^T with BN scale folded in
#     b2   : (C2, 1)   f32      conv2 folded BN shift
#   outputs:
#     fuse : (C1+C2, S) bf16    x_fuse (conv1 in rows [0,C1), conv2 in [C1,..))
#     sums : (C1+C2, 1) f32     per-channel spatial sums (for the gate mean)
# ----------------------------------------------------------------------------
def _fuse_kernel(x1_ref, xf_ref, xcol_ref, w1t_ref, b1_ref, w2_ref, b2_ref,
                 fuse_ref, sums_ref, *, H, W):
    f32 = jnp.float32
    S = H * W

    # ---- conv1: 1x1 with Cin=4 -> VPU broadcast FMAs (K=4 would idle the MXU)
    x1 = x1_ref[0].astype(f32)                      # (Cx, S)
    w1t = w1t_ref[...]                              # (C1, Cx) f32
    Cx = x1.shape[0]
    y1 = w1t[:, 0:1] * x1[0:1, :]
    for c in range(1, Cx):
        y1 = y1 + w1t[:, c:c + 1] * x1[c:c + 1, :]
    y1 = jnp.maximum(y1 + b1_ref[...], 0.0)         # (C1, S) f32

    # ---- conv2: 9 matmuls on the unshifted (Cf, S) operand; shift/mask the
    #      64-wide output instead of slicing/reshaping/padding the input.
    xf = xf_ref[0]                                  # (Cf, S) bf16
    xcol = xcol_ref[...]                            # (1, S) int32
    C2 = w2_ref.shape[1]
    acc = jnp.zeros((C2, S), f32)
    for t in range(9):
        dy, dx = t // 3 - 1, t % 3 - 1
        d = dy * W + dx
        tap = jnp.dot(w2_ref[t], xf, preferred_element_type=f32)   # (C2, S)
        # out[:, s] += tap[:, s + d]  (zero outside the image)
        if d > 0:
            tap = jnp.concatenate(
                [tap[:, d:], jnp.zeros((C2, d), f32)], axis=1)
        elif d < 0:
            tap = jnp.concatenate(
                [jnp.zeros((C2, -d), f32), tap[:, :d]], axis=1)
        # mask columns that wrapped across a row boundary
        if dx == 1:
            tap = jnp.where(xcol <= W - 2, tap, 0.0)
        elif dx == -1:
            tap = jnp.where(xcol >= 1, tap, 0.0)
        acc = acc + tap
    y2 = jnp.maximum(acc + b2_ref[...], 0.0)        # (C2, S) f32

    # ---- write both conv results into their channel slices (no XLA concat),
    #      plus per-channel spatial sums for the gate mean (no gating kernel).
    C1 = y1.shape[0]
    fuse_ref[0, :C1, :] = y1.astype(fuse_ref.dtype)
    fuse_ref[0, C1:, :] = y2.astype(fuse_ref.dtype)
    sums_ref[0, :C1, :] = jnp.sum(y1, axis=1, keepdims=True)
    sums_ref[0, C1:, :] = jnp.sum(y2, axis=1, keepdims=True)


# ----------------------------------------------------------------------------
# Kernel B: conv3 head.  w1g already contains diag(hard_gate) * BN_scale.
#   h   = relu(w1g @ x_fuse + b1)        (C3, TS)
#   seg = w2t @ h + b2                   (nc, TS)   -- spatial on lanes
# ----------------------------------------------------------------------------
def _head_kernel(xf_ref, w1_ref, b1_ref, w2_ref, b2_ref, o_ref):
    xg = xf_ref[0]                                                   # (96, TS) bf16
    h = jnp.dot(w1_ref[0], xg, preferred_element_type=jnp.float32)   # (C3, TS)
    h = jnp.maximum(h + b1_ref[...], 0.0)
    seg = jnp.dot(w2_ref[...], h.astype(w2_ref.dtype),
                  preferred_element_type=jnp.float32) + b2_ref[...]
    o_ref[0] = seg.astype(o_ref.dtype)


# ----------------------------------------------------------------------------
# Full GamaPartDecoder forward
# ----------------------------------------------------------------------------
def gama_part_decoder(params, x_nchw, xfea_nchw):
    N, Cx, H, W = x_nchw.shape
    Cf = xfea_nchw.shape[1]
    S = H * W
    C1 = params["conv1_w"].shape[1]        # 32
    C2 = params["conv2_w"].shape[3]        # 64
    Cfuse = C1 + C2                        # 96
    C3 = params["conv3_w1"].shape[1]       # 64
    nc = params["conv3_w2"].shape[1]

    f32, bf16 = jnp.float32, jnp.bfloat16

    # ---- metadata-only reshapes (no NCHW->NHWC transpose, no pad, no concat)
    x1 = x_nchw.reshape(N, Cx, S).astype(bf16)
    xf = xfea_nchw.reshape(N, Cf, S).astype(bf16)
    xcol = jnp.tile(jnp.arange(W, dtype=jnp.int32), H)[None, :]      # (1, S)

    # ---- fold BN scales into channel-major (transposed) conv weights
    w1t = (params["conv1_w"].T * params["conv1_scale"][:, None]).astype(f32)
    b1 = params["conv1_shift"].reshape(C1, 1).astype(f32)
    w2t = (jnp.transpose(params["conv2_w"], (0, 1, 3, 2))            # (3,3,C2,Cf)
           * params["conv2_scale"][None, None, :, None]
           ).reshape(9, C2, Cf).astype(bf16)
    b2c = params["conv2_shift"].reshape(C2, 1).astype(f32)

    x_fuse, sums = pl.pallas_call(
        functools.partial(_fuse_kernel, H=H, W=W),
        out_shape=(jax.ShapeDtypeStruct((N, Cfuse, S), bf16),
                   jax.ShapeDtypeStruct((N, Cfuse, 1), f32)),
        grid=(N,),
        in_specs=[
            pl.BlockSpec((1, Cx, S), lambda n: (n, 0, 0)),
            pl.BlockSpec((1, Cf, S), lambda n: (n, 0, 0)),
            pl.BlockSpec((1, S), lambda n: (0, 0)),
            pl.BlockSpec((C1, Cx), lambda n: (0, 0)),
            pl.BlockSpec((C1, 1), lambda n: (0, 0)),
            pl.BlockSpec((9, C2, Cf), lambda n: (0, 0, 0)),
            pl.BlockSpec((C2, 1), lambda n: (0, 0)),
        ],
        out_specs=(pl.BlockSpec((1, Cfuse, S), lambda n: (n, 0, 0)),
                   pl.BlockSpec((1, Cfuse, 1), lambda n: (n, 0, 0))),
        compiler_params=pltpu.CompilerParams(dimension_semantics=("parallel",)),
    )(x1, xf, xcol, w1t, b1, w2t, b2c)

    # ---- gate: tiny 96->96 FC (plain JAX; hopeless MXU work in a kernel)
    mean = sums[:, :, 0] / float(S)                                  # (N, 96)
    probs = jax.nn.sigmoid(mean @ params["gate_w"] + params["gate_b"])
    act_gp = probs
    hard = (probs > 0.5).astype(f32)        # force_hard forward value
    # TODO(synk): exact GatingBlock (gumbel-noise variant) source not provided.

    # ---- fold hard gate + BN scale into conv3's first 1x1 weight (per image):
    #      (x * g) @ w == x @ (diag(g) w)
    w31t = params["conv3_w1"].T * params["conv3_scale"][:, None]     # (C3, 96)
    w31g = (w31t[None, :, :] * hard[:, None, :]).astype(bf16)        # (N, C3, 96)
    b3 = params["conv3_shift"].reshape(C3, 1).astype(f32)
    w32t = params["conv3_w2"].T.astype(bf16)                         # (nc, C3)
    b32 = params["conv3_b2"].reshape(nc, 1).astype(f32)

    # spatial tile for the head (no halo needed); large tiles, multiple of 128
    TS = next((t for t in (2048, 1024, 512, 256, 128) if S % t == 0), S)
    R = S // TS

    seg = pl.pallas_call(
        _head_kernel,
        out_shape=jax.ShapeDtypeStruct((N, nc, S), f32),
        grid=(N, R),
        in_specs=[
            pl.BlockSpec((1, Cfuse, TS), lambda n, r: (n, 0, r)),
            pl.BlockSpec((1, C3, Cfuse), lambda n, r: (n, 0, 0)),
            pl.BlockSpec((C3, 1), lambda n, r: (0, 0)),
            pl.BlockSpec((nc, C3), lambda n, r: (0, 0)),
            pl.BlockSpec((nc, 1), lambda n, r: (0, 0)),
        ],
        out_specs=pl.BlockSpec((1, nc, TS), lambda n, r: (n, 0, r)),
        compiler_params=pltpu.CompilerParams(
            dimension_semantics=("parallel", "parallel")),
    )(x_fuse, w31g, b3, w32t, b32)

    x_seg = seg.reshape(N, nc, H, W)        # metadata-only reshape back to NCHW
    return x_seg, act_gp


# ----------------------------------------------------------------------------
# Pure-JAX f32 reference (for the sanity check)
# ----------------------------------------------------------------------------
def reference(params, x_nchw, xfea_nchw, hard_override=None):
    hp = jax.lax.Precision.HIGHEST
    x = jnp.transpose(x_nchw, (0, 2, 3, 1))
    xf = jnp.transpose(xfea_nchw, (0, 2, 3, 1))
    y1 = jnp.maximum(
        jnp.einsum("nhwc,cd->nhwd", x, params["conv1_w"], precision=hp)
        * params["conv1_scale"] + params["conv1_shift"], 0.0)
    y2 = jax.lax.conv_general_dilated(
        xf, params["conv2_w"], (1, 1), "SAME",
        dimension_numbers=("NHWC", "HWIO", "NHWC"), precision=hp)
    y2 = jnp.maximum(y2 * params["conv2_scale"] + params["conv2_shift"], 0.0)
    xfuse = jnp.concatenate([y1, y2], axis=-1)
    mean = jnp.mean(xfuse, axis=(1, 2))
    probs = jax.nn.sigmoid(mean @ params["gate_w"] + params["gate_b"])
    hard = ((probs > 0.5).astype(jnp.float32)
            if hard_override is None else hard_override)
    xg = xfuse * hard[:, None, None, :]
    h = jnp.maximum(
        jnp.einsum("nhwc,cd->nhwd", xg, params["conv3_w1"], precision=hp)
        * params["conv3_scale"] + params["conv3_shift"], 0.0)
    seg = jnp.einsum("nhwc,cd->nhwd", h, params["conv3_w2"], precision=hp) \
        + params["conv3_b2"]
    return jnp.transpose(seg, (0, 3, 1, 2)), probs


# ----------------------------------------------------------------------------
# Deterministic parameter construction
# ----------------------------------------------------------------------------
def make_params(key, hbody_cls, num_classes):
    ks = jax.random.split(key, 10)

    def bn_fold(kg, c, eps=1e-5):
        k1, k2, k3, k4 = jax.random.split(kg, 4)
        gamma = 1.0 + 0.1 * jax.random.normal(k1, (c,), jnp.float32)
        beta = 0.1 * jax.random.normal(k2, (c,), jnp.float32)
        rmean = 0.1 * jax.random.normal(k3, (c,), jnp.float32)
        rvar = jax.random.uniform(k4, (c,), jnp.float32, 0.5, 1.5)
        scale = gamma * jax.lax.rsqrt(rvar + eps)
        shift = beta - rmean * scale
        return scale, shift

    p = {}
    p["conv1_w"] = 0.1 * jax.random.normal(ks[0], (hbody_cls, 32), jnp.float32)
    p["conv1_scale"], p["conv1_shift"] = bn_fold(ks[1], 32)
    p["conv2_w"] = 0.02 * jax.random.normal(ks[2], (3, 3, 256, 64), jnp.float32)
    p["conv2_scale"], p["conv2_shift"] = bn_fold(ks[3], 64)
    p["gate_w"] = 0.2 * jax.random.normal(ks[4], (96, 96), jnp.float32)
    p["gate_b"] = 0.1 * jax.random.normal(ks[5], (96,), jnp.float32)
    p["conv3_w1"] = 0.1 * jax.random.normal(ks[6], (96, 64), jnp.float32)
    p["conv3_scale"], p["conv3_shift"] = bn_fold(ks[7], 64)
    p["conv3_w2"] = 0.1 * jax.random.normal(ks[8], (64, num_classes), jnp.float32)
    p["conv3_b2"] = 0.1 * jax.random.normal(ks[9], (num_classes,), jnp.float32)
    return p


if __name__ == "__main__":
    hbody_cls, num_classes = 4, 7
    N, H, W = 2, 16, 16

    key = jax.random.PRNGKey(0)
    kp, kx, kf = jax.random.split(key, 3)
    params = make_params(kp, hbody_cls, num_classes)

    x = jax.random.normal(kx, (N, hbody_cls, H, W), jnp.float32)
    x_fea = jax.random.normal(kf, (N, 256, H, W), jnp.float32)

    fwd = jax.jit(functools.partial(gama_part_decoder, params))
    x_seg, act_gp = fwd(x, x_fea)
    jax.block_until_ready((x_seg, act_gp))

    assert x_seg.shape == (N, num_classes, H, W)
    assert act_gp.shape == (N, 96)

    # gate probabilities vs. independent f32 reference
    _, ref_probs = reference(params, x, x_fea)
    assert jnp.allclose(act_gp, ref_probs, atol=3e-2, rtol=3e-2)

    # seg vs. f32 reference; use the kernel's own hard gate so a logit sitting
    # exactly at the 0.5 boundary under bf16 cannot cause a spurious mismatch
    # (the threshold itself is validated through act_gp above).
    kernel_hard = (act_gp > 0.5).astype(jnp.float32)
    ref_seg, _ = reference(params, x, x_fea, hard_override=kernel_hard)
    assert jnp.allclose(x_seg, ref_seg, atol=3e-2, rtol=3e-2)

    print("KERNEL_OK")
</pallas_src>

<mosaic_0001>
module attributes {stable_mosaic.version = 11 : i64} {
  func.func @_fuse_kernel(%arg0: i32, %arg1: memref<1x4x256xbf16, #tpu.memory_space<vmem>>, %arg2: memref<1x256x256xbf16, #tpu.memory_space<vmem>>, %arg3: memref<1x256xi32, #tpu.memory_space<vmem>>, %arg4: memref<32x4xf32, #tpu.memory_space<vmem>>, %arg5: memref<32x1xf32, #tpu.memory_space<vmem>>, %arg6: memref<9x64x256xbf16, #tpu.memory_space<vmem>>, %arg7: memref<64x1xf32, #tpu.memory_space<vmem>>, %arg8: memref<1x96x256xbf16, #tpu.memory_space<vmem>>, %arg9: memref<1x96x1xf32, #tpu.memory_space<vmem>>) attributes {dimension_semantics = [#tpu.dimension_semantics<parallel>], iteration_bounds = array<i64: 2>, scalar_prefetch = 0 : i64, scratch_operands = 0 : i64, tpu.core_type = #tpu.core_type<tc>, window_params = [{transform_indices = @transform_0, window_bounds = array<i64: 1, 4, 256>}, {transform_indices = @transform_1, window_bounds = array<i64: 1, 256, 256>}, {pipeline_mode = #tpu.pipeline_mode<synchronous>, transform_indices = @transform_2, window_bounds = array<i64: 1, 256>}, {pipeline_mode = #tpu.pipeline_mode<synchronous>, transform_indices = @transform_3, window_bounds = array<i64: 32, 4>}, {pipeline_mode = #tpu.pipeline_mode<synchronous>, transform_indices = @transform_4, window_bounds = array<i64: 32, 1>}, {pipeline_mode = #tpu.pipeline_mode<synchronous>, transform_indices = @transform_5, window_bounds = array<i64: 9, 64, 256>}, {pipeline_mode = #tpu.pipeline_mode<synchronous>, transform_indices = @transform_6, window_bounds = array<i64: 64, 1>}, {transform_indices = @transform_7, window_bounds = array<i64: 1, 96, 256>}, {transform_indices = @transform_8, window_bounds = array<i64: 1, 96, 1>}]} {
    %c0 = arith.constant 0 : index
    %c0_0 = arith.constant 0 : index
    %c0_1 = arith.constant 0 : index
    %0 = vector.load %arg1[%c0, %c0_0, %c0_1] : memref<1x4x256xbf16, #tpu.memory_space<vmem>>, vector<1x4x256xbf16>
    %1 = vector.shape_cast %0 : vector<1x4x256xbf16> to vector<4x256xbf16>
    %2 = arith.extf %1 : vector<4x256xbf16> to vector<4x256xf32>
    %c0_2 = arith.constant 0 : index
    %c0_3 = arith.constant 0 : index
    %3 = vector.load %arg4[%c0_2, %c0_3] : memref<32x4xf32, #tpu.memory_space<vmem>>, vector<32x4xf32>
    %4 = vector.extract_strided_slice %3 {offsets = [0, 0], sizes = [32, 1], strides = [1, 1]} : vector<32x4xf32> to vector<32x1xf32>
    %5 = vector.extract_strided_slice %2 {offsets = [0, 0], sizes = [1, 256], strides = [1, 1]} : vector<4x256xf32> to vector<1x256xf32>
    %6 = vector.broadcast %4 : vector<32x1xf32> to vector<32x256xf32>
    %7 = vector.broadcast %5 : vector<1x256xf32> to vector<32x256xf32>
    %8 = arith.mulf %6, %7 : vector<32x256xf32>
    %9 = vector.extract_strided_slice %3 {offsets = [0, 1], sizes = [32, 1], strides = [1, 1]} : vector<32x4xf32> to vector<32x1xf32>
    %10 = vector.extract_strided_slice %2 {offsets = [1, 0], sizes = [1, 256], strides = [1, 1]} : vector<4x256xf32> to vector<1x256xf32>
    %11 = vector.broadcast %9 : vector<32x1xf32> to vector<32x256xf32>
    %12 = vector.broadcast %10 : vector<1x256xf32> to vector<32x256xf32>
    %13 = arith.mulf %11, %12 : vector<32x256xf32>
    %14 = arith.addf %8, %13 : vector<32x256xf32>
    %15 = vector.extract_strided_slice %3 {offsets = [0, 2], sizes = [32, 1], strides = [1, 1]} : vector<32x4xf32> to vector<32x1xf32>
    %16 = vector.extract_strided_slice %2 {offsets = [2, 0], sizes = [1, 256], strides = [1, 1]} : vector<4x256xf32> to vector<1x256xf32>
    %17 = vector.broadcast %15 : vector<32x1xf32> to vector<32x256xf32>
    %18 = vector.broadcast %16 : vector<1x256xf32> to vector<32x256xf32>
    %19 = arith.mulf %17, %18 : vector<32x256xf32>
    %20 = arith.addf %14, %19 : vector<32x256xf32>
    %21 = vector.extract_strided_slice %3 {offsets = [0, 3], sizes = [32, 1], strides = [1, 1]} : vector<32x4xf32> to vector<32x1xf32>
    %22 = vector.extract_strided_slice %2 {offsets = [3, 0], sizes = [1, 256], strides = [1, 1]} : vector<4x256xf32> to vector<1x256xf32>
    %23 = vector.broadcast %21 : vector<32x1xf32> to vector<32x256xf32>
    %24 = vector.broadcast %22 : vector<1x256xf32> to vector<32x256xf32>
    %25 = arith.mulf %23, %24 : vector<32x256xf32>
    %26 = arith.addf %20, %25 : vector<32x256xf32>
    %c0_4 = arith.constant 0 : index
    %c0_5 = arith.constant 0 : index
    %27 = vector.load %arg5[%c0_4, %c0_5] : memref<32x1xf32, #tpu.memory_space<vmem>>, vector<32x1xf32>
    %28 = vector.broadcast %27 : vector<32x1xf32> to vector<32x256xf32>
    %29 = arith.addf %26, %28 : vector<32x256xf32>
    %cst = arith.constant 0.000000e+00 : f32
    %30 = vector.broadcast %cst : f32 to vector<32x256xf32>
    %31 = arith.maximumf %29, %30 : vector<32x256xf32>
    %c0_6 = arith.constant 0 : index
    %c0_7 = arith.constant 0 : index
    %c0_8 = arith.constant 0 : index
    %32 = vector.load %arg2[%c0_6, %c0_7, %c0_8] : memref<1x256x256xbf16, #tpu.memory_space<vmem>>, vector<1x256x256xbf16>
    %33 = vector.shape_cast %32 : vector<1x256x256xbf16> to vector<256x256xbf16>
    %c0_9 = arith.constant 0 : index
    %c0_10 = arith.constant 0 : index
    %34 = vector.load %arg3[%c0_9, %c0_10] : memref<1x256xi32, #tpu.memory_space<vmem>>, vector<1x256xi32>
    %cst_11 = arith.constant 0.000000e+00 : f32
    %35 = vector.broadcast %cst_11 : f32 to vector<64x256xf32>
    %c0_12 = arith.constant 0 : index
    %c0_13 = arith.constant 0 : index
    %c0_14 = arith.constant 0 : index
    %36 = vector.load %arg6[%c0_12, %c0_13, %c0_14] : memref<9x64x256xbf16, #tpu.memory_space<vmem>>, vector<1x64x256xbf16>
    %37 = vector.shape_cast %36 : vector<1x64x256xbf16> to vector<64x256xbf16>
    %cst_15 = arith.constant dense<0.000000e+00> : vector<64x256xf32>
    %38 = tpu.matmul %37, %33, %cst_15 {dimension_numbers = #tpu.dot_dimension_numbers<[1], [0], [0], [1], [0, 0, 1, 1], [], []>} : vector<64x256xbf16>, vector<256x256xbf16>, vector<64x256xf32> -> vector<64x256xf32>
    %cst_16 = arith.constant 0.000000e+00 : f32
    %39 = vector.broadcast %cst_16 : f32 to vector<64x17xf32>
    %40 = vector.extract_strided_slice %38 {offsets = [0, 0], sizes = [64, 239], strides = [1, 1]} : vector<64x256xf32> to vector<64x239xf32>
    %41 = tpu.concatenate %39, %40 in 1 : vector<64x17xf32>, vector<64x239xf32> -> vector<64x256xf32>
    %c1_i32 = arith.constant 1 : i32
    %42 = vector.broadcast %c1_i32 : i32 to vector<1x256xi32>
    %43 = arith.cmpi sge, %34, %42 : vector<1x256xi32>
    %cst_17 = arith.constant 0.000000e+00 : f32
    %44 = vector.shape_cast %43 : vector<1x256xi1> to vector<1x256xi1>
    %45 = vector.broadcast %44 : vector<1x256xi1> to vector<64x256xi1>
    %46 = vector.broadcast %cst_17 : f32 to vector<64x256xf32>
    %47 = arith.select %45, %41, %46 : vector<64x256xi1>, vector<64x256xf32>
    %48 = arith.addf %35, %47 : vector<64x256xf32>
    %c1 = arith.constant 1 : index
    %c0_18 = arith.constant 0 : index
    %c0_19 = arith.constant 0 : index
    %49 = vector.load %arg6[%c1, %c0_18, %c0_19] : memref<9x64x256xbf16, #tpu.memory_space<vmem>>, vector<1x64x256xbf16>
    %50 = vector.shape_cast %49 : vector<1x64x256xbf16> to vector<64x256xbf16>
    %cst_20 = arith.constant dense<0.000000e+00> : vector<64x256xf32>
    %51 = tpu.matmul %50, %33, %cst_20 {dimension_numbers = #tpu.dot_dimension_numbers<[1], [0], [0], [1], [0, 0, 1, 1], [], []>} : vector<64x256xbf16>, vector<256x256xbf16>, vector<64x256xf32> -> vector<64x256xf32>
    %cst_21 = arith.constant 0.000000e+00 : f32
    %52 = vector.broadcast %cst_21 : f32 to vector<64x16xf32>
    %53 = vector.extract_strided_slice %51 {offsets = [0, 0], sizes = [64, 240], strides = [1, 1]} : vector<64x256xf32> to vector<64x240xf32>
    %54 = tpu.concatenate %52, %53 in 1 : vector<64x16xf32>, vector<64x240xf32> -> vector<64x256xf32>
    %55 = arith.addf %48, %54 : vector<64x256xf32>
    %c2 = arith.constant 2 : index
    %c0_22 = arith.constant 0 : index
    %c0_23 = arith.constant 0 : index
    %56 = vector.load %arg6[%c2, %c0_22, %c0_23] : memref<9x64x256xbf16, #tpu.memory_space<vmem>>, vector<1x64x256xbf16>
    %57 = vector.shape_cast %56 : vector<1x64x256xbf16> to vector<64x256xbf16>
    %cst_24 = arith.constant dense<0.000000e+00> : vector<64x256xf32>
    %58 = tpu.matmul %57, %33, %cst_24 {dimension_numbers = #tpu.dot_dimension_numbers<[1], [0], [0], [1], [0, 0, 1, 1], [], []>} : vector<64x256xbf16>, vector<256x256xbf16>, vector<64x256xf32> -> vector<64x256xf32>
    %cst_25 = arith.constant 0.000000e+00 : f32
    %59 = vector.broadcast %cst_25 : f32 to vector<64x15xf32>
    %60 = vector.extract_strided_slice %58 {offsets = [0, 0], sizes = [64, 241], strides = [1, 1]} : vector<64x256xf32> to vector<64x241xf32>
    %61 = tpu.concatenate %59, %60 in 1 : vector<64x15xf32>, vector<64x241xf32> -> vector<64x256xf32>
    %c14_i32 = arith.constant 14 : i32
    %62 = vector.broadcast %c14_i32 : i32 to vector<1x256xi32>
    %63 = arith.cmpi sle, %34, %62 : vector<1x256xi32>
    %cst_26 = arith.constant 0.000000e+00 : f32
    %64 = vector.shape_cast %63 : vector<1x256xi1> to vector<1x256xi1>
    %65 = vector.broadcast %64 : vector<1x256xi1> to vector<64x256xi1>
    %66 = vector.broadcast %cst_26 : f32 to vector<64x256xf32>
    %67 = arith.select %65, %61, %66 : vector<64x256xi1>, vector<64x256xf32>
    %68 = arith.addf %55, %67 : vector<64x256xf32>
    %c3 = arith.constant 3 : index
    %c0_27 = arith.constant 0 : index
    %c0_28 = arith.constant 0 : index
    %69 = vector.load %arg6[%c3, %c0_27, %c0_28] : memref<9x64x256xbf16, #tpu.memory_space<vmem>>, vector<1x64x256xbf16>
    %70 = vector.shape_cast %69 : vector<1x64x256xbf16> to vector<64x256xbf16>
    %cst_29 = arith.constant dense<0.000000e+00> : vector<64x256xf32>
    %71 = tpu.matmul %70, %33, %cst_29 {dimension_numbers = #tpu.dot_dimension_numbers<[1], [0], [0], [1], [0, 0, 1, 1], [], []>} : vector<64x256xbf16>, vector<256x256xbf16>, vector<64x256xf32> -> vector<64x256xf32>
    %cst_30 = arith.constant 0.000000e+00 : f32
    %72 = vector.broadcast %cst_30 : f32 to vector<64x1xf32>
    %73 = vector.extract_strided_slice %71 {offsets = [0, 0], sizes = [64, 255], strides = [1, 1]} : vector<64x256xf32> to vector<64x255xf32>
    %74 = tpu.concatenate %72, %73 in 1 : vector<64x1xf32>, vector<64x255xf32> -> vector<64x256xf32>
    %c1_i32_31 = arith.constant 1 : i32
    %75 = vector.broadcast %c1_i32_31 : i32 to vector<1x256xi32>
    %76 = arith.cmpi sge, %34, %75 : vector<1x256xi32>
    %cst_32 = arith.constant 0.000000e+00 : f32
    %77 = vector.shape_cast %76 : vector<1x256xi1> to vector<1x256xi1>
    %78 = vector.broadcast %77 : vector<1x256xi1> to vector<64x256xi1>
    %79 = vector.broadcast %cst_32 : f32 to vector<64x256xf32>
    %80 = arith.select %78, %74, %79 : vector<64x256xi1>, vector<64x256xf32>
    %81 = arith.addf %68, %80 : vector<64x256xf32>
    %c4 = arith.constant 4 : index
    %c0_33 = arith.constant 0 : index
    %c0_34 = arith.constant 0 : index
    %82 = vector.load %arg6[%c4, %c0_33, %c0_34] : memref<9x64x256xbf16, #tpu.memory_space<vmem>>, vector<1x64x256xbf16>
    %83 = vector.shape_cast %82 : vector<1x64x256xbf16> to vector<64x256xbf16>
    %cst_35 = arith.constant dense<0.000000e+00> : vector<64x256xf32>
    %84 = tpu.matmul %83, %33, %cst_35 {dimension_numbers = #tpu.dot_dimension_numbers<[1], [0], [0], [1], [0, 0, 1, 1], [], []>} : vector<64x256xbf16>, vector<256x256xbf16>, vector<64x256xf32> -> vector<64x256xf32>
    %85 = arith.addf %81, %84 : vector<64x256xf32>
    %c5 = arith.constant 5 : index
    %c0_36 = arith.constant 0 : index
    %c0_37 = arith.constant 0 : index
    %86 = vector.load %arg6[%c5, %c0_36, %c0_37] : memref<9x64x256xbf16, #tpu.memory_space<vmem>>, vector<1x64x256xbf16>
    %87 = vector.shape_cast %86 : vector<1x64x256xbf16> to vector<64x256xbf16>
    %cst_38 = arith.constant dense<0.000000e+00> : vector<64x256xf32>
    %88 = tpu.matmul %87, %33, %cst_38 {dimension_numbers = #tpu.dot_dimension_numbers<[1], [0], [0], [1], [0, 0, 1, 1], [], []>} : vector<64x256xbf16>, vector<256x256xbf16>, vector<64x256xf32> -> vector<64x256xf32>
    %89 = vector.extract_strided_slice %88 {offsets = [0, 1], sizes = [64, 255], strides = [1, 1]} : vector<64x256xf32> to vector<64x255xf32>
    %cst_39 = arith.constant 0.000000e+00 : f32
    %90 = vector.broadcast %cst_39 : f32 to vector<64x1xf32>
    %91 = tpu.concatenate %89, %90 in 1 : vector<64x255xf32>, vector<64x1xf32> -> vector<64x256xf32>
    %c14_i32_40 = arith.constant 14 : i32
    %92 = vector.broadcast %c14_i32_40 : i32 to vector<1x256xi32>
    %93 = arith.cmpi sle, %34, %92 : vector<1x256xi32>
    %cst_41 = arith.constant 0.000000e+00 : f32
    %94 = vector.shape_cast %93 : vector<1x256xi1> to vector<1x256xi1>
    %95 = vector.broadcast %94 : vector<1x256xi1> to vector<64x256xi1>
    %96 = vector.broadcast %cst_41 : f32 to vector<64x256xf32>
    %97 = arith.select %95, %91, %96 : vector<64x256xi1>, vector<64x256xf32>
    %98 = arith.addf %85, %97 : vector<64x256xf32>
    %c6 = arith.constant 6 : index
    %c0_42 = arith.constant 0 : index
    %c0_43 = arith.constant 0 : index
    %99 = vector.load %arg6[%c6, %c0_42, %c0_43] : memref<9x64x256xbf16, #tpu.memory_space<vmem>>, vector<1x64x256xbf16>
    %100 = vector.shape_cast %99 : vector<1x64x256xbf16> to vector<64x256xbf16>
    %cst_44 = arith.constant dense<0.000000e+00> : vector<64x256xf32>
    %101 = tpu.matmul %100, %33, %cst_44 {dimension_numbers = #tpu.dot_dimension_numbers<[1], [0], [0], [1], [0, 0, 1, 1], [], []>} : vector<64x256xbf16>, vector<256x256xbf16>, vector<64x256xf32> -> vector<64x256xf32>
    %102 = vector.extract_strided_slice %101 {offsets = [0, 15], sizes = [64, 241], strides = [1, 1]} : vector<64x256xf32> to vector<64x241xf32>
    %cst_45 = arith.constant 0.000000e+00 : f32
    %103 = vector.broadcast %cst_45 : f32 to vector<64x15xf32>
    %104 = tpu.concatenate %102, %103 in 1 : vector<64x241xf32>, vector<64x15xf32> -> vector<64x256xf32>
    %c1_i32_46 = arith.constant 1 : i32
    %105 = vector.broadcast %c1_i32_46 : i32 to vector<1x256xi32>
    %106 = arith.cmpi sge, %34, %105 : vector<1x256xi32>
    %cst_47 = arith.constant 0.000000e+00 : f32
    %107 = vector.shape_cast %106 : vector<1x256xi1> to vector<1x256xi1>
    %108 = vector.broadcast %107 : vector<1x256xi1> to vector<64x256xi1>
    %109 = vector.broadcast %cst_47 : f32 to vector<64x256xf32>
    %110 = arith.select %108, %104, %109 : vector<64x256xi1>, vector<64x256xf32>
    %111 = arith.addf %98, %110 : vector<64x256xf32>
    %c7 = arith.constant 7 : index
    %c0_48 = arith.constant 0 : index
    %c0_49 = arith.constant 0 : index
    %112 = vector.load %arg6[%c7, %c0_48, %c0_49] : memref<9x64x256xbf16, #tpu.memory_space<vmem>>, vector<1x64x256xbf16>
    %113 = vector.shape_cast %112 : vector<1x64x256xbf16> to vector<64x256xbf16>
    %cst_50 = arith.constant dense<0.000000e+00> : vector<64x256xf32>
    %114 = tpu.matmul %113, %33, %cst_50 {dimension_numbers = #tpu.dot_dimension_numbers<[1], [0], [0], [1], [0, 0, 1, 1], [], []>} : vector<64x256xbf16>, vector<256x256xbf16>, vector<64x256xf32> -> vector<64x256xf32>
    %115 = vector.extract_strided_slice %114 {offsets = [0, 16], sizes = [64, 240], strides = [1, 1]} : vector<64x256xf32> to vector<64x240xf32>
    %cst_51 = arith.constant 0.000000e+00 : f32
    %116 = vector.broadcast %cst_51 : f32 to vector<64x16xf32>
    %117 = tpu.concatenate %115, %116 in 1 : vector<64x240xf32>, vector<64x16xf32> -> vector<64x256xf32>
    %118 = arith.addf %111, %117 : vector<64x256xf32>
    %c8 = arith.constant 8 : index
    %c0_52 = arith.constant 0 : index
    %c0_53 = arith.constant 0 : index
    %119 = vector.load %arg6[%c8, %c0_52, %c0_53] : memref<9x64x256xbf16, #tpu.memory_space<vmem>>, vector<1x64x256xbf16>
    %120 = vector.shape_cast %119 : vector<1x64x256xbf16> to vector<64x256xbf16>
    %cst_54 = arith.constant dense<0.000000e+00> : vector<64x256xf32>
    %121 = tpu.matmul %120, %33, %cst_54 {dimension_numbers = #tpu.dot_dimension_numbers<[1], [0], [0], [1], [0, 0, 1, 1], [], []>} : vector<64x256xbf16>, vector<256x256xbf16>, vector<64x256xf32> -> vector<64x256xf32>
    %122 = vector.extract_strided_slice %121 {offsets = [0, 17], sizes = [64, 239], strides = [1, 1]} : vector<64x256xf32> to vector<64x239xf32>
    %cst_55 = arith.constant 0.000000e+00 : f32
    %123 = vector.broadcast %cst_55 : f32 to vector<64x17xf32>
    %124 = tpu.concatenate %122, %123 in 1 : vector<64x239xf32>, vector<64x17xf32> -> vector<64x256xf32>
    %c14_i32_56 = arith.constant 14 : i32
    %125 = vector.broadcast %c14_i32_56 : i32 to vector<1x256xi32>
    %126 = arith.cmpi sle, %34, %125 : vector<1x256xi32>
    %cst_57 = arith.constant 0.000000e+00 : f32
    %127 = vector.shape_cast %126 : vector<1x256xi1> to vector<1x256xi1>
    %128 = vector.broadcast %127 : vector<1x256xi1> to vector<64x256xi1>
    %129 = vector.broadcast %cst_57 : f32 to vector<64x256xf32>
    %130 = arith.select %128, %124, %129 : vector<64x256xi1>, vector<64x256xf32>
    %131 = arith.addf %118, %130 : vector<64x256xf32>
    %c0_58 = arith.constant 0 : index
    %c0_59 = arith.constant 0 : index
    %132 = vector.load %arg7[%c0_58, %c0_59] : memref<64x1xf32, #tpu.memory_space<vmem>>, vector<64x1xf32>
    %133 = vector.broadcast %132 : vector<64x1xf32> to vector<64x256xf32>
    %134 = arith.addf %131, %133 : vector<64x256xf32>
    %cst_60 = arith.constant 0.000000e+00 : f32
    %135 = vector.broadcast %cst_60 : f32 to vector<64x256xf32>
    %136 = arith.maximumf %134, %135 : vector<64x256xf32>
    %137 = arith.truncf %31 : vector<32x256xf32> to vector<32x256xbf16>
    %c0_61 = arith.constant 0 : index
    %c0_62 = arith.constant 0 : index
    %c0_63 = arith.constant 0 : index
    %138 = vector.load %arg8[%c0_61, %c0_62, %c0_63] : memref<1x96x256xbf16, #tpu.memory_space<vmem>>, vector<1x32x256xbf16>
    %139 = vector.shape_cast %138 : vector<1x32x256xbf16> to vector<32x256xbf16>
    %140 = vector.shape_cast %137 : vector<32x256xbf16> to vector<1x32x256xbf16>
    tpu.vector_store %arg8[%c0_61, %c0_62, %c0_63], %140 {strides = array<i32>} : memref<1x96x256xbf16, #tpu.memory_space<vmem>>, vector<1x32x256xbf16>,
    %141 = arith.truncf %136 : vector<64x256xf32> to vector<64x256xbf16>
    %c0_64 = arith.constant 0 : index
    %c32 = arith.constant 32 : index
    %c0_65 = arith.constant 0 : index
    %142 = vector.load %arg8[%c0_64, %c32, %c0_65] : memref<1x96x256xbf16, #tpu.memory_space<vmem>>, vector<1x64x256xbf16>
    %143 = vector.shape_cast %142 : vector<1x64x256xbf16> to vector<64x256xbf16>
    %144 = vector.shape_cast %141 : vector<64x256xbf16> to vector<1x64x256xbf16>
    tpu.vector_store %arg8[%c0_64, %c32, %c0_65], %144 {strides = array<i32>} : memref<1x96x256xbf16, #tpu.memory_space<vmem>>, vector<1x64x256xbf16>,
    %cst_66 = arith.constant dense<0.000000e+00> : vector<32xf32>
    %145 = vector.multi_reduction <add>, %31, %cst_66 [1] : vector<32x256xf32> to vector<32xf32>
    %146 = vector.shape_cast %145 : vector<32xf32> to vector<32x1xf32>
    %c0_67 = arith.constant 0 : index
    %c0_68 = arith.constant 0 : index
    %c0_69 = arith.constant 0 : index
    %147 = vector.load %arg9[%c0_67, %c0_68, %c0_69] : memref<1x96x1xf32, #tpu.memory_space<vmem>>, vector<1x32x1xf32>
    %148 = vector.shape_cast %147 : vector<1x32x1xf32> to vector<32x1xf32>
    %149 = vector.shape_cast %146 : vector<32x1xf32> to vector<1x32x1xf32>
    tpu.vector_store %arg9[%c0_67, %c0_68, %c0_69], %149 {strides = array<i32>} : memref<1x96x1xf32, #tpu.memory_space<vmem>>, vector<1x32x1xf32>,
    %cst_70 = arith.constant dense<0.000000e+00> : vector<64xf32>
    %150 = vector.multi_reduction <add>, %136, %cst_70 [1] : vector<64x256xf32> to vector<64xf32>
    %151 = vector.shape_cast %150 : vector<64xf32> to vector<64x1xf32>
    %c0_71 = arith.constant 0 : index
    %c32_72 = arith.constant 32 : index
    %c0_73 = arith.constant 0 : index
    %152 = vector.load %arg9[%c0_71, %c32_72, %c0_73] : memref<1x96x1xf32, #tpu.memory_space<vmem>>, vector<1x64x1xf32>
    %153 = vector.shape_cast %152 : vector<1x64x1xf32> to vector<64x1xf32>
    %154 = vector.shape_cast %151 : vector<64x1xf32> to vector<1x64x1xf32>
    tpu.vector_store %arg9[%c0_71, %c32_72, %c0_73], %154 {strides = array<i32>} : memref<1x96x1xf32, #tpu.memory_space<vmem>>, vector<1x64x1xf32>,
    return
  }
  func.func @transform_0(%arg0: i32) -> (i32, i32, i32) {
    %c0_i32 = arith.constant 0 : i32
    %c0_i32_0 = arith.constant 0 : i32
    %c0_i32_1 = arith.constant 0 : i32
    return %arg0, %c0_i32, %c0_i32_0 : i32, i32, i32
  }
  func.func @transform_1(%arg0: i32) -> (i32, i32, i32) {
    %c0_i32 = arith.constant 0 : i32
    %c0_i32_0 = arith.constant 0 : i32
    %c0_i32_1 = arith.constant 0 : i32
    return %arg0, %c0_i32, %c0_i32_0 : i32, i32, i32
  }
  func.func @transform_2(%arg0: i32) -> (i32, i32) {
    %c0_i32 = arith.constant 0 : i32
    %c0_i32_0 = arith.constant 0 : i32
    %c0_i32_1 = arith.constant 0 : i32
    return %c0_i32, %c0_i32_0 : i32, i32
  }
  func.func @transform_3(%arg0: i32) -> (i32, i32) {
    %c0_i32 = arith.constant 0 : i32
    %c0_i32_0 = arith.constant 0 : i32
    %c0_i32_1 = arith.constant 0 : i32
    return %c0_i32, %c0_i32_0 : i32, i32
  }
  func.func @transform_4(%arg0: i32) -> (i32, i32) {
    %c0_i32 = arith.constant 0 : i32
    %c0_i32_0 = arith.constant 0 : i32
    %c0_i32_1 = arith.constant 0 : i32
    return %c0_i32, %c0_i32_0 : i32, i32
  }
  func.func @transform_5(%arg0: i32) -> (i32, i32, i32) {
    %c0_i32 = arith.constant 0 : i32
    %c0_i32_0 = arith.constant 0 : i32
    %c0_i32_1 = arith.constant 0 : i32
    %c0_i32_2 = arith.constant 0 : i32
    return %c0_i32, %c0_i32_0, %c0_i32_1 : i32, i32, i32
  }
  func.func @transform_6(%arg0: i32) -> (i32, i32) {
    %c0_i32 = arith.constant 0 : i32
    %c0_i32_0 = arith.constant 0 : i32
    %c0_i32_1 = arith.constant 0 : i32
    return %c0_i32, %c0_i32_0 : i32, i32
  }
  func.func @transform_7(%arg0: i32) -> (i32, i32, i32) {
    %c0_i32 = arith.constant 0 : i32
    %c0_i32_0 = arith.constant 0 : i32
    %c0_i32_1 = arith.constant 0 : i32
    return %arg0, %c0_i32, %c0_i32_0 : i32, i32, i32
  }
  func.func @transform_8(%arg0: i32) -> (i32, i32, i32) {
    %c0_i32 = arith.constant 0 : i32
    %c0_i32_0 = arith.constant 0 : i32
    %c0_i32_1 = arith.constant 0 : i32
    return %arg0, %c0_i32, %c0_i32_0 : i32, i32, i32
  }
}

module attributes {stable_mosaic.version = 11 : i64} {
  func.func @_head_kernel(%arg0: i32, %arg1: i32, %arg2: memref<1x96x256xbf16, #tpu.memory_space<vmem>>, %arg3: memref<1x64x96xbf16, #tpu.memory_space<vmem>>, %arg4: memref<64x1xf32, #tpu.memory_space<vmem>>, %arg5: memref<7x64xbf16, #tpu.memory_space<vmem>>, %arg6: memref<7x1xf32, #tpu.memory_space<vmem>>, %arg7: memref<1x7x256xf32, #tpu.memory_space<vmem>>) attributes {dimension_semantics = [#tpu.dimension_semantics<parallel>, #tpu.dimension_semantics<parallel>], iteration_bounds = array<i64: 2, 1>, scalar_prefetch = 0 : i64, scratch_operands = 0 : i64, tpu.core_type = #tpu.core_type<tc>, window_params = [{transform_indices = @transform_0, window_bounds = array<i64: 1, 96, 256>}, {transform_indices = @transform_1, window_bounds = array<i64: 1, 64, 96>}, {pipeline_mode = #tpu.pipeline_mode<synchronous>, transform_indices = @transform_2, window_bounds = array<i64: 64, 1>}, {pipeline_mode = #tpu.pipeline_mode<synchronous>, transform_indices = @transform_3, window_bounds = array<i64: 7, 64>}, {pipeline_mode = #tpu.pipeline_mode<synchronous>, transform_indices = @transform_4, window_bounds = array<i64: 7, 1>}, {transform_indices = @transform_5, window_bounds = array<i64: 1, 7, 256>}]} {
    %c0 = arith.constant 0 : index
    %c0_0 = arith.constant 0 : index
    %c0_1 = arith.constant 0 : index
    %0 = vector.load %arg2[%c0, %c0_0, %c0_1] : memref<1x96x256xbf16, #tpu.memory_space<vmem>>, vector<1x96x256xbf16>
    %1 = vector.shape_cast %0 : vector<1x96x256xbf16> to vector<96x256xbf16>
    %c0_2 = arith.constant 0 : index
    %c0_3 = arith.constant 0 : index
    %c0_4 = arith.constant 0 : index
    %2 = vector.load %arg3[%c0_2, %c0_3, %c0_4] : memref<1x64x96xbf16, #tpu.memory_space<vmem>>, vector<1x64x96xbf16>
    %3 = vector.shape_cast %2 : vector<1x64x96xbf16> to vector<64x96xbf16>
    %cst = arith.constant dense<0.000000e+00> : vector<64x256xf32>
    %4 = tpu.matmul %3, %1, %cst {dimension_numbers = #tpu.dot_dimension_numbers<[1], [0], [0], [1], [0, 0, 1, 1], [], []>} : vector<64x96xbf16>, vector<96x256xbf16>, vector<64x256xf32> -> vector<64x256xf32>
    %c0_5 = arith.constant 0 : index
    %c0_6 = arith.constant 0 : index
    %5 = vector.load %arg4[%c0_5, %c0_6] : memref<64x1xf32, #tpu.memory_space<vmem>>, vector<64x1xf32>
    %6 = vector.broadcast %5 : vector<64x1xf32> to vector<64x256xf32>
    %7 = arith.addf %4, %6 : vector<64x256xf32>
    %cst_7 = arith.constant 0.000000e+00 : f32
    %8 = vector.broadcast %cst_7 : f32 to vector<64x256xf32>
    %9 = arith.maximumf %7, %8 : vector<64x256xf32>
    %c0_8 = arith.constant 0 : index
    %c0_9 = arith.constant 0 : index
    %10 = vector.load %arg5[%c0_8, %c0_9] : memref<7x64xbf16, #tpu.memory_space<vmem>>, vector<7x64xbf16>
    %11 = arith.truncf %9 : vector<64x256xf32> to vector<64x256xbf16>
    %cst_10 = arith.constant dense<0.000000e+00> : vector<7x256xf32>
    %12 = tpu.matmul %10, %11, %cst_10 {dimension_numbers = #tpu.dot_dimension_numbers<[1], [0], [0], [1], [0, 0, 1, 1], [], []>} : vector<7x64xbf16>, vector<64x256xbf16>, vector<7x256xf32> -> vector<7x256xf32>
    %c0_11 = arith.constant 0 : index
    %c0_12 = arith.constant 0 : index
    %13 = vector.load %arg6[%c0_11, %c0_12] : memref<7x1xf32, #tpu.memory_space<vmem>>, vector<7x1xf32>
    %14 = vector.broadcast %13 : vector<7x1xf32> to vector<7x256xf32>
    %15 = arith.addf %12, %14 : vector<7x256xf32>
    %c0_13 = arith.constant 0 : index
    %c0_14 = arith.constant 0 : index
    %c0_15 = arith.constant 0 : index
    %16 = vector.load %arg7[%c0_13, %c0_14, %c0_15] : memref<1x7x256xf32, #tpu.memory_space<vmem>>, vector<1x7x256xf32>
    %17 = vector.shape_cast %16 : vector<1x7x256xf32> to vector<7x256xf32>
    %18 = vector.shape_cast %15 : vector<7x256xf32> to vector<1x7x256xf32>
    tpu.vector_store %arg7[%c0_13, %c0_14, %c0_15], %18 {strides = array<i32>} : memref<1x7x256xf32, #tpu.memory_space<vmem>>, vector<1x7x256xf32>,
    return
  }
  func.func @transform_0(%arg0: i32, %arg1: i32) -> (i32, i32, i32) {
    %c0_i32 = arith.constant 0 : i32
    %c0_i32_0 = arith.constant 0 : i32
    return %arg0, %c0_i32, %arg1 : i32, i32, i32
  }
  func.func @transform_1(%arg0: i32, %arg1: i32) -> (i32, i32, i32) {
    %c0_i32 = arith.constant 0 : i32
    %c0_i32_0 = arith.constant 0 : i32
    %c0_i32_1 = arith.constant 0 : i32
    return %arg0, %c0_i32, %c0_i32_0 : i32, i32, i32
  }
  func.func @transform_2(%arg0: i32, %arg1: i32) -> (i32, i32) {
    %c0_i32 = arith.constant 0 : i32
    %c0_i32_0 = arith.constant 0 : i32
    %c0_i32_1 = arith.constant 0 : i32
    return %c0_i32, %c0_i32_0 : i32, i32
  }
  func.func @transform_3(%arg0: i32, %arg1: i32) -> (i32, i32) {
    %c0_i32 = arith.constant 0 : i32
    %c0_i32_0 = arith.constant 0 : i32
    %c0_i32_1 = arith.constant 0 : i32
    return %c0_i32, %c0_i32_0 : i32, i32
  }
  func.func @transform_4(%arg0: i32, %arg1: i32) -> (i32, i32) {
    %c0_i32 = arith.constant 0 : i32
    %c0_i32_0 = arith.constant 0 : i32
    %c0_i32_1 = arith.constant 0 : i32
    return %c0_i32, %c0_i32_0 : i32, i32
  }
  func.func @transform_5(%arg0: i32, %arg1: i32) -> (i32, i32, i32) {
    %c0_i32 = arith.constant 0 : i32
    %c0_i32_0 = arith.constant 0 : i32
    return %arg0, %c0_i32, %arg1 : i32, i32, i32
  }
}

</mosaic_0001>

<llo_original>
// kernel: tile.9
$region0: #{tile.9}
  %s0 = inlined_call_operand.vmem [shape: s32[16,16], index: 0, kind: input, shape index: {}]
  %s1 = inlined_call_operand.vmem [shape: s32[1,256], index: 1, kind: output, shape index: {}]
  $region1: #{tile.9} parent=0
    #allocation0 [shape = 'u8[8192]{0}', space=vmem, size = 0x2000, scoped, tag = 'scoped mem for output reshape']
    %s2 = smov 3
    %v3 = vld [vmem:[%s0] ss:$8 sm:%s2]
    %vm4 = vcmask 130048
    %5 = vst.msk [vmem:[#allocation0] ss:$8 sm:$0x3] %vm4, %v3
    %s6 = scalar_lea.vmem %s0, 7
    %s7 = smov 3
    %v8 = vld [vmem:[%s6] ss:$8 sm:%s7]
    %9 = vrot.lane.b32.xlu0 %v8, 112
    %v10 = vpop.permute.xlu0 %9
    %vm11 = vcmask 1048448
    %12 = vst.msk [vmem:[#allocation0] ss:$8 sm:$0x3] %vm11, %v10
    %s13 = scalar_lea.vmem %s0, 6
    %s14 = smov 3
    %v15 = vld [vmem:[%s13] ss:$8 sm:%s14]
    %16 = vrot.lane.b32.xlu0 %v15, 96
    %v17 = vpop.permute.xlu0 %16
    %vm18 = vcmask 917248
    %19 = vst.msk [vmem:[#allocation0] ss:$8 sm:$0x3] %vm18, %v17
    %s20 = scalar_lea.vmem %s0, 5
    %s21 = smov 3
    %v22 = vld [vmem:[%s20] ss:$8 sm:%s21]
    %23 = vrot.lane.b32.xlu0 %v22, 80
    %v24 = vpop.permute.xlu0 %23
    %vm25 = vcmask 786048
    %26 = vst.msk [vmem:[#allocation0] ss:$8 sm:$0x3] %vm25, %v24
    %s27 = scalar_lea.vmem %s0, 4
    %s28 = smov 3
    %v29 = vld [vmem:[%s27] ss:$8 sm:%s28]
    %30 = vrot.lane.b32.xlu0 %v29, 64
    %v31 = vpop.permute.xlu0 %30
    %vm32 = vcmask 654848
    %33 = vst.msk [vmem:[#allocation0] ss:$8 sm:$0x3] %vm32, %v31
    %s34 = scalar_lea.vmem %s0, 3
    %s35 = smov 3
    %v36 = vld [vmem:[%s34] ss:$8 sm:%s35]
    %37 = vrot.lane.b32.xlu0 %v36, 48
    %v38 = vpop.permute.xlu0 %37
    %vm39 = vcmask 523648
    %40 = vst.msk [vmem:[#allocation0] ss:$8 sm:$0x3] %vm39, %v38
    %s41 = scalar_lea.vmem %s0, 2
    %s42 = smov 3
    %v43 = vld [vmem:[%s41] ss:$8 sm:%s42]
    %44 = vrot.lane.b32.xlu0 %v43, 32
    %v45 = vpop.permute.xlu0 %44
    %vm46 = vcmask 392448
    %47 = vst.msk [vmem:[#allocation0] ss:$8 sm:$0x3] %vm46, %v45
    %s48 = scalar_lea.vmem %s0, 1
    %s49 = smov 3
    %v50 = vld [vmem:[%s48] ss:$8 sm:%s49]
    %51 = vrot.lane.b32.xlu0 %v50, 16
    %v52 = vpop.permute.xlu0 %51
    %vm53 = vcmask 261248
    %54 = vst.msk [vmem:[#allocation0] ss:$8 sm:$0x3] %vm53, %v52
    %s56 = sshllo.u32 0, 1
    %v58 = vld [vmem:[#allocation0] sm:%s56]
    %s59 = sshllo.u32 0, 1
    %60 = vst [vmem:[%s1] sm:%s59] %v58
    %s61 = scalar_lea.vmem [#allocation0], 8
    %v62 = vld [vmem:[%s61] sm:%s56]
    %s63 = sshllo.u32 0, 1
    %s64 = scalar_lea.vmem %s1, 1
    %65 = vst [vmem:[%s64] sm:%s63] %v62

// kernel: gama_part_decoder.3
$region0: #{gama_part_decoder.3}
  #allocation0 [shape = 'u32[]', space=smem, size = 0x4, offset = 0x4, fixed_abs, tag = 'smem constant byte address 0x4 - core index']
  #allocation1 [shape = 'u32[144,128]{1,0:T(1,128)}', space=vmem, size = 0x12000, scoped, tag = 'internal scratch']
  %s0 = inlined_call_operand.vmem [shape: bf16[2,96,256], index: 0, kind: input, shape index: {}]
  %s1 = inlined_call_operand.vmem [shape: bf16[2,64,96], index: 1, kind: input, shape index: {}]
  %s2 = inlined_call_operand.vmem [shape: f32[64,1], index: 2, kind: input, shape index: {}]
  %s3 = inlined_call_operand.vmem [shape: bf16[7,64], index: 3, kind: input, shape index: {}]
  %s4 = inlined_call_operand.vmem [shape: f32[7,1], index: 4, kind: input, shape index: {}]
  %s5 = inlined_call_operand.vmem [shape: f32[2,7,256], index: 5, kind: output, shape index: {}]
  %s6 = sld [smem:[#allocation0]]
  $region53: #{gama_part_decoder.3} parent=0
    _
  %s8 = ssub.s32 1, %s6
  %s9 = scalar_select 0, %s8, %s6
  loop: start=0, step=1, limit=4
  $region2: #{gama_part_decoder.3} parent=0 // loop_pre_header
    _
  $region3: #{gama_part_decoder.3} parent=0 // loop_header
    %s11 = sphi 0, %s15
    %p12 = scmp.ge.s32.totalorder %s11, 4
    %s18 = sphi 0, %s30
    %s19 = sphi 0, %s26
    %s20 = sphi 0, %s18
    %s21 = sphi 0, %s19
    %s22 = sphi 0, %s20
    %s23 = sphi 0, %s21
    %s35 = sphi 0, %s37
    %s38 = sphi 0, %s35
    %s39 = sphi 0, %s38
    %s55 = sphi 0, %s39
    %s61 = sphi 0, %s63
    %s64 = sphi 0, %s61
    %s65 = sphi 0, %s64
    %s81 = sphi 0, %s65
    %s85 = sphi 0, %s85
    %s87 = sphi 0, %s85
    %s88 = sphi 0, %s87
    %s102 = sphi 0, %s88
    %s106 = sphi 0, %s106
    %s108 = sphi 0, %s106
    %s109 = sphi 0, %s108
    %s123 = sphi 0, %s109
    %s127 = sphi 0, %s127
    %s129 = sphi 0, %s127
    %s130 = sphi 0, %s129
    %s144 = sphi 0, %s130
    %s152 = sphi 0, %s154
    %s155 = sphi 0, %s152
    %s156 = sphi 0, %s155
    %s172 = sphi 0, %s156
  $region4: #{gama_part_decoder.3} parent=0 // loop_header_branch
    %14 = sbr.rel (%p12) target = $region8
  $region5: #{gama_part_decoder.3} parent=0 // loop_body
    %s16 = ssub.s32 %s11, 1
    %s17 = ssub.s32 %s11, 2
    %s24 = sadd.s32 1, %s19
    %p25 = scmp.ge.s32.totalorder %s24, 1
    %s26 = scalar_select %p25, 0, %s24
    %s27 = sadd.s32 1, %s18
    %s28 = scalar_select %p25, %s27, %s18
    %p29 = scmp.ge.s32.totalorder %s28, 2
    %s30 = scalar_select %p29, 0, %s28
    %s31 = ssub.s32 %s18, %s30
    %s32 = ssub.s32 %s19, %s26
    %s33 = sor.u32 %s31, %s32
    %p34 = scmp.eq.s32.totalorder %s33, 0
    %s36 = sadd.s32 %s35, 1
    %s37 = scalar_select %p34, %s35, %s36
    %p40 = pneg %p34
    %p41 = scmp.eq.s32.totalorder %s11, 1
    %p42 = por %p40, %p41
    %p43 = scmp.ne.s32.totalorder %s35, %s38
    %p44 = scmp.eq.s32.totalorder %s11, 0
    %p45 = por %p43, %p44
    %p46 = scmp.ne.s32.totalorder %s35, %s38
    %p47 = scmp.eq.s32.totalorder %s16, 1
    %p48 = por %p46, %p47
    %p49 = scmp.ne.s32.totalorder %s38, %s39
    %p50 = scmp.eq.s32.totalorder %s16, 0
    %p51 = por %p49, %p50
    %p52 = scmp.ne.s32.totalorder %s38, %s39
    %p53 = scmp.eq.s32.totalorder %s17, 1
    %p54 = por %p52, %p53
    %p56 = scmp.ne.s32.totalorder %s39, %s55
    %p57 = scmp.eq.s32.totalorder %s17, 0
    %p58 = por %p56, %p57
    %s59 = ssub.s32 %s18, %s30
    %p60 = scmp.eq.s32.totalorder %s59, 0
    %s62 = sadd.s32 %s61, 1
    %s63 = scalar_select %p60, %s61, %s62
    %p66 = pneg %p60
    %p67 = scmp.eq.s32.totalorder %s11, 1
    %p68 = por %p66, %p67
    %p69 = scmp.ne.s32.totalorder %s61, %s64
    %p70 = scmp.eq.s32.totalorder %s11, 0
    %p71 = por %p69, %p70
    %p72 = scmp.ne.s32.totalorder %s61, %s64
    %p73 = scmp.eq.s32.totalorder %s16, 1
    %p74 = por %p72, %p73
    %p75 = scmp.ne.s32.totalorder %s64, %s65
    %p76 = scmp.eq.s32.totalorder %s16, 0
    %p77 = por %p75, %p76
    %p78 = scmp.ne.s32.totalorder %s64, %s65
    %p79 = scmp.eq.s32.totalorder %s17, 1
    %p80 = por %p78, %p79
    %p82 = scmp.ne.s32.totalorder %s65, %s81
    %p83 = scmp.eq.s32.totalorder %s17, 0
    %p84 = por %p82, %p83
    %s86 = sadd.s32 %s85, 1
    %p89 = scmp.eq.s32.totalorder %s11, 1
    %p90 = scmp.ne.s32.totalorder %s85, %s87
    %p91 = scmp.eq.s32.totalorder %s11, 0
    %p92 = por %p90, %p91
    %p93 = scmp.ne.s32.totalorder %s85, %s87
    %p94 = scmp.eq.s32.totalorder %s16, 1
    %p95 = por %p93, %p94
    %p96 = scmp.ne.s32.totalorder %s87, %s88
    %p97 = scmp.eq.s32.totalorder %s16, 0
    %p98 = por %p96, %p97
    %p99 = scmp.ne.s32.totalorder %s87, %s88
    %p100 = scmp.eq.s32.totalorder %s17, 1
    %p101 = por %p99, %p100
    %p103 = scmp.ne.s32.totalorder %s88, %s102
    %p104 = scmp.eq.s32.totalorder %s17, 0
    %p105 = por %p103, %p104
    %s107 = sadd.s32 %s106, 1
    %p110 = scmp.eq.s32.totalorder %s11, 1
    %p111 = scmp.ne.s32.totalorder %s106, %s108
    %p112 = scmp.eq.s32.totalorder %s11, 0
    %p113 = por %p111, %p112
    %p114 = scmp.ne.s32.totalorder %s106, %s108
    %p115 = scmp.eq.s32.totalorder %s16, 1
    %p116 = por %p114, %p115
    %p117 = scmp.ne.s32.totalorder %s108, %s109
    %p118 = scmp.eq.s32.totalorder %s16, 0
    %p119 = por %p117, %p118
    %p120 = scmp.ne.s32.totalorder %s108, %s109
    %p121 = scmp.eq.s32.totalorder %s17, 1
    %p122 = por %p120, %p121
    %p124 = scmp.ne.s32.totalorder %s109, %s123
    %p125 = scmp.eq.s32.totalorder %s17, 0
    %p126 = por %p124, %p125
    %s128 = sadd.s32 %s127, 1
    %p131 = scmp.eq.s32.totalorder %s11, 1
    %p132 = scmp.ne.s32.totalorder %s127, %s129
    %p133 = scmp.eq.s32.totalorder %s11, 0
    %p134 = por %p132, %p133
    %p135 = scmp.ne.s32.totalorder %s127, %s129
    %p136 = scmp.eq.s32.totalorder %s16, 1
    %p137 = por %p135, %p136
    %p138 = scmp.ne.s32.totalorder %s129, %s130
    %p139 = scmp.eq.s32.totalorder %s16, 0
    %p140 = por %p138, %p139
    %p141 = scmp.ne.s32.totalorder %s129, %s130
    %p142 = scmp.eq.s32.totalorder %s17, 1
    %p143 = por %p141, %p142
    %p145 = scmp.ne.s32.totalorder %s130, %s144
    %p146 = scmp.eq.s32.totalorder %s17, 0
    %p147 = por %p145, %p146
    %s148 = ssub.s32 %s18, %s30
    %s149 = ssub.s32 %s19, %s26
    %s150 = sor.u32 %s148, %s149
    %p151 = scmp.eq.s32.totalorder %s150, 0
    %s153 = sadd.s32 %s152, 1
    %s154 = scalar_select %p151, %s152, %s153
    %p157 = pneg %p151
    %p158 = scmp.eq.s32.totalorder %s11, 1
    %p159 = por %p157, %p158
    %p160 = scmp.ne.s32.totalorder %s152, %s155
    %p161 = scmp.eq.s32.totalorder %s11, 0
    %p162 = por %p160, %p161
    %p163 = scmp.ne.s32.totalorder %s152, %s155
    %p164 = scmp.eq.s32.totalorder %s16, 1
    %p165 = por %p163, %p164
    %p166 = scmp.ne.s32.totalorder %s155, %s156
    %p167 = scmp.eq.s32.totalorder %s16, 0
    %p168 = por %p166, %p167
    %p169 = scmp.ne.s32.totalorder %s155, %s156
    %p170 = scmp.eq.s32.totalorder %s17, 1
    %p171 = por %p169, %p170
    %p173 = scmp.ne.s32.totalorder %s156, %s172
    %p174 = scmp.eq.s32.totalorder %s17, 0
    %p175 = por %p173, %p174
    %p176 = scmp.le.s32.totalorder 1, %s11
    %p177 = scmp.lt.s32.totalorder %s11, 3
    %p178 = pnand %p176, %p177
    %p179 = pneg %p178
    // Predicated region
    $region9: #{gama_part_decoder.3} parent=5 // pred_check
      _
    $region10: #{gama_part_decoder.3} parent=5 // pred_check_branch
      %181 = sbr.rel (%p178) target = $region12
    $region11: #{gama_part_decoder.3} parent=5 // pred_region
      %s182 = ssub.s32 %s11, 1
      // Predicated region
      $region13: #{gama_part_decoder.3} parent=11 // pred_check
        %p183 = pneg %p98
      $region14: #{gama_part_decoder.3} parent=11 // pred_check_branch
        %185 = sbr.rel (%p183) target = $region16
      $region15: #{gama_part_decoder.3} parent=11 // pred_region
        _
      $region16: #{gama_part_decoder.3} parent=11 // pred_fallthru
        _
      // Predicated region
      $region17: #{gama_part_decoder.3} parent=11 // pred_check
        %p186 = pneg %p119
      $region18: #{gama_part_decoder.3} parent=11 // pred_check_branch
        %188 = sbr.rel (%p186) target = $region20
      $region19: #{gama_part_decoder.3} parent=11 // pred_region
        _
      $region20: #{gama_part_decoder.3} parent=11 // pred_fallthru
        _
      // Predicated region
      $region21: #{gama_part_decoder.3} parent=11 // pred_check
        %p189 = pneg %p140
      $region22: #{gama_part_decoder.3} parent=11 // pred_check_branch
        %191 = sbr.rel (%p189) target = $region24
      $region23: #{gama_part_decoder.3} parent=11 // pred_region
        _
      $region24: #{gama_part_decoder.3} parent=11 // pred_fallthru
        _
    $region12: #{gama_part_decoder.3} parent=5 // pred_fallthru
      _
    %p192 = scmp.lt.s32.totalorder %s11, 2
    // Predicated region
    $region25: #{gama_part_decoder.3} parent=5 // pred_check
      %p193 = pneg %p192
    $region26: #{gama_part_decoder.3} parent=5 // pred_check_branch
      %195 = sbr.rel (%p193) target = $region28
    $region27: #{gama_part_decoder.3} parent=5 // pred_region
      // Predicated region
      $region29: #{gama_part_decoder.3} parent=27 // pred_check
        %p196 = pneg %p45
      $region30: #{gama_part_decoder.3} parent=27 // pred_check_branch
        %198 = sbr.rel (%p196) target = $region32
      $region31: #{gama_part_decoder.3} parent=27 // pred_region
        %s199 = smul.u32 2, %s19
        %p200 = scmp.lt.s32.totalorder %s18, 1
        %s201 = scalar_select %p200, %s18, 1
        %p202 = scmp.lt.s32.totalorder %s199, 1
        %s203 = scalar_select %p202, %s199, 1
        %s204 = smul.addr %s201, 24
        %s205 = sadd.s32 %s203, %s204
        %s206 = smul.addr %s205, 4
        %s207 = scalar_lea.vmem %s0, %s206
        %s208 = smul.u32 2, %s19
      $region32: #{gama_part_decoder.3} parent=27 // pred_fallthru
        _
      // Predicated region
      $region33: #{gama_part_decoder.3} parent=27 // pred_check
        %p209 = pneg %p71
      $region34: #{gama_part_decoder.3} parent=27 // pred_check_branch
        %211 = sbr.rel (%p209) target = $region36
      $region35: #{gama_part_decoder.3} parent=27 // pred_region
        %p212 = scmp.lt.s32.totalorder %s18, 1
        %s213 = scalar_select %p212, %s18, 1
        %s214 = smul.addr %s213, 8
        %s215 = smul.addr %s214, 4
        %s216 = scalar_lea.vmem %s1, %s215
      $region36: #{gama_part_decoder.3} parent=27 // pred_fallthru
        _
    $region28: #{gama_part_decoder.3} parent=5 // pred_fallthru
      _
    %p217 = scmp.le.s32.totalorder 1, %s11
    %p218 = scmp.lt.s32.totalorder %s11, 3
    %p219 = pnand %p217, %p218
    %p220 = pneg %p219
    // Predicated region
    $region37: #{gama_part_decoder.3} parent=5 // pred_check
      _
    $region38: #{gama_part_decoder.3} parent=5 // pred_check_branch
      %222 = sbr.rel (%p219) target = $region40
    $region39: #{gama_part_decoder.3} parent=5 // pred_region
      %s223 = ssub.s32 %s11, 1
      %s224 = smul.u32 2, %s21
      %p225 = scmp.lt.s32.totalorder %s20, 1
      %s226 = scalar_select %p225, %s20, 1
      %p227 = scmp.lt.s32.totalorder %s224, 1
      %s228 = scalar_select %p227, %s224, 1
      %s229 = smul.addr %s226, 24
      %s230 = sadd.s32 %s228, %s229
      %s231 = smul.addr %s230, 4
      %s232 = scalar_lea.vmem %s0, %s231
      %p233 = pneg %p51
      %p234 = pneg %p48
      %p235 = scmp.lt.s32.totalorder %s20, 1
      %s236 = scalar_select %p235, %s20, 1
      %s237 = smul.addr %s236, 8
      %s238 = smul.addr %s237, 4
      %s239 = scalar_lea.vmem %s1, %s238
      %p240 = pneg %p77
      %p241 = pneg %p74
      %p242 = pneg %p98
      %p243 = pneg %p95
      %p244 = pneg %p119
      %p245 = pneg %p116
      %p246 = pneg %p140
      %p247 = pneg %p137
      %p248 = pneg %p168
      %p249 = pneg %p165
      %s250 = smul.u32 2, %s21
      %p251 = scmp.lt.s32.totalorder %s20, 1
      %s252 = scalar_select %p251, %s20, 1
      %p253 = scmp.lt.s32.totalorder %s250, 1
      %s254 = scalar_select %p253, %s250, 1
      %s255 = smul.addr %s252, 2
      %s256 = sadd.s32 %s254, %s255
      %s257 = smul.addr %s256, 8
      %s258 = scalar_lea.vmem %s5, %s257
      %s259 = smul.u32 2, %s21
      %p260 = scmp.lt.s32.totalorder %s20, 1
      %s261 = scalar_select %p260, %s20, 1
      %p262 = scmp.lt.s32.totalorder %s259, 1
      %s263 = scalar_select %p262, %s259, 1
      %s264 = smul.addr %s261, 24
      %s265 = sadd.s32 %s263, %s264
      %s266 = smul.addr %s265, 4
      %s267 = scalar_lea.vmem %s0, %s266
      %s268 = smul.u32 2, %s21
      %p269 = scmp.lt.s32.totalorder %s20, 1
      %s270 = scalar_select %p269, %s20, 1
      %s271 = smul.addr %s270, 8
      %s272 = smul.addr %s271, 4
      %s273 = scalar_lea.vmem %s1, %s272
      %s274 = smul.u32 2, %s21
      %p275 = scmp.lt.s32.totalorder %s20, 1
      %s276 = scalar_select %p275, %s20, 1
      %p277 = scmp.lt.s32.totalorder %s274, 1
      %s278 = scalar_select %p277, %s274, 1
      %s279 = smul.addr %s276, 2
      %s280 = sadd.s32 %s278, %s279
      %s281 = smul.addr %s280, 8
      %s282 = scalar_lea.vmem %s5, %s281
      %s283 = smul.u32 2, %s21
      %v285 = vld [vmem:[%s267] sm:$0xff]
      %v286 = vld [vmem:[%s267 + $0x8] sm:$0xff]
      %v287 = vld [vmem:[%s267 + $0x10] sm:$0xff]
      %v288 = vld [vmem:[%s267 + $0x18] sm:$0xff]
      %v289 = vld [vmem:[%s267 + $0x20] sm:$0xff]
      %v290 = vld [vmem:[%s267 + $0x28] sm:$0xff]
      %v291 = vld [vmem:[%s267 + $0x30] sm:$0xff]
      %v292 = vld [vmem:[%s267 + $0x38] sm:$0xff]
      %v293 = vld [vmem:[%s267 + $0x40] sm:$0xff]
      %v294 = vld [vmem:[%s267 + $0x48] sm:$0xff]
      %v295 = vld [vmem:[%s267 + $0x50] sm:$0xff]
      %v296 = vld [vmem:[%s267 + $0x58] sm:$0xff]
      %v297 = vld [vmem:[%s273] sm:$0xf]
      %v298 = vld [vmem:[%s273 + $0x4] sm:$0xf]
      %v299 = vld [vmem:[%s273 + $0x8] sm:$0xf]
      %v300 = vld [vmem:[%s273 + $0xc] sm:$0xf]
      %v301 = vld [vmem:[%s273 + $0x10] sm:$0xf]
      %v302 = vld [vmem:[%s273 + $0x14] sm:$0xf]
      %v303 = vld [vmem:[%s273 + $0x18] sm:$0xf]
      %v304 = vld [vmem:[%s273 + $0x1c] sm:$0xf]
      %v305 = vld [vmem:[%s2] sm:$0xff]
      %v306 = vld [vmem:[%s2 + $0x8] sm:$0xff]
      %v307 = vld [vmem:[%s2 + $0x10] sm:$0xff]
      %v308 = vld [vmem:[%s2 + $0x18] sm:$0xff]
      %v309 = vld [vmem:[%s2 + $0x20] sm:$0xff]
      %v310 = vld [vmem:[%s2 + $0x28] sm:$0xff]
      %v311 = vld [vmem:[%s2 + $0x30] sm:$0xff]
      %v312 = vld [vmem:[%s2 + $0x38] sm:$0xff]
      %314 = vset.pattern.permute.xlu0 0
      %315 = vperm.xlu0 %314, %v305
      %v316 = vpop.permute.xlu0 %315
      %319 = vset.pattern.permute.xlu0 0
      %320 = vperm.xlu0 %319, %v306
      %v321 = vpop.permute.xlu0 %320
      %324 = vset.pattern.permute.xlu0 0
      %325 = vperm.xlu0 %324, %v307
      %v326 = vpop.permute.xlu0 %325
      %329 = vset.pattern.permute.xlu0 0
      %330 = vperm.xlu0 %329, %v308
      %v331 = vpop.permute.xlu0 %330
      %334 = vset.pattern.permute.xlu0 0
      %335 = vperm.xlu0 %334, %v309
      %v336 = vpop.permute.xlu0 %335
      %339 = vset.pattern.permute.xlu0 0
      %340 = vperm.xlu0 %339, %v310
      %v341 = vpop.permute.xlu0 %340
      %344 = vset.pattern.permute.xlu0 0
      %345 = vperm.xlu0 %344, %v311
      %v346 = vpop.permute.xlu0 %345
      %349 = vset.pattern.permute.xlu0 0
      %350 = vperm.xlu0 %349, %v312
      %v351 = vpop.permute.xlu0 %350
      %v361 = vunpack.c.l.b16 %v297
      %v362 = vunpack.c.l.b16 %v298
      %v363 = vunpack.c.l.b16 %v299
      %v364 = vunpack.c.l.b16 %v300
      %v365 = vunpack.c.l.b16 %v301
      %v366 = vunpack.c.l.b16 %v302
      %v367 = vunpack.c.l.b16 %v303
      %v368 = vunpack.c.l.b16 %v304
      %v369 = vpack.c.b16 %v362, %v361
      %v370 = vpack.c.b16 %v364, %v363
      %v371 = vpack.c.b16 %v366, %v365
      %v372 = vpack.c.b16 %v368, %v367
      %v385 = vunpack.c.l.b16 %v285
      %v386 = vunpack.c.h.b16 %v285
      %v387 = vunpack.c.l.b16 %v286
      %v388 = vunpack.c.h.b16 %v286
      %v389 = vunpack.c.l.b16 %v287
      %v390 = vunpack.c.h.b16 %v287
      %v391 = vunpack.c.l.b16 %v288
      %v392 = vunpack.c.h.b16 %v288
      %v393 = vunpack.c.l.b16 %v289
      %v394 = vunpack.c.h.b16 %v289
      %v395 = vunpack.c.l.b16 %v290
      %v396 = vunpack.c.h.b16 %v290
      %v397 = vunpack.c.l.b16 %v291
      %v398 = vunpack.c.h.b16 %v291
      %v399 = vunpack.c.l.b16 %v292
      %v400 = vunpack.c.h.b16 %v292
      %v401 = vunpack.c.l.b16 %v293
      %v402 = vunpack.c.h.b16 %v293
      %v403 = vunpack.c.l.b16 %v294
      %v404 = vunpack.c.h.b16 %v294
      %v405 = vunpack.c.l.b16 %v295
      %v406 = vunpack.c.h.b16 %v295
      %v407 = vunpack.c.l.b16 %v296
      %v408 = vunpack.c.h.b16 %v296
      %v409 = vpack.c.b16 %v387, %v385
      %v410 = vpack.c.b16 %v388, %v386
      %v411 = vpack.c.b16 %v391, %v389
      %v412 = vpack.c.b16 %v392, %v390
      %v413 = vpack.c.b16 %v395, %v393
      %v414 = vpack.c.b16 %v396, %v394
      %v415 = vpack.c.b16 %v399, %v397
      %v416 = vpack.c.b16 %v400, %v398
      %v417 = vpack.c.b16 %v403, %v401
      %v418 = vpack.c.b16 %v404, %v402
      %v419 = vpack.c.b16 %v407, %v405
      %v420 = vpack.c.b16 %v408, %v406
      %vm433 = vcmask 785408
      %v435 = vsel %vm433, %v369, 0
      %v438 = vsel %vm433, %v370, 0
      %v441 = vsel %vm433, %v371, 0
      %v444 = vsel %vm433, %v372, 0
      %446 = vmatprep.subr.bf16.mxu0 %v410
      %447 = vmatpush1.bf16.msra.mxu0 %v409
      %448 = vmatprep.subr.bf16.mxu0 %v412
      %449 = vmatpush1.bf16.msra.mxu0 %v411
      %450 = vmatprep.subr.bf16.mxu0 %v414
      %451 = vmatpush1.bf16.msra.mxu0 %v413
      %452 = vmatprep.subr.bf16.mxu0 %v416
      %453 = vmatpush1.bf16.msra.mxu0 %v415
      %454 = vmatprep.subr.bf16.mxu0 %v418
      %455 = vmatpush1.bf16.msra.mxu0 %v417
      %456 = vmatprep.subr.bf16.mxu0 %v420
      %457 = vmatpush1.bf16.msra.mxu0 %v419
      %458 = vmatprep.subr.bf16.mxu0 0
      %459 = vmatpush1.bf16.msra.mxu0 0
      %460 = vmatprep.subr.bf16.mxu0 0
      %461 = vmatpush1.bf16.msra.mxu0 0
      %462 = vmatprep.subr.bf16.mxu0 0
      %463 = vmatpush1.bf16.msra.mxu0 0
      %464 = vmatprep.subr.bf16.mxu0 0
      %465 = vmatpush1.bf16.msra.mxu0 0
      %466 = vmatprep.subr.bf16.mxu0 0
      %467 = vmatpush1.bf16.msra.mxu0 0
      %468 = vmatprep.subr.bf16.mxu0 0
      %469 = vmatpush1.bf16.msra.mxu0 0
      %470 = vmatprep.subr.bf16.mxu0 0
      %471 = vmatpush1.bf16.msra.mxu0 0
      %472 = vmatprep.subr.bf16.mxu0 0
      %473 = vmatpush1.bf16.msra.mxu0 0
      %474 = vmatprep.subr.bf16.mxu0 0
      %475 = vmatpush1.bf16.msra.mxu0 0
      %476 = vmatprep.subr.bf16.mxu0 0
      %477 = vmatpush1.bf16.msra.mxu0 0
      %478 = vmatprep.mubr.bf16.mxu0 0
      %479 = vmatmul.mubr.bf16.gmra.mrb[0].mxu0 %v435
      %v480 = vpop.f32.mrb[0].mxu0
      %v481 = vadd.f32 %v316, %v480
      %v482 = vpop.f32.mrb[0].mxu0
      %v483 = vadd.f32 %v316, %v482
      %v484 = vpop.f32.mrb[0].mxu0
      %v485 = vadd.f32 %v321, %v484
      %v486 = vpop.f32.mrb[0].mxu0
      %v487 = vadd.f32 %v321, %v486
      %488 = vmatprep.mubr.bf16.mxu0 0
      %489 = vmatmul.mubr.bf16.gmra.mrb[0].mxu0 %v438
      %v490 = vpop.f32.mrb[0].mxu0
      %v491 = vadd.f32 %v326, %v490
      %v492 = vpop.f32.mrb[0].mxu0
      %v493 = vadd.f32 %v326, %v492
      %v494 = vpop.f32.mrb[0].mxu0
      %v495 = vadd.f32 %v331, %v494
      %v496 = vpop.f32.mrb[0].mxu0
      %v497 = vadd.f32 %v331, %v496
      %498 = vmatprep.mubr.bf16.mxu0 0
      %499 = vmatmul.mubr.bf16.gmra.mrb[0].mxu0 %v441
      %v500 = vpop.f32.mrb[0].mxu0
      %v501 = vadd.f32 %v336, %v500
      %v502 = vpop.f32.mrb[0].mxu0
      %v503 = vadd.f32 %v336, %v502
      %v504 = vpop.f32.mrb[0].mxu0
      %v505 = vadd.f32 %v341, %v504
      %v506 = vpop.f32.mrb[0].mxu0
      %v507 = vadd.f32 %v341, %v506
      %508 = vmatprep.mubr.bf16.mxu0 0
      %509 = vmatmul.mubr.bf16.gmra.mrb[0].mxu0 %v444
      %v510 = vpop.f32.mrb[0].mxu0
      %v511 = vadd.f32 %v346, %v510
      %v512 = vpop.f32.mrb[0].mxu0
      %v513 = vadd.f32 %v346, %v512
      %v514 = vpop.f32.mrb[0].mxu0
      %v515 = vadd.f32 %v351, %v514
      %v516 = vpop.f32.mrb[0].mxu0
      %v517 = vadd.f32 %v351, %v516
      %518 = vdwg.mxu0
      %v519 = vmax.f32 %v481, 0.0
      %v520 = vmax.f32 %v483, 0.0
      %v521 = vmax.f32 %v485, 0.0
      %v522 = vmax.f32 %v487, 0.0
      %v523 = vmax.f32 %v491, 0.0
      %v524 = vmax.f32 %v493, 0.0
      %v525 = vmax.f32 %v495, 0.0
      %v526 = vmax.f32 %v497, 0.0
      %v527 = vmax.f32 %v501, 0.0
      %v528 = vmax.f32 %v503, 0.0
      %v529 = vmax.f32 %v505, 0.0
      %v530 = vmax.f32 %v507, 0.0
      %v531 = vmax.f32 %v511, 0.0
      %v532 = vmax.f32 %v513, 0.0
      %v533 = vmax.f32 %v515, 0.0
      %v534 = vmax.f32 %v517, 0.0
      %v535 = vld [vmem:[%s3] sm:$0xf]
      %v536 = vpack.c.bf16 %v521, %v519
      %v537 = vpack.c.bf16 %v522, %v520
      %v538 = vpack.c.bf16 %v525, %v523
      %v539 = vpack.c.bf16 %v526, %v524
      %v540 = vpack.c.bf16 %v529, %v527
      %v541 = vpack.c.bf16 %v530, %v528
      %v542 = vpack.c.bf16 %v533, %v531
      %v543 = vpack.c.bf16 %v534, %v532
      %v544 = vld [vmem:[%s4] sm:$0x7f]
      %546 = vset.pattern.permute.xlu0 0
      %547 = vperm.xlu0 %546, %v544
      %v548 = vpop.permute.xlu0 %547
      %vm550 = vcmask 523264
      %v552 = vsel %vm550, %v535, 0
      %554 = vmatprep.subr.bf16.mxu0 %v537
      %555 = vmatpush1.bf16.msra.mxu0 %v536
      %556 = vmatprep.subr.bf16.mxu0 %v539
      %557 = vmatpush1.bf16.msra.mxu0 %v538
      %558 = vmatprep.subr.bf16.mxu0 %v541
      %559 = vmatpush1.bf16.msra.mxu0 %v540
      %560 = vmatprep.subr.bf16.mxu0 %v543
      %561 = vmatpush1.bf16.msra.mxu0 %v542
      %562 = vmatprep.subr.bf16.mxu0 0
      %563 = vmatpush1.bf16.msra.mxu0 0
      %564 = vmatprep.subr.bf16.mxu0 0
      %565 = vmatpush1.bf16.msra.mxu0 0
      %566 = vmatprep.subr.bf16.mxu0 0
      %567 = vmatpush1.bf16.msra.mxu0 0
      %568 = vmatprep.subr.bf16.mxu0 0
      %569 = vmatpush1.bf16.msra.mxu0 0
      %570 = vmatprep.subr.bf16.mxu0 0
      %571 = vmatpush1.bf16.msra.mxu0 0
      %572 = vmatprep.subr.bf16.mxu0 0
      %573 = vmatpush1.bf16.msra.mxu0 0
      %574 = vmatprep.subr.bf16.mxu0 0
      %575 = vmatpush1.bf16.msra.mxu0 0
      %576 = vmatprep.subr.bf16.mxu0 0
      %577 = vmatpush1.bf16.msra.mxu0 0
      %578 = vmatprep.subr.bf16.mxu0 0
      %579 = vmatpush1.bf16.msra.mxu0 0
      %580 = vmatprep.subr.bf16.mxu0 0
      %581 = vmatpush1.bf16.msra.mxu0 0
      %582 = vmatprep.subr.bf16.mxu0 0
      %583 = vmatpush1.bf16.msra.mxu0 0
      %584 = vmatprep.subr.bf16.mxu0 0
      %585 = vmatpush1.bf16.msra.mxu0 0
      %586 = vmatprep.mubr.bf16.mxu0 0
      %587 = vmatmul.mubr.bf16.gmra.mrb[0].mxu0 %v552
      %v588 = vpop.f32.mrb[0].mxu0
      %v589 = vadd.f32 %v548, %v588
      %v590 = vpop.f32.mrb[0].mxu0
      %v591 = vadd.f32 %v548, %v590
      %v592 = vpop.f32.mrb[0].mxu0
      %v593 = vpop.f32.mrb[0].mxu0
      %594 = vdwg.mxu0
      %595 = vst [vmem:[%s282] sm:$0x7f] %v589
      %596 = vst [vmem:[%s282 + $0x8] sm:$0x7f] %v591
      %s597 = smul.u32 2, %s21
      %p598 = scmp.lt.s32.totalorder %s20, 1
      %s599 = scalar_select %p598, %s20, 1
      %p600 = scmp.lt.s32.totalorder %s597, 1
      %s601 = scalar_select %p600, %s597, 1
      %s602 = smul.addr %s599, 2
      %s603 = sadd.s32 %s601, %s602
      %s604 = smul.addr %s603, 8
      %s605 = scalar_lea.vmem %s5, %s604
      // Predicated region
      $region41: #{gama_part_decoder.3} parent=39 // pred_check
        %p606 = pneg %p165
      $region42: #{gama_part_decoder.3} parent=39 // pred_check_branch
        %608 = sbr.rel (%p606) target = $region44
      $region43: #{gama_part_decoder.3} parent=39 // pred_region
        %s609 = smul.u32 2, %s21
      $region44: #{gama_part_decoder.3} parent=39 // pred_fallthru
        _
    $region40: #{gama_part_decoder.3} parent=5 // pred_fallthru
      _
    %p610 = scmp.le.s32.totalorder 2, %s11
    // Predicated region
    $region45: #{gama_part_decoder.3} parent=5 // pred_check
      %p611 = pneg %p610
    $region46: #{gama_part_decoder.3} parent=5 // pred_check_branch
      %613 = sbr.rel (%p611) target = $region48
    $region47: #{gama_part_decoder.3} parent=5 // pred_region
      %s614 = ssub.s32 %s11, 2
      // Predicated region
      $region49: #{gama_part_decoder.3} parent=47 // pred_check
        %p615 = pneg %p171
      $region50: #{gama_part_decoder.3} parent=47 // pred_check_branch
        %617 = sbr.rel (%p615) target = $region52
      $region51: #{gama_part_decoder.3} parent=47 // pred_region
        %s618 = smul.u32 2, %s23
        %p619 = scmp.lt.s32.totalorder %s22, 1
        %s620 = scalar_select %p619, %s22, 1
        %p621 = scmp.lt.s32.totalorder %s618, 1
        %s622 = scalar_select %p621, %s618, 1
        %s623 = smul.addr %s620, 2
        %s624 = sadd.s32 %s622, %s623
        %s625 = smul.addr %s624, 8
        %s626 = scalar_lea.vmem %s5, %s625
      $region52: #{gama_part_decoder.3} parent=47 // pred_fallthru
        _
    $region48: #{gama_part_decoder.3} parent=5 // pred_fallthru
      _
  $region6: #{gama_part_decoder.3} parent=0 // loop_footer
    %s15 = sadd.s32 1, %s11
  $region7: #{gama_part_decoder.3} parent=0 // loop_footer_branch
    %10 = sbr.rel target = $region3
  $region8: #{gama_part_decoder.3} parent=0 // loop_exit
    _

// kernel: gama_part_decoder.2
$region0: #{gama_part_decoder.2}
  #allocation0 [shape = 'u32[]', space=smem, size = 0x4, offset = 0x4, fixed_abs, tag = 'smem constant byte address 0x4 - core index']
  #allocation1 [shape = 'u32[144,128]{1,0:T(1,128)}', space=vmem, size = 0x12000, scoped, tag = 'internal scratch']
  %s0 = inlined_call_operand.vmem [shape: bf16[2,4,256], index: 0, kind: input, shape index: {}]
  %s1 = inlined_call_operand.vmem [shape: bf16[2,256,256], index: 1, kind: input, shape index: {}]
  %s2 = inlined_call_operand.vmem [shape: s32[1,256], index: 2, kind: input, shape index: {}]
  %s3 = inlined_call_operand.vmem [shape: f32[32,4], index: 3, kind: input, shape index: {}]
  %s4 = inlined_call_operand.vmem [shape: f32[32,1], index: 4, kind: input, shape index: {}]
  %s5 = inlined_call_operand.vmem [shape: bf16[9,64,256], index: 5, kind: input, shape index: {}]
  %s6 = inlined_call_operand.vmem [shape: f32[64,1], index: 6, kind: input, shape index: {}]
  %s7 = inlined_call_operand.vmem [shape: bf16[2,96,256], index: 7, kind: output, shape index: {0}]
  %s8 = inlined_call_operand.vmem [shape: f32[2,96,1], index: 8, kind: output, shape index: {1}]
  %9 = xla_tuple %s7, %s8
  %s10 = sld [smem:[#allocation0]]
  $region69: #{gama_part_decoder.2} parent=0
    _
  %s12 = ssub.s32 1, %s10
  %s13 = scalar_select 0, %s12, %s10
  loop: start=0, step=1, limit=4
  $region2: #{gama_part_decoder.2} parent=0 // loop_pre_header
    _
  $region3: #{gama_part_decoder.2} parent=0 // loop_header
    %s15 = sphi 0, %s19
    %p16 = scmp.ge.s32.totalorder %s15, 4
    %s25 = sphi 0, %s27
    %s28 = sphi 0, %s25
    %s29 = sphi 0, %s28
    %s45 = sphi 0, %s29
    %s51 = sphi 0, %s53
    %s54 = sphi 0, %s51
    %s55 = sphi 0, %s54
    %s71 = sphi 0, %s55
    %s75 = sphi 0, %s75
    %s77 = sphi 0, %s75
    %s78 = sphi 0, %s77
    %s92 = sphi 0, %s78
    %s96 = sphi 0, %s96
    %s98 = sphi 0, %s96
    %s99 = sphi 0, %s98
    %s113 = sphi 0, %s99
    %s117 = sphi 0, %s117
    %s119 = sphi 0, %s117
    %s120 = sphi 0, %s119
    %s134 = sphi 0, %s120
    %s138 = sphi 0, %s138
    %s140 = sphi 0, %s138
    %s141 = sphi 0, %s140
    %s155 = sphi 0, %s141
    %s159 = sphi 0, %s159
    %s161 = sphi 0, %s159
    %s162 = sphi 0, %s161
    %s176 = sphi 0, %s162
    %s182 = sphi 0, %s184
    %s185 = sphi 0, %s182
    %s186 = sphi 0, %s185
    %s202 = sphi 0, %s186
    %s208 = sphi 0, %s210
    %s211 = sphi 0, %s208
    %s212 = sphi 0, %s211
    %s228 = sphi 0, %s212
  $region4: #{gama_part_decoder.2} parent=0 // loop_header_branch
    %18 = sbr.rel (%p16) target = $region8
  $region5: #{gama_part_decoder.2} parent=0 // loop_body
    %s20 = ssub.s32 %s15, 1
    %s21 = ssub.s32 %s15, 2
    %s22 = sadd.s32 %s15, 1
    %s23 = ssub.s32 %s15, %s22
    %p24 = scmp.eq.s32.totalorder %s23, 0
    %s26 = sadd.s32 %s25, 1
    %s27 = scalar_select %p24, %s25, %s26
    %p30 = pneg %p24
    %p31 = scmp.eq.s32.totalorder %s15, 1
    %p32 = por %p30, %p31
    %p33 = scmp.ne.s32.totalorder %s25, %s28
    %p34 = scmp.eq.s32.totalorder %s15, 0
    %p35 = por %p33, %p34
    %p36 = scmp.ne.s32.totalorder %s25, %s28
    %p37 = scmp.eq.s32.totalorder %s20, 1
    %p38 = por %p36, %p37
    %p39 = scmp.ne.s32.totalorder %s28, %s29
    %p40 = scmp.eq.s32.totalorder %s20, 0
    %p41 = por %p39, %p40
    %p42 = scmp.ne.s32.totalorder %s28, %s29
    %p43 = scmp.eq.s32.totalorder %s21, 1
    %p44 = por %p42, %p43
    %p46 = scmp.ne.s32.totalorder %s29, %s45
    %p47 = scmp.eq.s32.totalorder %s21, 0
    %p48 = por %p46, %p47
    %s49 = ssub.s32 %s15, %s22
    %p50 = scmp.eq.s32.totalorder %s49, 0
    %s52 = sadd.s32 %s51, 1
    %s53 = scalar_select %p50, %s51, %s52
    %p56 = pneg %p50
    %p57 = scmp.eq.s32.totalorder %s15, 1
    %p58 = por %p56, %p57
    %p59 = scmp.ne.s32.totalorder %s51, %s54
    %p60 = scmp.eq.s32.totalorder %s15, 0
    %p61 = por %p59, %p60
    %p62 = scmp.ne.s32.totalorder %s51, %s54
    %p63 = scmp.eq.s32.totalorder %s20, 1
    %p64 = por %p62, %p63
    %p65 = scmp.ne.s32.totalorder %s54, %s55
    %p66 = scmp.eq.s32.totalorder %s20, 0
    %p67 = por %p65, %p66
    %p68 = scmp.ne.s32.totalorder %s54, %s55
    %p69 = scmp.eq.s32.totalorder %s21, 1
    %p70 = por %p68, %p69
    %p72 = scmp.ne.s32.totalorder %s55, %s71
    %p73 = scmp.eq.s32.totalorder %s21, 0
    %p74 = por %p72, %p73
    %s76 = sadd.s32 %s75, 1
    %p79 = scmp.eq.s32.totalorder %s15, 1
    %p80 = scmp.ne.s32.totalorder %s75, %s77
    %p81 = scmp.eq.s32.totalorder %s15, 0
    %p82 = por %p80, %p81
    %p83 = scmp.ne.s32.totalorder %s75, %s77
    %p84 = scmp.eq.s32.totalorder %s20, 1
    %p85 = por %p83, %p84
    %p86 = scmp.ne.s32.totalorder %s77, %s78
    %p87 = scmp.eq.s32.totalorder %s20, 0
    %p88 = por %p86, %p87
    %p89 = scmp.ne.s32.totalorder %s77, %s78
    %p90 = scmp.eq.s32.totalorder %s21, 1
    %p91 = por %p89, %p90
    %p93 = scmp.ne.s32.totalorder %s78, %s92
    %p94 = scmp.eq.s32.totalorder %s21, 0
    %p95 = por %p93, %p94
    %s97 = sadd.s32 %s96, 1
    %p100 = scmp.eq.s32.totalorder %s15, 1
    %p101 = scmp.ne.s32.totalorder %s96, %s98
    %p102 = scmp.eq.s32.totalorder %s15, 0
    %p103 = por %p101, %p102
    %p104 = scmp.ne.s32.totalorder %s96, %s98
    %p105 = scmp.eq.s32.totalorder %s20, 1
    %p106 = por %p104, %p105
    %p107 = scmp.ne.s32.totalorder %s98, %s99
    %p108 = scmp.eq.s32.totalorder %s20, 0
    %p109 = por %p107, %p108
    %p110 = scmp.ne.s32.totalorder %s98, %s99
    %p111 = scmp.eq.s32.totalorder %s21, 1
    %p112 = por %p110, %p111
    %p114 = scmp.ne.s32.totalorder %s99, %s113
    %p115 = scmp.eq.s32.totalorder %s21, 0
    %p116 = por %p114, %p115
    %s118 = sadd.s32 %s117, 1
    %p121 = scmp.eq.s32.totalorder %s15, 1
    %p122 = scmp.ne.s32.totalorder %s117, %s119
    %p123 = scmp.eq.s32.totalorder %s15, 0
    %p124 = por %p122, %p123
    %p125 = scmp.ne.s32.totalorder %s117, %s119
    %p126 = scmp.eq.s32.totalorder %s20, 1
    %p127 = por %p125, %p126
    %p128 = scmp.ne.s32.totalorder %s119, %s120
    %p129 = scmp.eq.s32.totalorder %s20, 0
    %p130 = por %p128, %p129
    %p131 = scmp.ne.s32.totalorder %s119, %s120
    %p132 = scmp.eq.s32.totalorder %s21, 1
    %p133 = por %p131, %p132
    %p135 = scmp.ne.s32.totalorder %s120, %s134
    %p136 = scmp.eq.s32.totalorder %s21, 0
    %p137 = por %p135, %p136
    %s139 = sadd.s32 %s138, 1
    %p142 = scmp.eq.s32.totalorder %s15, 1
    %p143 = scmp.ne.s32.totalorder %s138, %s140
    %p144 = scmp.eq.s32.totalorder %s15, 0
    %p145 = por %p143, %p144
    %p146 = scmp.ne.s32.totalorder %s138, %s140
    %p147 = scmp.eq.s32.totalorder %s20, 1
    %p148 = por %p146, %p147
    %p149 = scmp.ne.s32.totalorder %s140, %s141
    %p150 = scmp.eq.s32.totalorder %s20, 0
    %p151 = por %p149, %p150
    %p152 = scmp.ne.s32.totalorder %s140, %s141
    %p153 = scmp.eq.s32.totalorder %s21, 1
    %p154 = por %p152, %p153
    %p156 = scmp.ne.s32.totalorder %s141, %s155
    %p157 = scmp.eq.s32.totalorder %s21, 0
    %p158 = por %p156, %p157
    %s160 = sadd.s32 %s159, 1
    %p163 = scmp.eq.s32.totalorder %s15, 1
    %p164 = scmp.ne.s32.totalorder %s159, %s161
    %p165 = scmp.eq.s32.totalorder %s15, 0
    %p166 = por %p164, %p165
    %p167 = scmp.ne.s32.totalorder %s159, %s161
    %p168 = scmp.eq.s32.totalorder %s20, 1
    %p169 = por %p167, %p168
    %p170 = scmp.ne.s32.totalorder %s161, %s162
    %p171 = scmp.eq.s32.totalorder %s20, 0
    %p172 = por %p170, %p171
    %p173 = scmp.ne.s32.totalorder %s161, %s162
    %p174 = scmp.eq.s32.totalorder %s21, 1
    %p175 = por %p173, %p174
    %p177 = scmp.ne.s32.totalorder %s162, %s176
    %p178 = scmp.eq.s32.totalorder %s21, 0
    %p179 = por %p177, %p178
    %s180 = ssub.s32 %s15, %s22
    %p181 = scmp.eq.s32.totalorder %s180, 0
    %s183 = sadd.s32 %s182, 1
    %s184 = scalar_select %p181, %s182, %s183
    %p187 = pneg %p181
    %p188 = scmp.eq.s32.totalorder %s15, 1
    %p189 = por %p187, %p188
    %p190 = scmp.ne.s32.totalorder %s182, %s185
    %p191 = scmp.eq.s32.totalorder %s15, 0
    %p192 = por %p190, %p191
    %p193 = scmp.ne.s32.totalorder %s182, %s185
    %p194 = scmp.eq.s32.totalorder %s20, 1
    %p195 = por %p193, %p194
    %p196 = scmp.ne.s32.totalorder %s185, %s186
    %p197 = scmp.eq.s32.totalorder %s20, 0
    %p198 = por %p196, %p197
    %p199 = scmp.ne.s32.totalorder %s185, %s186
    %p200 = scmp.eq.s32.totalorder %s21, 1
    %p201 = por %p199, %p200
    %p203 = scmp.ne.s32.totalorder %s186, %s202
    %p204 = scmp.eq.s32.totalorder %s21, 0
    %p205 = por %p203, %p204
    %s206 = ssub.s32 %s15, %s22
    %p207 = scmp.eq.s32.totalorder %s206, 0
    %s209 = sadd.s32 %s208, 1
    %s210 = scalar_select %p207, %s208, %s209
    %p213 = pneg %p207
    %p214 = scmp.eq.s32.totalorder %s15, 1
    %p215 = por %p213, %p214
    %p216 = scmp.ne.s32.totalorder %s208, %s211
    %p217 = scmp.eq.s32.totalorder %s15, 0
    %p218 = por %p216, %p217
    %p219 = scmp.ne.s32.totalorder %s208, %s211
    %p220 = scmp.eq.s32.totalorder %s20, 1
    %p221 = por %p219, %p220
    %p222 = scmp.ne.s32.totalorder %s211, %s212
    %p223 = scmp.eq.s32.totalorder %s20, 0
    %p224 = por %p222, %p223
    %p225 = scmp.ne.s32.totalorder %s211, %s212
    %p226 = scmp.eq.s32.totalorder %s21, 1
    %p227 = por %p225, %p226
    %p229 = scmp.ne.s32.totalorder %s212, %s228
    %p230 = scmp.eq.s32.totalorder %s21, 0
    %p231 = por %p229, %p230
    %p232 = scmp.le.s32.totalorder 1, %s15
    %p233 = scmp.lt.s32.totalorder %s15, 3
    %p234 = pnand %p232, %p233
    %p235 = pneg %p234
    // Predicated region
    $region9: #{gama_part_decoder.2} parent=5 // pred_check
      _
    $region10: #{gama_part_decoder.2} parent=5 // pred_check_branch
      %237 = sbr.rel (%p234) target = $region12
    $region11: #{gama_part_decoder.2} parent=5 // pred_region
      %s238 = ssub.s32 %s15, 1
      // Predicated region
      $region13: #{gama_part_decoder.2} parent=11 // pred_check
        %p239 = pneg %p88
      $region14: #{gama_part_decoder.2} parent=11 // pred_check_branch
        %241 = sbr.rel (%p239) target = $region16
      $region15: #{gama_part_decoder.2} parent=11 // pred_region
        _
      $region16: #{gama_part_decoder.2} parent=11 // pred_fallthru
        _
      // Predicated region
      $region17: #{gama_part_decoder.2} parent=11 // pred_check
        %p242 = pneg %p109
      $region18: #{gama_part_decoder.2} parent=11 // pred_check_branch
        %244 = sbr.rel (%p242) target = $region20
      $region19: #{gama_part_decoder.2} parent=11 // pred_region
        _
      $region20: #{gama_part_decoder.2} parent=11 // pred_fallthru
        _
      // Predicated region
      $region21: #{gama_part_decoder.2} parent=11 // pred_check
        %p245 = pneg %p130
      $region22: #{gama_part_decoder.2} parent=11 // pred_check_branch
        %247 = sbr.rel (%p245) target = $region24
      $region23: #{gama_part_decoder.2} parent=11 // pred_region
        _
      $region24: #{gama_part_decoder.2} parent=11 // pred_fallthru
        _
      // Predicated region
      $region25: #{gama_part_decoder.2} parent=11 // pred_check
        %p248 = pneg %p151
      $region26: #{gama_part_decoder.2} parent=11 // pred_check_branch
        %250 = sbr.rel (%p248) target = $region28
      $region27: #{gama_part_decoder.2} parent=11 // pred_region
        _
      $region28: #{gama_part_decoder.2} parent=11 // pred_fallthru
        _
      // Predicated region
      $region29: #{gama_part_decoder.2} parent=11 // pred_check
        %p251 = pneg %p172
      $region30: #{gama_part_decoder.2} parent=11 // pred_check_branch
        %253 = sbr.rel (%p251) target = $region32
      $region31: #{gama_part_decoder.2} parent=11 // pred_region
        _
      $region32: #{gama_part_decoder.2} parent=11 // pred_fallthru
        _
    $region12: #{gama_part_decoder.2} parent=5 // pred_fallthru
      _
    %p254 = scmp.lt.s32.totalorder %s15, 2
    // Predicated region
    $region33: #{gama_part_decoder.2} parent=5 // pred_check
      %p255 = pneg %p254
    $region34: #{gama_part_decoder.2} parent=5 // pred_check_branch
      %257 = sbr.rel (%p255) target = $region36
    $region35: #{gama_part_decoder.2} parent=5 // pred_region
      // Predicated region
      $region37: #{gama_part_decoder.2} parent=35 // pred_check
        %p258 = pneg %p35
      $region38: #{gama_part_decoder.2} parent=35 // pred_check_branch
        %260 = sbr.rel (%p258) target = $region40
      $region39: #{gama_part_decoder.2} parent=35 // pred_region
        %p261 = scmp.lt.s32.totalorder %s15, 1
        %s262 = scalar_select %p261, %s15, 1
        %s263 = smul.addr %s262, 2
        %s264 = smul.addr %s263, 2
        %s265 = scalar_lea.vmem %s0, %s264
      $region40: #{gama_part_decoder.2} parent=35 // pred_fallthru
        _
      // Predicated region
      $region41: #{gama_part_decoder.2} parent=35 // pred_check
        %p266 = pneg %p61
      $region42: #{gama_part_decoder.2} parent=35 // pred_check_branch
        %268 = sbr.rel (%p266) target = $region44
      $region43: #{gama_part_decoder.2} parent=35 // pred_region
        %p269 = scmp.lt.s32.totalorder %s15, 1
        %s270 = scalar_select %p269, %s15, 1
        %s271 = smul.addr %s270, 64
        %s272 = smul.addr %s271, 4
        %s273 = scalar_lea.vmem %s1, %s272
      $region44: #{gama_part_decoder.2} parent=35 // pred_fallthru
        _
    $region36: #{gama_part_decoder.2} parent=5 // pred_fallthru
      _
    %p274 = scmp.le.s32.totalorder 1, %s15
    %p275 = scmp.lt.s32.totalorder %s15, 3
    %p276 = pnand %p274, %p275
    %p277 = pneg %p276
    // Predicated region
    $region45: #{gama_part_decoder.2} parent=5 // pred_check
      _
    $region46: #{gama_part_decoder.2} parent=5 // pred_check_branch
      %279 = sbr.rel (%p276) target = $region48
    $region47: #{gama_part_decoder.2} parent=5 // pred_region
      %s280 = ssub.s32 %s15, 1
      %p281 = scmp.lt.s32.totalorder %s20, 1
      %s282 = scalar_select %p281, %s20, 1
      %s283 = smul.addr %s282, 2
      %s284 = smul.addr %s283, 2
      %s285 = scalar_lea.vmem %s0, %s284
      %p286 = pneg %p41
      %p287 = pneg %p38
      %p288 = scmp.lt.s32.totalorder %s20, 1
      %s289 = scalar_select %p288, %s20, 1
      %s290 = smul.addr %s289, 64
      %s291 = smul.addr %s290, 4
      %s292 = scalar_lea.vmem %s1, %s291
      %p293 = pneg %p67
      %p294 = pneg %p64
      %p295 = pneg %p88
      %p296 = pneg %p85
      %p297 = pneg %p109
      %p298 = pneg %p106
      %p299 = pneg %p130
      %p300 = pneg %p127
      %p301 = pneg %p151
      %p302 = pneg %p148
      %p303 = pneg %p172
      %p304 = pneg %p169
      %p305 = pneg %p198
      %p306 = pneg %p195
      %p307 = scmp.lt.s32.totalorder %s20, 1
      %s308 = scalar_select %p307, %s20, 1
      %s309 = smul.addr %s308, 24
      %s310 = smul.addr %s309, 4
      %s311 = scalar_lea.vmem %s7, %s310
      %p312 = pneg %p224
      %p313 = pneg %p221
      %p314 = scmp.lt.s32.totalorder %s20, 1
      %s315 = scalar_select %p314, %s20, 1
      %s316 = smul.addr %s315, 12
      %s317 = smul.addr %s316, 8
      %s318 = scalar_lea.vmem %s8, %s317
      %p319 = scmp.lt.s32.totalorder %s20, 1
      %s320 = scalar_select %p319, %s20, 1
      %s321 = smul.addr %s320, 2
      %s322 = smul.addr %s321, 2
      %s323 = scalar_lea.vmem %s0, %s322
      %p324 = scmp.lt.s32.totalorder %s20, 1
      %s325 = scalar_select %p324, %s20, 1
      %s326 = smul.addr %s325, 64
      %s327 = smul.addr %s326, 4
      %s328 = scalar_lea.vmem %s1, %s327
      %p329 = scmp.lt.s32.totalorder %s20, 1
      %s330 = scalar_select %p329, %s20, 1
      %s331 = smul.addr %s330, 24
      %s332 = smul.addr %s331, 4
      %s333 = scalar_lea.vmem %s7, %s332
      %p334 = scmp.lt.s32.totalorder %s20, 1
      %s335 = scalar_select %p334, %s20, 1
      %s336 = smul.addr %s335, 12
      %s337 = smul.addr %s336, 8
      %s338 = scalar_lea.vmem %s8, %s337
      %v339 = vld [vmem:[%s323] sm:$0xf]
      %v340 = vunpack.c.l.bf16 %v339
      %v341 = vld [vmem:[%s3] sm:$0xff]
      %v342 = vld [vmem:[%s3 + $0x8] sm:$0xff]
      %v343 = vld [vmem:[%s3 + $0x10] sm:$0xff]
      %v344 = vld [vmem:[%s3 + $0x18] sm:$0xff]
      %346 = vset.pattern.permute.xlu0 0
      %347 = vperm.xlu0 %346, %v341
      %v348 = vpop.permute.xlu0 %347
      %351 = vset.pattern.permute.xlu0 0
      %352 = vperm.xlu0 %351, %v342
      %v353 = vpop.permute.xlu0 %352
      %356 = vset.pattern.permute.xlu0 0
      %357 = vperm.xlu0 %356, %v343
      %v358 = vpop.permute.xlu0 %357
      %361 = vset.pattern.permute.xlu0 0
      %362 = vperm.xlu0 %361, %v344
      %v363 = vpop.permute.xlu0 %362
      %v366 = vlaneseq
      %v367 = vshrl.u32 %v366, 7
      %v368 = vsub.s32 0, %v367
      %v369 = vrot.slane %v340, %v368
      %v370 = vlaneseq
      %v371 = vshrl.u32 %v370, 7
      %v372 = vsub.s32 4, %v371
      %v373 = vrot.slane %v340, %v372
      %v376 = vlaneseq
      %v377 = vshrl.u32 %v376, 7
      %v378 = vsub.s32 0, %v377
      %v379 = vrot.slane %v369, %v378
      %v380 = vlaneseq
      %v381 = vshrl.u32 %v380, 7
      %v382 = vsub.s32 0, %v381
      %v383 = vrot.slane %v373, %v382
      %v384 = vmul.f32 %v348, %v379
      %v385 = vmul.f32 %v348, %v383
      %v386 = vmul.f32 %v353, %v379
      %v387 = vmul.f32 %v353, %v383
      %v388 = vmul.f32 %v358, %v379
      %v389 = vmul.f32 %v358, %v383
      %v390 = vmul.f32 %v363, %v379
      %v391 = vmul.f32 %v363, %v383
      %392 = vset.pattern.permute.xlu0 1
      %393 = vperm.xlu0 %392, %v341
      %v394 = vpop.permute.xlu0 %393
      %396 = vset.pattern.permute.xlu0 1
      %397 = vperm.xlu0 %396, %v342
      %v398 = vpop.permute.xlu0 %397
      %400 = vset.pattern.permute.xlu0 1
      %401 = vperm.xlu0 %400, %v343
      %v402 = vpop.permute.xlu0 %401
      %404 = vset.pattern.permute.xlu0 1
      %405 = vperm.xlu0 %404, %v344
      %v406 = vpop.permute.xlu0 %405
      %v408 = vlaneseq
      %v409 = vshrl.u32 %v408, 7
      %v410 = vsub.s32 1, %v409
      %v411 = vrot.slane %v340, %v410
      %v412 = vlaneseq
      %v413 = vshrl.u32 %v412, 7
      %v414 = vsub.s32 5, %v413
      %v415 = vrot.slane %v340, %v414
      %v418 = vlaneseq
      %v419 = vshrl.u32 %v418, 7
      %v420 = vsub.s32 1, %v419
      %v421 = vrot.slane %v411, %v420
      %v422 = vlaneseq
      %v423 = vshrl.u32 %v422, 7
      %v424 = vsub.s32 1, %v423
      %v425 = vrot.slane %v415, %v424
      %v426 = vmul.f32 %v394, %v421
      %v427 = vmul.f32 %v394, %v425
      %v428 = vmul.f32 %v398, %v421
      %v429 = vmul.f32 %v398, %v425
      %v430 = vmul.f32 %v402, %v421
      %v431 = vmul.f32 %v402, %v425
      %v432 = vmul.f32 %v406, %v421
      %v433 = vmul.f32 %v406, %v425
      %v434 = vadd.f32 %v384, %v426
      %v435 = vadd.f32 %v385, %v427
      %v436 = vadd.f32 %v386, %v428
      %v437 = vadd.f32 %v387, %v429
      %v438 = vadd.f32 %v388, %v430
      %v439 = vadd.f32 %v389, %v431
      %v440 = vadd.f32 %v390, %v432
      %v441 = vadd.f32 %v391, %v433
      %442 = vset.pattern.permute.xlu0 2
      %443 = vperm.xlu0 %442, %v341
      %v444 = vpop.permute.xlu0 %443
      %446 = vset.pattern.permute.xlu0 2
      %447 = vperm.xlu0 %446, %v342
      %v448 = vpop.permute.xlu0 %447
      %450 = vset.pattern.permute.xlu0 2
      %451 = vperm.xlu0 %450, %v343
      %v452 = vpop.permute.xlu0 %451
      %454 = vset.pattern.permute.xlu0 2
      %455 = vperm.xlu0 %454, %v344
      %v456 = vpop.permute.xlu0 %455
      %v458 = vlaneseq
      %v459 = vshrl.u32 %v458, 7
      %v460 = vsub.s32 2, %v459
      %v461 = vrot.slane %v340, %v460
      %v462 = vlaneseq
      %v463 = vshrl.u32 %v462, 7
      %v464 = vsub.s32 6, %v463
      %v465 = vrot.slane %v340, %v464
      %v468 = vlaneseq
      %v469 = vshrl.u32 %v468, 7
      %v470 = vsub.s32 2, %v469
      %v471 = vrot.slane %v461, %v470
      %v472 = vlaneseq
      %v473 = vshrl.u32 %v472, 7
      %v474 = vsub.s32 2, %v473
      %v475 = vrot.slane %v465, %v474
      %v476 = vmul.f32 %v444, %v471
      %v477 = vmul.f32 %v444, %v475
      %v478 = vmul.f32 %v448, %v471
      %v479 = vmul.f32 %v448, %v475
      %v480 = vmul.f32 %v452, %v471
      %v481 = vmul.f32 %v452, %v475
      %v482 = vmul.f32 %v456, %v471
      %v483 = vmul.f32 %v456, %v475
      %v484 = vadd.f32 %v434, %v476
      %v485 = vadd.f32 %v435, %v477
      %v486 = vadd.f32 %v436, %v478
      %v487 = vadd.f32 %v437, %v479
      %v488 = vadd.f32 %v438, %v480
      %v489 = vadd.f32 %v439, %v481
      %v490 = vadd.f32 %v440, %v482
      %v491 = vadd.f32 %v441, %v483
      %492 = vset.pattern.permute.xlu0 3
      %493 = vperm.xlu0 %492, %v341
      %v494 = vpop.permute.xlu0 %493
      %496 = vset.pattern.permute.xlu0 3
      %497 = vperm.xlu0 %496, %v342
      %v498 = vpop.permute.xlu0 %497
      %500 = vset.pattern.permute.xlu0 3
      %501 = vperm.xlu0 %500, %v343
      %v502 = vpop.permute.xlu0 %501
      %504 = vset.pattern.permute.xlu0 3
      %505 = vperm.xlu0 %504, %v344
      %v506 = vpop.permute.xlu0 %505
      %v508 = vlaneseq
      %v509 = vshrl.u32 %v508, 7
      %v510 = vsub.s32 3, %v509
      %v511 = vrot.slane %v340, %v510
      %v512 = vlaneseq
      %v513 = vshrl.u32 %v512, 7
      %v514 = vsub.s32 7, %v513
      %v515 = vrot.slane %v340, %v514
      %v518 = vlaneseq
      %v519 = vshrl.u32 %v518, 7
      %v520 = vsub.s32 3, %v519
      %v521 = vrot.slane %v511, %v520
      %v522 = vlaneseq
      %v523 = vshrl.u32 %v522, 7
      %v524 = vsub.s32 3, %v523
      %v525 = vrot.slane %v515, %v524
      %v526 = vmul.f32 %v494, %v521
      %v527 = vmul.f32 %v494, %v525
      %v528 = vmul.f32 %v498, %v521
      %v529 = vmul.f32 %v498, %v525
      %v530 = vmul.f32 %v502, %v521
      %v531 = vmul.f32 %v502, %v525
      %v532 = vmul.f32 %v506, %v521
      %v533 = vmul.f32 %v506, %v525
      %v534 = vadd.f32 %v484, %v526
      %v535 = vadd.f32 %v485, %v527
      %v536 = vadd.f32 %v486, %v528
      %v537 = vadd.f32 %v487, %v529
      %v538 = vadd.f32 %v488, %v530
      %v539 = vadd.f32 %v489, %v531
      %v540 = vadd.f32 %v490, %v532
      %v541 = vadd.f32 %v491, %v533
      %v542 = vld [vmem:[%s4] sm:$0xff]
      %v543 = vld [vmem:[%s4 + $0x8] sm:$0xff]
      %v544 = vld [vmem:[%s4 + $0x10] sm:$0xff]
      %v545 = vld [vmem:[%s4 + $0x18] sm:$0xff]
      %547 = vset.pattern.permute.xlu0 0
      %548 = vperm.xlu0 %547, %v542
      %v549 = vpop.permute.xlu0 %548
      %552 = vset.pattern.permute.xlu0 0
      %553 = vperm.xlu0 %552, %v543
      %v554 = vpop.permute.xlu0 %553
      %557 = vset.pattern.permute.xlu0 0
      %558 = vperm.xlu0 %557, %v544
      %v559 = vpop.permute.xlu0 %558
      %562 = vset.pattern.permute.xlu0 0
      %563 = vperm.xlu0 %562, %v545
      %v564 = vpop.permute.xlu0 %563
      %v566 = vadd.f32 %v534, %v549
      %v567 = vadd.f32 %v535, %v549
      %v568 = vadd.f32 %v536, %v554
      %v569 = vadd.f32 %v537, %v554
      %v570 = vadd.f32 %v538, %v559
      %v571 = vadd.f32 %v539, %v559
      %v572 = vadd.f32 %v540, %v564
      %v573 = vadd.f32 %v541, %v564
      %v574 = vmax.f32 %v566, 0.0
      %v575 = vmax.f32 %v567, 0.0
      %v576 = vmax.f32 %v568, 0.0
      %v577 = vmax.f32 %v569, 0.0
      %v578 = vmax.f32 %v570, 0.0
      %v579 = vmax.f32 %v571, 0.0
      %v580 = vmax.f32 %v572, 0.0
      %v581 = vmax.f32 %v573, 0.0
      %v582 = vld [vmem:[%s328] sm:$0xff]
      %v583 = vld [vmem:[%s328 + $0x8] sm:$0xff]
      %v584 = vld [vmem:[%s328 + $0x10] sm:$0xff]
      %v585 = vld [vmem:[%s328 + $0x18] sm:$0xff]
      %v586 = vld [vmem:[%s328 + $0x20] sm:$0xff]
      %v587 = vld [vmem:[%s328 + $0x28] sm:$0xff]
      %v588 = vld [vmem:[%s328 + $0x30] sm:$0xff]
      %v589 = vld [vmem:[%s328 + $0x38] sm:$0xff]
      %v590 = vld [vmem:[%s328 + $0x40] sm:$0xff]
      %v591 = vld [vmem:[%s328 + $0x48] sm:$0xff]
      %v592 = vld [vmem:[%s328 + $0x50] sm:$0xff]
      %v593 = vld [vmem:[%s328 + $0x58] sm:$0xff]
      %v594 = vld [vmem:[%s328 + $0x60] sm:$0xff]
      %v595 = vld [vmem:[%s328 + $0x68] sm:$0xff]
      %v596 = vld [vmem:[%s328 + $0x70] sm:$0xff]
      %v597 = vld [vmem:[%s328 + $0x78] sm:$0xff]
      %v598 = vld [vmem:[%s328 + $0x80] sm:$0xff]
      %v599 = vld [vmem:[%s328 + $0x88] sm:$0xff]
      %v600 = vld [vmem:[%s328 + $0x90] sm:$0xff]
      %v601 = vld [vmem:[%s328 + $0x98] sm:$0xff]
      %v602 = vld [vmem:[%s328 + $0xa0] sm:$0xff]
      %v603 = vld [vmem:[%s328 + $0xa8] sm:$0xff]
      %v604 = vld [vmem:[%s328 + $0xb0] sm:$0xff]
      %v605 = vld [vmem:[%s328 + $0xb8] sm:$0xff]
      %v606 = vld [vmem:[%s328 + $0xc0] sm:$0xff]
      %v607 = vld [vmem:[%s328 + $0xc8] sm:$0xff]
      %v608 = vld [vmem:[%s328 + $0xd0] sm:$0xff]
      %v609 = vld [vmem:[%s328 + $0xd8] sm:$0xff]
      %v610 = vld [vmem:[%s328 + $0xe0] sm:$0xff]
      %v611 = vld [vmem:[%s328 + $0xe8] sm:$0xff]
      %v612 = vld [vmem:[%s328 + $0xf0] sm:$0xff]
      %v613 = vld [vmem:[%s328 + $0xf8] sm:$0xff]
      %v614 = vld [vmem:[%s2] sm:$0x3]
      %v615 = vld [vmem:[%s5] sm:$0xff]
      %v616 = vld [vmem:[%s5 + $0x8] sm:$0xff]
      %v617 = vld [vmem:[%s5 + $0x10] sm:$0xff]
      %v618 = vld [vmem:[%s5 + $0x18] sm:$0xff]
      %v619 = vld [vmem:[%s5 + $0x20] sm:$0xff]
      %v620 = vld [vmem:[%s5 + $0x28] sm:$0xff]
      %v621 = vld [vmem:[%s5 + $0x30] sm:$0xff]
      %v622 = vld [vmem:[%s5 + $0x38] sm:$0xff]
      %v631 = vunpack.c.l.b16 %v615
      %v632 = vunpack.c.h.b16 %v615
      %v633 = vunpack.c.l.b16 %v616
      %v634 = vunpack.c.h.b16 %v616
      %v635 = vunpack.c.l.b16 %v617
      %v636 = vunpack.c.h.b16 %v617
      %v637 = vunpack.c.l.b16 %v618
      %v638 = vunpack.c.h.b16 %v618
      %v639 = vunpack.c.l.b16 %v619
      %v640 = vunpack.c.h.b16 %v619
      %v641 = vunpack.c.l.b16 %v620
      %v642 = vunpack.c.h.b16 %v620
      %v643 = vunpack.c.l.b16 %v621
      %v644 = vunpack.c.h.b16 %v621
      %v645 = vunpack.c.l.b16 %v622
      %v646 = vunpack.c.h.b16 %v622
      %v647 = vpack.c.b16 %v633, %v631
      %v648 = vpack.c.b16 %v634, %v632
      %v649 = vpack.c.b16 %v637, %v635
      %v650 = vpack.c.b16 %v638, %v636
      %v651 = vpack.c.b16 %v641, %v639
      %v652 = vpack.c.b16 %v642, %v640
      %v653 = vpack.c.b16 %v645, %v643
      %v654 = vpack.c.b16 %v646, %v644
      %v695 = vunpack.c.l.b16 %v582
      %v696 = vunpack.c.h.b16 %v582
      %v697 = vunpack.c.l.b16 %v583
      %v698 = vunpack.c.h.b16 %v583
      %v699 = vunpack.c.l.b16 %v584
      %v700 = vunpack.c.h.b16 %v584
      %v701 = vunpack.c.l.b16 %v585
      %v702 = vunpack.c.h.b16 %v585
      %v703 = vunpack.c.l.b16 %v586
      %v704 = vunpack.c.h.b16 %v586
      %v705 = vunpack.c.l.b16 %v587
      %v706 = vunpack.c.h.b16 %v587
      %v707 = vunpack.c.l.b16 %v588
      %v708 = vunpack.c.h.b16 %v588
      %v709 = vunpack.c.l.b16 %v589
      %v710 = vunpack.c.h.b16 %v589
      %v711 = vunpack.c.l.b16 %v590
      %v712 = vunpack.c.h.b16 %v590
      %v713 = vunpack.c.l.b16 %v591
      %v714 = vunpack.c.h.b16 %v591
      %v715 = vunpack.c.l.b16 %v592
      %v716 = vunpack.c.h.b16 %v592
      %v717 = vunpack.c.l.b16 %v593
      %v718 = vunpack.c.h.b16 %v593
      %v719 = vunpack.c.l.b16 %v594
      %v720 = vunpack.c.h.b16 %v594
      %v721 = vunpack.c.l.b16 %v595
      %v722 = vunpack.c.h.b16 %v595
      %v723 = vunpack.c.l.b16 %v596
      %v724 = vunpack.c.h.b16 %v596
      %v725 = vunpack.c.l.b16 %v597
      %v726 = vunpack.c.h.b16 %v597
      %v727 = vunpack.c.l.b16 %v598
      %v728 = vunpack.c.h.b16 %v598
      %v729 = vunpack.c.l.b16 %v599
      %v730 = vunpack.c.h.b16 %v599
      %v731 = vunpack.c.l.b16 %v600
      %v732 = vunpack.c.h.b16 %v600
      %v733 = vunpack.c.l.b16 %v601
      %v734 = vunpack.c.h.b16 %v601
      %v735 = vunpack.c.l.b16 %v602
      %v736 = vunpack.c.h.b16 %v602
      %v737 = vunpack.c.l.b16 %v603
      %v738 = vunpack.c.h.b16 %v603
      %v739 = vunpack.c.l.b16 %v604
      %v740 = vunpack.c.h.b16 %v604
      %v741 = vunpack.c.l.b16 %v605
      %v742 = vunpack.c.h.b16 %v605
      %v743 = vunpack.c.l.b16 %v606
      %v744 = vunpack.c.h.b16 %v606
      %v745 = vunpack.c.l.b16 %v607
      %v746 = vunpack.c.h.b16 %v607
      %v747 = vunpack.c.l.b16 %v608
      %v748 = vunpack.c.h.b16 %v608
      %v749 = vunpack.c.l.b16 %v609
      %v750 = vunpack.c.h.b16 %v609
      %v751 = vunpack.c.l.b16 %v610
      %v752 = vunpack.c.h.b16 %v610
      %v753 = vunpack.c.l.b16 %v611
      %v754 = vunpack.c.h.b16 %v611
      %v755 = vunpack.c.l.b16 %v612
      %v756 = vunpack.c.h.b16 %v612
      %v757 = vunpack.c.l.b16 %v613
      %v758 = vunpack.c.h.b16 %v613
      %v759 = vpack.c.b16 %v697, %v695
      %v760 = vpack.c.b16 %v698, %v696
      %v761 = vpack.c.b16 %v701, %v699
      %v762 = vpack.c.b16 %v702, %v700
      %v763 = vpack.c.b16 %v705, %v703
      %v764 = vpack.c.b16 %v706, %v704
      %v765 = vpack.c.b16 %v709, %v707
      %v766 = vpack.c.b16 %v710, %v708
      %v767 = vpack.c.b16 %v713, %v711
      %v768 = vpack.c.b16 %v714, %v712
      %v769 = vpack.c.b16 %v717, %v715
      %v770 = vpack.c.b16 %v718, %v716
      %v771 = vpack.c.b16 %v721, %v719
      %v772 = vpack.c.b16 %v722, %v720
      %v773 = vpack.c.b16 %v725, %v723
      %v774 = vpack.c.b16 %v726, %v724
      %v775 = vpack.c.b16 %v729, %v727
      %v776 = vpack.c.b16 %v730, %v728
      %v777 = vpack.c.b16 %v733, %v731
      %v778 = vpack.c.b16 %v734, %v732
      %v779 = vpack.c.b16 %v737, %v735
      %v780 = vpack.c.b16 %v738, %v736
      %v781 = vpack.c.b16 %v741, %v739
      %v782 = vpack.c.b16 %v742, %v740
      %v783 = vpack.c.b16 %v745, %v743
      %v784 = vpack.c.b16 %v746, %v744
      %v785 = vpack.c.b16 %v749, %v747
      %v786 = vpack.c.b16 %v750, %v748
      %v787 = vpack.c.b16 %v753, %v751
      %v788 = vpack.c.b16 %v754, %v752
      %v789 = vpack.c.b16 %v757, %v755
      %v790 = vpack.c.b16 %v758, %v756
      %823 = vmatprep.subr.bf16.mxu0 %v760
      %824 = vmatpush1.bf16.msra.mxu0 %v759
      %825 = vmatprep.subr.bf16.mxu0 %v762
      %826 = vmatpush1.bf16.msra.mxu0 %v761
      %827 = vmatprep.subr.bf16.mxu0 %v764
      %828 = vmatpush1.bf16.msra.mxu0 %v763
      %829 = vmatprep.subr.bf16.mxu0 %v766
      %830 = vmatpush1.bf16.msra.mxu0 %v765
      %831 = vmatprep.subr.bf16.mxu0 %v768
      %832 = vmatpush1.bf16.msra.mxu0 %v767
      %833 = vmatprep.subr.bf16.mxu0 %v770
      %834 = vmatpush1.bf16.msra.mxu0 %v769
      %835 = vmatprep.subr.bf16.mxu0 %v772
      %836 = vmatpush1.bf16.msra.mxu0 %v771
      %837 = vmatprep.subr.bf16.mxu0 %v774
      %838 = vmatpush1.bf16.msra.mxu0 %v773
      %839 = vmatprep.subr.bf16.mxu0 %v776
      %840 = vmatpush1.bf16.msra.mxu0 %v775
      %841 = vmatprep.subr.bf16.mxu0 %v778
      %842 = vmatpush1.bf16.msra.mxu0 %v777
      %843 = vmatprep.subr.bf16.mxu0 %v780
      %844 = vmatpush1.bf16.msra.mxu0 %v779
      %845 = vmatprep.subr.bf16.mxu0 %v782
      %846 = vmatpush1.bf16.msra.mxu0 %v781
      %847 = vmatprep.subr.bf16.mxu0 %v784
      %848 = vmatpush1.bf16.msra.mxu0 %v783
      %849 = vmatprep.subr.bf16.mxu0 %v786
      %850 = vmatpush1.bf16.msra.mxu0 %v785
      %851 = vmatprep.subr.bf16.mxu0 %v788
      %852 = vmatpush1.bf16.msra.mxu0 %v787
      %853 = vmatprep.subr.bf16.mxu0 %v790
      %854 = vmatpush1.bf16.msra.mxu0 %v789
      %855 = vmatprep.mubr.bf16.mxu0 %v648
      %856 = vmatmul.mubr.bf16.gmra.mrb[0].mxu0 %v647
      %v857 = vpop.f32.mrb[0].mxu0
      %v858 = vadd.f32 0.0, %v857
      %v859 = vpop.f32.mrb[0].mxu0
      %v860 = vadd.f32 0.0, %v859
      %v861 = vpop.f32.mrb[0].mxu0
      %v862 = vadd.f32 0.0, %v861
      %v863 = vpop.f32.mrb[0].mxu0
      %v864 = vadd.f32 0.0, %v863
      %865 = vmatprep.mubr.bf16.mxu0 %v650
      %866 = vmatmul.mubr.bf16.gmra.mrb[0].mxu0 %v649
      %v867 = vpop.f32.mrb[0].mxu0
      %v868 = vadd.f32 0.0, %v867
      %v869 = vpop.f32.mrb[0].mxu0
      %v870 = vadd.f32 0.0, %v869
      %v871 = vpop.f32.mrb[0].mxu0
      %v872 = vadd.f32 0.0, %v871
      %v873 = vpop.f32.mrb[0].mxu0
      %v874 = vadd.f32 0.0, %v873
      %875 = vmatprep.mubr.bf16.mxu0 %v652
      %876 = vmatmul.mubr.bf16.gmra.mrb[0].mxu0 %v651
      %v877 = vpop.f32.mrb[0].mxu0
      %v878 = vadd.f32 0.0, %v877
      %v879 = vpop.f32.mrb[0].mxu0
      %v880 = vadd.f32 0.0, %v879
      %v881 = vpop.f32.mrb[0].mxu0
      %v882 = vadd.f32 0.0, %v881
      %v883 = vpop.f32.mrb[0].mxu0
      %v884 = vadd.f32 0.0, %v883
      %885 = vmatprep.mubr.bf16.mxu0 %v654
      %886 = vmatmul.mubr.bf16.gmra.mrb[0].mxu0 %v653
      %v887 = vpop.f32.mrb[0].mxu0
      %v888 = vadd.f32 0.0, %v887
      %v889 = vpop.f32.mrb[0].mxu0
      %v890 = vadd.f32 0.0, %v889
      %v891 = vpop.f32.mrb[0].mxu0
      %v892 = vadd.f32 0.0, %v891
      %v893 = vpop.f32.mrb[0].mxu0
      %v894 = vadd.f32 0.0, %v893
      %895 = vdwg.mxu0
      %912 = vrot.lane.b32.xlu0 %v858, 17
      %v913 = vpop.permute.xlu0 %912
      %914 = vrot.lane.b32.xlu0 %v860, 17
      %v915 = vpop.permute.xlu0 %914
      %916 = vrot.lane.b32.xlu0 %v862, 17
      %v917 = vpop.permute.xlu0 %916
      %918 = vrot.lane.b32.xlu0 %v864, 17
      %v919 = vpop.permute.xlu0 %918
      %920 = vrot.lane.b32.xlu0 %v868, 17
      %v921 = vpop.permute.xlu0 %920
      %922 = vrot.lane.b32.xlu0 %v870, 17
      %v923 = vpop.permute.xlu0 %922
      %924 = vrot.lane.b32.xlu0 %v872, 17
      %v925 = vpop.permute.xlu0 %924
      %926 = vrot.lane.b32.xlu0 %v874, 17
      %v927 = vpop.permute.xlu0 %926
      %928 = vrot.lane.b32.xlu0 %v878, 17
      %v929 = vpop.permute.xlu0 %928
      %930 = vrot.lane.b32.xlu0 %v880, 17
      %v931 = vpop.permute.xlu0 %930
      %932 = vrot.lane.b32.xlu0 %v882, 17
      %v933 = vpop.permute.xlu0 %932
      %934 = vrot.lane.b32.xlu0 %v884, 17
      %v935 = vpop.permute.xlu0 %934
      %936 = vrot.lane.b32.xlu0 %v888, 17
      %v937 = vpop.permute.xlu0 %936
      %938 = vrot.lane.b32.xlu0 %v890, 17
      %v939 = vpop.permute.xlu0 %938
      %940 = vrot.lane.b32.xlu0 %v892, 17
      %v941 = vpop.permute.xlu0 %940
      %942 = vrot.lane.b32.xlu0 %v894, 17
      %v943 = vpop.permute.xlu0 %942
      %vm944 = vcmask 138240
      %v945 = vsel %vm944, %v913, %v915
      %v946 = vsel %vm944, %v917, %v919
      %v947 = vsel %vm944, %v921, %v923
      %v948 = vsel %vm944, %v925, %v927
      %v949 = vsel %vm944, %v929, %v931
      %v950 = vsel %vm944, %v933, %v935
      %v951 = vsel %vm944, %v937, %v939
      %v952 = vsel %vm944, %v941, %v943
      %v969 = vsel %vm944, 0.0, %v913
      %v970 = vsel %vm944, 0.0, %v917
      %v971 = vsel %vm944, 0.0, %v921
      %v972 = vsel %vm944, 0.0, %v925
      %v973 = vsel %vm944, 0.0, %v929
      %v974 = vsel %vm944, 0.0, %v933
      %v975 = vsel %vm944, 0.0, %v937
      %v976 = vsel %vm944, 0.0, %v941
      %vm977 = vcmp.ge.s32.totalorder %v614, 1
      %v978 = vsel %vm977, 1, 0
      %v979 = vlaneseq
      %v980 = vshrl.u32 %v979, 7
      %v981 = vsub.s32 0, %v980
      %v982 = vrot.slane %v978, %v981
      %v983 = vlaneseq
      %v984 = vshrl.u32 %v983, 7
      %v985 = vsub.s32 1, %v984
      %v986 = vrot.slane %v978, %v985
      %vm987 = vcmp.eq.s32.totalorder %v982, 1
      %vm988 = vcmp.eq.s32.totalorder %v986, 1
      %v989 = vsel %vm987, %v969, 0.0
      %v990 = vsel %vm988, %v945, 0.0
      %v991 = vsel %vm987, %v970, 0.0
      %v992 = vsel %vm988, %v946, 0.0
      %v993 = vsel %vm987, %v971, 0.0
      %v994 = vsel %vm988, %v947, 0.0
      %v995 = vsel %vm987, %v972, 0.0
      %v996 = vsel %vm988, %v948, 0.0
      %v997 = vsel %vm987, %v973, 0.0
      %v998 = vsel %vm988, %v949, 0.0
      %v999 = vsel %vm987, %v974, 0.0
      %v1000 = vsel %vm988, %v950, 0.0
      %v1001 = vsel %vm987, %v975, 0.0
      %v1002 = vsel %vm988, %v951, 0.0
      %v1003 = vsel %vm987, %v976, 0.0
      %v1004 = vsel %vm988, %v952, 0.0
      %v1005 = vadd.f32 %v989, 0.0
      %v1006 = vadd.f32 %v990, 0.0
      %v1007 = vadd.f32 %v991, 0.0
      %v1008 = vadd.f32 %v992, 0.0
      %v1009 = vadd.f32 %v993, 0.0
      %v1010 = vadd.f32 %v994, 0.0
      %v1011 = vadd.f32 %v995, 0.0
      %v1012 = vadd.f32 %v996, 0.0
      %v1013 = vadd.f32 %v997, 0.0
      %v1014 = vadd.f32 %v998, 0.0
      %v1015 = vadd.f32 %v999, 0.0
      %v1016 = vadd.f32 %v1000, 0.0
      %v1017 = vadd.f32 %v1001, 0.0
      %v1018 = vadd.f32 %v1002, 0.0
      %v1019 = vadd.f32 %v1003, 0.0
      %v1020 = vadd.f32 %v1004, 0.0
      %s1021 = scalar_lea.vmem %s5, 64
      %v1022 = vld [vmem:[%s1021] sm:$0xff]
      %v1023 = vld [vmem:[%s1021 + $0x8] sm:$0xff]
      %v1024 = vld [vmem:[%s1021 + $0x10] sm:$0xff]
      %v1025 = vld [vmem:[%s1021 + $0x18] sm:$0xff]
      %v1026 = vld [vmem:[%s1021 + $0x20] sm:$0xff]
      %v1027 = vld [vmem:[%s1021 + $0x28] sm:$0xff]
      %v1028 = vld [vmem:[%s1021 + $0x30] sm:$0xff]
      %v1029 = vld [vmem:[%s1021 + $0x38] sm:$0xff]
      %v1038 = vunpack.c.l.b16 %v1022
      %v1039 = vunpack.c.h.b16 %v1022
      %v1040 = vunpack.c.l.b16 %v1023
      %v1041 = vunpack.c.h.b16 %v1023
      %v1042 = vunpack.c.l.b16 %v1024
      %v1043 = vunpack.c.h.b16 %v1024
      %v1044 = vunpack.c.l.b16 %v1025
      %v1045 = vunpack.c.h.b16 %v1025
      %v1046 = vunpack.c.l.b16 %v1026
      %v1047 = vunpack.c.h.b16 %v1026
      %v1048 = vunpack.c.l.b16 %v1027
      %v1049 = vunpack.c.h.b16 %v1027
      %v1050 = vunpack.c.l.b16 %v1028
      %v1051 = vunpack.c.h.b16 %v1028
      %v1052 = vunpack.c.l.b16 %v1029
      %v1053 = vunpack.c.h.b16 %v1029
      %v1054 = vpack.c.b16 %v1040, %v1038
      %v1055 = vpack.c.b16 %v1041, %v1039
      %v1056 = vpack.c.b16 %v1044, %v1042
      %v1057 = vpack.c.b16 %v1045, %v1043
      %v1058 = vpack.c.b16 %v1048, %v1046
      %v1059 = vpack.c.b16 %v1049, %v1047
      %v1060 = vpack.c.b16 %v1052, %v1050
      %v1061 = vpack.c.b16 %v1053, %v1051
      %1070 = vmatprep.subr.bf16.mxu0 %v760
      %1071 = vmatpush1.bf16.msra.mxu0 %v759
      %1072 = vmatprep.subr.bf16.mxu0 %v762
      %1073 = vmatpush1.bf16.msra.mxu0 %v761
      %1074 = vmatprep.subr.bf16.mxu0 %v764
      %1075 = vmatpush1.bf16.msra.mxu0 %v763
      %1076 = vmatprep.subr.bf16.mxu0 %v766
      %1077 = vmatpush1.bf16.msra.mxu0 %v765
      %1078 = vmatprep.subr.bf16.mxu0 %v768
      %1079 = vmatpush1.bf16.msra.mxu0 %v767
      %1080 = vmatprep.subr.bf16.mxu0 %v770
      %1081 = vmatpush1.bf16.msra.mxu0 %v769
      %1082 = vmatprep.subr.bf16.mxu0 %v772
      %1083 = vmatpush1.bf16.msra.mxu0 %v771
      %1084 = vmatprep.subr.bf16.mxu0 %v774
      %1085 = vmatpush1.bf16.msra.mxu0 %v773
      %1086 = vmatprep.subr.bf16.mxu0 %v776
      %1087 = vmatpush1.bf16.msra.mxu0 %v775
      %1088 = vmatprep.subr.bf16.mxu0 %v778
      %1089 = vmatpush1.bf16.msra.mxu0 %v777
      %1090 = vmatprep.subr.bf16.mxu0 %v780
      %1091 = vmatpush1.bf16.msra.mxu0 %v779
      %1092 = vmatprep.subr.bf16.mxu0 %v782
      %1093 = vmatpush1.bf16.msra.mxu0 %v781
      %1094 = vmatprep.subr.bf16.mxu0 %v784
      %1095 = vmatpush1.bf16.msra.mxu0 %v783
      %1096 = vmatprep.subr.bf16.mxu0 %v786
      %1097 = vmatpush1.bf16.msra.mxu0 %v785
      %1098 = vmatprep.subr.bf16.mxu0 %v788
      %1099 = vmatpush1.bf16.msra.mxu0 %v787
      %1100 = vmatprep.subr.bf16.mxu0 %v790
      %1101 = vmatpush1.bf16.msra.mxu0 %v789
      %1102 = vmatprep.mubr.bf16.mxu0 %v1055
      %1103 = vmatmul.mubr.bf16.gmra.mrb[0].mxu0 %v1054
      %v1104 = vpop.f32.mrb[0].mxu0
      %v1105 = vadd.f32 0.0, %v1104
      %v1106 = vpop.f32.mrb[0].mxu0
      %v1107 = vadd.f32 0.0, %v1106
      %v1108 = vpop.f32.mrb[0].mxu0
      %v1109 = vadd.f32 0.0, %v1108
      %v1110 = vpop.f32.mrb[0].mxu0
      %v1111 = vadd.f32 0.0, %v1110
      %1112 = vmatprep.mubr.bf16.mxu0 %v1057
      %1113 = vmatmul.mubr.bf16.gmra.mrb[0].mxu0 %v1056
      %v1114 = vpop.f32.mrb[0].mxu0
      %v1115 = vadd.f32 0.0, %v1114
      %v1116 = vpop.f32.mrb[0].mxu0
      %v1117 = vadd.f32 0.0, %v1116
      %v1118 = vpop.f32.mrb[0].mxu0
      %v1119 = vadd.f32 0.0, %v1118
      %v1120 = vpop.f32.mrb[0].mxu0
      %v1121 = vadd.f32 0.0, %v1120
      %1122 = vmatprep.mubr.bf16.mxu0 %v1059
      %1123 = vmatmul.mubr.bf16.gmra.mrb[0].mxu0 %v1058
      %v1124 = vpop.f32.mrb[0].mxu0
      %v1125 = vadd.f32 0.0, %v1124
      %v1126 = vpop.f32.mrb[0].mxu0
      %v1127 = vadd.f32 0.0, %v1126
      %v1128 = vpop.f32.mrb[0].mxu0
      %v1129 = vadd.f32 0.0, %v1128
      %v1130 = vpop.f32.mrb[0].mxu0
      %v1131 = vadd.f32 0.0, %v1130
      %1132 = vmatprep.mubr.bf16.mxu0 %v1061
      %1133 = vmatmul.mubr.bf16.gmra.mrb[0].mxu0 %v1060
      %v1134 = vpop.f32.mrb[0].mxu0
      %v1135 = vadd.f32 0.0, %v1134
      %v1136 = vpop.f32.mrb[0].mxu0
      %v1137 = vadd.f32 0.0, %v1136
      %v1138 = vpop.f32.mrb[0].mxu0
      %v1139 = vadd.f32 0.0, %v1138
      %v1140 = vpop.f32.mrb[0].mxu0
      %v1141 = vadd.f32 0.0, %v1140
      %1142 = vdwg.mxu0
      %1159 = vrot.lane.b32.xlu0 %v1105, 16
      %v1160 = vpop.permute.xlu0 %1159
      %1161 = vrot.lane.b32.xlu0 %v1107, 16
      %v1162 = vpop.permute.xlu0 %1161
      %1163 = vrot.lane.b32.xlu0 %v1109, 16
      %v1164 = vpop.permute.xlu0 %1163
      %1165 = vrot.lane.b32.xlu0 %v1111, 16
      %v1166 = vpop.permute.xlu0 %1165
      %1167 = vrot.lane.b32.xlu0 %v1115, 16
      %v1168 = vpop.permute.xlu0 %1167
      %1169 = vrot.lane.b32.xlu0 %v1117, 16
      %v1170 = vpop.permute.xlu0 %1169
      %1171 = vrot.lane.b32.xlu0 %v1119, 16
      %v1172 = vpop.permute.xlu0 %1171
      %1173 = vrot.lane.b32.xlu0 %v1121, 16
      %v1174 = vpop.permute.xlu0 %1173
      %1175 = vrot.lane.b32.xlu0 %v1125, 16
      %v1176 = vpop.permute.xlu0 %1175
      %1177 = vrot.lane.b32.xlu0 %v1127, 16
      %v1178 = vpop.permute.xlu0 %1177
      %1179 = vrot.lane.b32.xlu0 %v1129, 16
      %v1180 = vpop.permute.xlu0 %1179
      %1181 = vrot.lane.b32.xlu0 %v1131, 16
      %v1182 = vpop.permute.xlu0 %1181
      %1183 = vrot.lane.b32.xlu0 %v1135, 16
      %v1184 = vpop.permute.xlu0 %1183
      %1185 = vrot.lane.b32.xlu0 %v1137, 16
      %v1186 = vpop.permute.xlu0 %1185
      %1187 = vrot.lane.b32.xlu0 %v1139, 16
      %v1188 = vpop.permute.xlu0 %1187
      %1189 = vrot.lane.b32.xlu0 %v1141, 16
      %v1190 = vpop.permute.xlu0 %1189
      %vm1191 = vcmask 130048
      %v1192 = vsel %vm1191, %v1160, %v1162
      %v1193 = vsel %vm1191, %v1164, %v1166
      %v1194 = vsel %vm1191, %v1168, %v1170
      %v1195 = vsel %vm1191, %v1172, %v1174
      %v1196 = vsel %vm1191, %v1176, %v1178
      %v1197 = vsel %vm1191, %v1180, %v1182
      %v1198 = vsel %vm1191, %v1184, %v1186
      %v1199 = vsel %vm1191, %v1188, %v1190
      %v1216 = vsel %vm1191, 0.0, %v1160
      %v1217 = vsel %vm1191, 0.0, %v1164
      %v1218 = vsel %vm1191, 0.0, %v1168
      %v1219 = vsel %vm1191, 0.0, %v1172
      %v1220 = vsel %vm1191, 0.0, %v1176
      %v1221 = vsel %vm1191, 0.0, %v1180
      %v1222 = vsel %vm1191, 0.0, %v1184
      %v1223 = vsel %vm1191, 0.0, %v1188
      %v1224 = vadd.f32 %v1005, %v1216
      %v1225 = vadd.f32 %v1006, %v1192
      %v1226 = vadd.f32 %v1007, %v1217
      %v1227 = vadd.f32 %v1008, %v1193
      %v1228 = vadd.f32 %v1009, %v1218
      %v1229 = vadd.f32 %v1010, %v1194
      %v1230 = vadd.f32 %v1011, %v1219
      %v1231 = vadd.f32 %v1012, %v1195
      %v1232 = vadd.f32 %v1013, %v1220
      %v1233 = vadd.f32 %v1014, %v1196
      %v1234 = vadd.f32 %v1015, %v1221
      %v1235 = vadd.f32 %v1016, %v1197
      %v1236 = vadd.f32 %v1017, %v1222
      %v1237 = vadd.f32 %v1018, %v1198
      %v1238 = vadd.f32 %v1019, %v1223
      %v1239 = vadd.f32 %v1020, %v1199
      %s1240 = scalar_lea.vmem %s5, 128
      %v1241 = vld [vmem:[%s1240] sm:$0xff]
      %v1242 = vld [vmem:[%s1240 + $0x8] sm:$0xff]
      %v1243 = vld [vmem:[%s1240 + $0x10] sm:$0xff]
      %v1244 = vld [vmem:[%s1240 + $0x18] sm:$0xff]
      %v1245 = vld [vmem:[%s1240 + $0x20] sm:$0xff]
      %v1246 = vld [vmem:[%s1240 + $0x28] sm:$0xff]
      %v1247 = vld [vmem:[%s1240 + $0x30] sm:$0xff]
      %v1248 = vld [vmem:[%s1240 + $0x38] sm:$0xff]
      %v1257 = vunpack.c.l.b16 %v1241
      %v1258 = vunpack.c.h.b16 %v1241
      %v1259 = vunpack.c.l.b16 %v1242
      %v1260 = vunpack.c.h.b16 %v1242
      %v1261 = vunpack.c.l.b16 %v1243
      %v1262 = vunpack.c.h.b16 %v1243
      %v1263 = vunpack.c.l.b16 %v1244
      %v1264 = vunpack.c.h.b16 %v1244
      %v1265 = vunpack.c.l.b16 %v1245
      %v1266 = vunpack.c.h.b16 %v1245
      %v1267 = vunpack.c.l.b16 %v1246
      %v1268 = vunpack.c.h.b16 %v1246
      %v1269 = vunpack.c.l.b16 %v1247
      %v1270 = vunpack.c.h.b16 %v1247
      %v1271 = vunpack.c.l.b16 %v1248
      %v1272 = vunpack.c.h.b16 %v1248
      %v1273 = vpack.c.b16 %v1259, %v1257
      %v1274 = vpack.c.b16 %v1260, %v1258
      %v1275 = vpack.c.b16 %v1263, %v1261
      %v1276 = vpack.c.b16 %v1264, %v1262
      %v1277 = vpack.c.b16 %v1267, %v1265
      %v1278 = vpack.c.b16 %v1268, %v1266
      %v1279 = vpack.c.b16 %v1271, %v1269
      %v1280 = vpack.c.b16 %v1272, %v1270
      %1289 = vmatprep.subr.bf16.mxu0 %v760
      %1290 = vmatpush1.bf16.msra.mxu0 %v759
      %1291 = vmatprep.subr.bf16.mxu0 %v762
      %1292 = vmatpush1.bf16.msra.mxu0 %v761
      %1293 = vmatprep.subr.bf16.mxu0 %v764
      %1294 = vmatpush1.bf16.msra.mxu0 %v763
      %1295 = vmatprep.subr.bf16.mxu0 %v766
      %1296 = vmatpush1.bf16.msra.mxu0 %v765
      %1297 = vmatprep.subr.bf16.mxu0 %v768
      %1298 = vmatpush1.bf16.msra.mxu0 %v767
      %1299 = vmatprep.subr.bf16.mxu0 %v770
      %1300 = vmatpush1.bf16.msra.mxu0 %v769
      %1301 = vmatprep.subr.bf16.mxu0 %v772
      %1302 = vmatpush1.bf16.msra.mxu0 %v771
      %1303 = vmatprep.subr.bf16.mxu0 %v774
      %1304 = vmatpush1.bf16.msra.mxu0 %v773
      %1305 = vmatprep.subr.bf16.mxu0 %v776
      %1306 = vmatpush1.bf16.msra.mxu0 %v775
      %1307 = vmatprep.subr.bf16.mxu0 %v778
      %1308 = vmatpush1.bf16.msra.mxu0 %v777
      %1309 = vmatprep.subr.bf16.mxu0 %v780
      %1310 = vmatpush1.bf16.msra.mxu0 %v779
      %1311 = vmatprep.subr.bf16.mxu0 %v782
      %1312 = vmatpush1.bf16.msra.mxu0 %v781
      %1313 = vmatprep.subr.bf16.mxu0 %v784
      %1314 = vmatpush1.bf16.msra.mxu0 %v783
      %1315 = vmatprep.subr.bf16.mxu0 %v786
      %1316 = vmatpush1.bf16.msra.mxu0 %v785
      %1317 = vmatprep.subr.bf16.mxu0 %v788
      %1318 = vmatpush1.bf16.msra.mxu0 %v787
      %1319 = vmatprep.subr.bf16.mxu0 %v790
      %1320 = vmatpush1.bf16.msra.mxu0 %v789
      %1321 = vmatprep.mubr.bf16.mxu0 %v1274
      %1322 = vmatmul.mubr.bf16.gmra.mrb[0].mxu0 %v1273
      %v1323 = vpop.f32.mrb[0].mxu0
      %v1324 = vadd.f32 0.0, %v1323
      %v1325 = vpop.f32.mrb[0].mxu0
      %v1326 = vadd.f32 0.0, %v1325
      %v1327 = vpop.f32.mrb[0].mxu0
      %v1328 = vadd.f32 0.0, %v1327
      %v1329 = vpop.f32.mrb[0].mxu0
      %v1330 = vadd.f32 0.0, %v1329
      %1331 = vmatprep.mubr.bf16.mxu0 %v1276
      %1332 = vmatmul.mubr.bf16.gmra.mrb[0].mxu0 %v1275
      %v1333 = vpop.f32.mrb[0].mxu0
      %v1334 = vadd.f32 0.0, %v1333
      %v1335 = vpop.f32.mrb[0].mxu0
      %v1336 = vadd.f32 0.0, %v1335
      %v1337 = vpop.f32.mrb[0].mxu0
      %v1338 = vadd.f32 0.0, %v1337
      %v1339 = vpop.f32.mrb[0].mxu0
      %v1340 = vadd.f32 0.0, %v1339
      %1341 = vmatprep.mubr.bf16.mxu0 %v1278
      %1342 = vmatmul.mubr.bf16.gmra.mrb[0].mxu0 %v1277
      %v1343 = vpop.f32.mrb[0].mxu0
      %v1344 = vadd.f32 0.0, %v1343
      %v1345 = vpop.f32.mrb[0].mxu0
      %v1346 = vadd.f32 0.0, %v1345
      %v1347 = vpop.f32.mrb[0].mxu0
      %v1348 = vadd.f32 0.0, %v1347
      %v1349 = vpop.f32.mrb[0].mxu0
      %v1350 = vadd.f32 0.0, %v1349
      %1351 = vmatprep.mubr.bf16.mxu0 %v1280
      %1352 = vmatmul.mubr.bf16.gmra.mrb[0].mxu0 %v1279
      %v1353 = vpop.f32.mrb[0].mxu0
      %v1354 = vadd.f32 0.0, %v1353
      %v1355 = vpop.f32.mrb[0].mxu0
      %v1356 = vadd.f32 0.0, %v1355
      %v1357 = vpop.f32.mrb[0].mxu0
      %v1358 = vadd.f32 0.0, %v1357
      %v1359 = vpop.f32.mrb[0].mxu0
      %v1360 = vadd.f32 0.0, %v1359
      %1361 = vdwg.mxu0
      %1378 = vrot.lane.b32.xlu0 %v1324, 15
      %v1379 = vpop.permute.xlu0 %1378
      %1380 = vrot.lane.b32.xlu0 %v1326, 15
      %v1381 = vpop.permute.xlu0 %1380
      %1382 = vrot.lane.b32.xlu0 %v1328, 15
      %v1383 = vpop.permute.xlu0 %1382
      %1384 = vrot.lane.b32.xlu0 %v1330, 15
      %v1385 = vpop.permute.xlu0 %1384
      %1386 = vrot.lane.b32.xlu0 %v1334, 15
      %v1387 = vpop.permute.xlu0 %1386
      %1388 = vrot.lane.b32.xlu0 %v1336, 15
      %v1389 = vpop.permute.xlu0 %1388
      %1390 = vrot.lane.b32.xlu0 %v1338, 15
      %v1391 = vpop.permute.xlu0 %1390
      %1392 = vrot.lane.b32.xlu0 %v1340, 15
      %v1393 = vpop.permute.xlu0 %1392
      %1394 = vrot.lane.b32.xlu0 %v1344, 15
      %v1395 = vpop.permute.xlu0 %1394
      %1396 = vrot.lane.b32.xlu0 %v1346, 15
      %v1397 = vpop.permute.xlu0 %1396
      %1398 = vrot.lane.b32.xlu0 %v1348, 15
      %v1399 = vpop.permute.xlu0 %1398
      %1400 = vrot.lane.b32.xlu0 %v1350, 15
      %v1401 = vpop.permute.xlu0 %1400
      %1402 = vrot.lane.b32.xlu0 %v1354, 15
      %v1403 = vpop.permute.xlu0 %1402
      %1404 = vrot.lane.b32.xlu0 %v1356, 15
      %v1405 = vpop.permute.xlu0 %1404
      %1406 = vrot.lane.b32.xlu0 %v1358, 15
      %v1407 = vpop.permute.xlu0 %1406
      %1408 = vrot.lane.b32.xlu0 %v1360, 15
      %v1409 = vpop.permute.xlu0 %1408
      %vm1410 = vcmask 121856
      %v1411 = vsel %vm1410, %v1379, %v1381
      %v1412 = vsel %vm1410, %v1383, %v1385
      %v1413 = vsel %vm1410, %v1387, %v1389
      %v1414 = vsel %vm1410, %v1391, %v1393
      %v1415 = vsel %vm1410, %v1395, %v1397
      %v1416 = vsel %vm1410, %v1399, %v1401
      %v1417 = vsel %vm1410, %v1403, %v1405
      %v1418 = vsel %vm1410, %v1407, %v1409
      %v1435 = vsel %vm1410, 0.0, %v1379
      %v1436 = vsel %vm1410, 0.0, %v1383
      %v1437 = vsel %vm1410, 0.0, %v1387
      %v1438 = vsel %vm1410, 0.0, %v1391
      %v1439 = vsel %vm1410, 0.0, %v1395
      %v1440 = vsel %vm1410, 0.0, %v1399
      %v1441 = vsel %vm1410, 0.0, %v1403
      %v1442 = vsel %vm1410, 0.0, %v1407
      %vm1443 = vcmp.le.s32.totalorder %v614, 14
      %v1444 = vsel %vm1443, 1, 0
      %v1445 = vlaneseq
      %v1446 = vshrl.u32 %v1445, 7
      %v1447 = vsub.s32 0, %v1446
      %v1448 = vrot.slane %v1444, %v1447
      %v1449 = vlaneseq
      %v1450 = vshrl.u32 %v1449, 7
      %v1451 = vsub.s32 1, %v1450
      %v1452 = vrot.slane %v1444, %v1451
      %vm1453 = vcmp.eq.s32.totalorder %v1448, 1
      %vm1454 = vcmp.eq.s32.totalorder %v1452, 1
      %v1455 = vsel %vm1453, %v1435, 0.0
      %v1456 = vsel %vm1454, %v1411, 0.0
      %v1457 = vsel %vm1453, %v1436, 0.0
      %v1458 = vsel %vm1454, %v1412, 0.0
      %v1459 = vsel %vm1453, %v1437, 0.0
      %v1460 = vsel %vm1454, %v1413, 0.0
      %v1461 = vsel %vm1453, %v1438, 0.0
      %v1462 = vsel %vm1454, %v1414, 0.0
      %v1463 = vsel %vm1453, %v1439, 0.0
      %v1464 = vsel %vm1454, %v1415, 0.0
      %v1465 = vsel %vm1453, %v1440, 0.0
      %v1466 = vsel %vm1454, %v1416, 0.0
      %v1467 = vsel %vm1453, %v1441, 0.0
      %v1468 = vsel %vm1454, %v1417, 0.0
      %v1469 = vsel %vm1453, %v1442, 0.0
      %v1470 = vsel %vm1454, %v1418, 0.0
      %v1471 = vadd.f32 %v1224, %v1455
      %v1472 = vadd.f32 %v1225, %v1456
      %v1473 = vadd.f32 %v1226, %v1457
      %v1474 = vadd.f32 %v1227, %v1458
      %v1475 = vadd.f32 %v1228, %v1459
      %v1476 = vadd.f32 %v1229, %v1460
      %v1477 = vadd.f32 %v1230, %v1461
      %v1478 = vadd.f32 %v1231, %v1462
      %v1479 = vadd.f32 %v1232, %v1463
      %v1480 = vadd.f32 %v1233, %v1464
      %v1481 = vadd.f32 %v1234, %v1465
      %v1482 = vadd.f32 %v1235, %v1466
      %v1483 = vadd.f32 %v1236, %v1467
      %v1484 = vadd.f32 %v1237, %v1468
      %v1485 = vadd.f32 %v1238, %v1469
      %v1486 = vadd.f32 %v1239, %v1470
      %s1487 = scalar_lea.vmem %s5, 192
      %v1488 = vld [vmem:[%s1487] sm:$0xff]
      %v1489 = vld [vmem:[%s1487 + $0x8] sm:$0xff]
      %v1490 = vld [vmem:[%s1487 + $0x10] sm:$0xff]
      %v1491 = vld [vmem:[%s1487 + $0x18] sm:$0xff]
      %v1492 = vld [vmem:[%s1487 + $0x20] sm:$0xff]
      %v1493 = vld [vmem:[%s1487 + $0x28] sm:$0xff]
      %v1494 = vld [vmem:[%s1487 + $0x30] sm:$0xff]
      %v1495 = vld [vmem:[%s1487 + $0x38] sm:$0xff]
      %v1504 = vunpack.c.l.b16 %v1488
      %v1505 = vunpack.c.h.b16 %v1488
      %v1506 = vunpack.c.l.b16 %v1489
      %v1507 = vunpack.c.h.b16 %v1489
      %v1508 = vunpack.c.l.b16 %v1490
      %v1509 = vunpack.c.h.b16 %v1490
      %v1510 = vunpack.c.l.b16 %v1491
      %v1511 = vunpack.c.h.b16 %v1491
      %v1512 = vunpack.c.l.b16 %v1492
      %v1513 = vunpack.c.h.b16 %v1492
      %v1514 = vunpack.c.l.b16 %v1493
      %v1515 = vunpack.c.h.b16 %v1493
      %v1516 = vunpack.c.l.b16 %v1494
      %v1517 = vunpack.c.h.b16 %v1494
      %v1518 = vunpack.c.l.b16 %v1495
      %v1519 = vunpack.c.h.b16 %v1495
      %v1520 = vpack.c.b16 %v1506, %v1504
      %v1521 = vpack.c.b16 %v1507, %v1505
      %v1522 = vpack.c.b16 %v1510, %v1508
      %v1523 = vpack.c.b16 %v1511, %v1509
      %v1524 = vpack.c.b16 %v1514, %v1512
      %v1525 = vpack.c.b16 %v1515, %v1513
      %v1526 = vpack.c.b16 %v1518, %v1516
      %v1527 = vpack.c.b16 %v1519, %v1517
      %1536 = vmatprep.subr.bf16.mxu0 %v760
      %1537 = vmatpush1.bf16.msra.mxu0 %v759
      %1538 = vmatprep.subr.bf16.mxu0 %v762
      %1539 = vmatpush1.bf16.msra.mxu0 %v761
      %1540 = vmatprep.subr.bf16.mxu0 %v764
      %1541 = vmatpush1.bf16.msra.mxu0 %v763
      %1542 = vmatprep.subr.bf16.mxu0 %v766
      %1543 = vmatpush1.bf16.msra.mxu0 %v765
      %1544 = vmatprep.subr.bf16.mxu0 %v768
      %1545 = vmatpush1.bf16.msra.mxu0 %v767
      %1546 = vmatprep.subr.bf16.mxu0 %v770
      %1547 = vmatpush1.bf16.msra.mxu0 %v769
      %1548 = vmatprep.subr.bf16.mxu0 %v772
      %1549 = vmatpush1.bf16.msra.mxu0 %v771
      %1550 = vmatprep.subr.bf16.mxu0 %v774
      %1551 = vmatpush1.bf16.msra.mxu0 %v773
      %1552 = vmatprep.subr.bf16.mxu0 %v776
      %1553 = vmatpush1.bf16.msra.mxu0 %v775
      %1554 = vmatprep.subr.bf16.mxu0 %v778
      %1555 = vmatpush1.bf16.msra.mxu0 %v777
      %1556 = vmatprep.subr.bf16.mxu0 %v780
      %1557 = vmatpush1.bf16.msra.mxu0 %v779
      %1558 = vmatprep.subr.bf16.mxu0 %v782
      %1559 = vmatpush1.bf16.msra.mxu0 %v781
      %1560 = vmatprep.subr.bf16.mxu0 %v784
      %1561 = vmatpush1.bf16.msra.mxu0 %v783
      %1562 = vmatprep.subr.bf16.mxu0 %v786
      %1563 = vmatpush1.bf16.msra.mxu0 %v785
      %1564 = vmatprep.subr.bf16.mxu0 %v788
      %1565 = vmatpush1.bf16.msra.mxu0 %v787
      %1566 = vmatprep.subr.bf16.mxu0 %v790
      %1567 = vmatpush1.bf16.msra.mxu0 %v789
      %1568 = vmatprep.mubr.bf16.mxu0 %v1521
      %1569 = vmatmul.mubr.bf16.gmra.mrb[0].mxu0 %v1520
      %v1570 = vpop.f32.mrb[0].mxu0
      %v1571 = vadd.f32 0.0, %v1570
      %v1572 = vpop.f32.mrb[0].mxu0
      %v1573 = vadd.f32 0.0, %v1572
      %v1574 = vpop.f32.mrb[0].mxu0
      %v1575 = vadd.f32 0.0, %v1574
      %v1576 = vpop.f32.mrb[0].mxu0
      %v1577 = vadd.f32 0.0, %v1576
      %1578 = vmatprep.mubr.bf16.mxu0 %v1523
      %1579 = vmatmul.mubr.bf16.gmra.mrb[0].mxu0 %v1522
      %v1580 = vpop.f32.mrb[0].mxu0
      %v1581 = vadd.f32 0.0, %v1580
      %v1582 = vpop.f32.mrb[0].mxu0
      %v1583 = vadd.f32 0.0, %v1582
      %v1584 = vpop.f32.mrb[0].mxu0
      %v1585 = vadd.f32 0.0, %v1584
      %v1586 = vpop.f32.mrb[0].mxu0
      %v1587 = vadd.f32 0.0, %v1586
      %1588 = vmatprep.mubr.bf16.mxu0 %v1525
      %1589 = vmatmul.mubr.bf16.gmra.mrb[0].mxu0 %v1524
      %v1590 = vpop.f32.mrb[0].mxu0
      %v1591 = vadd.f32 0.0, %v1590
      %v1592 = vpop.f32.mrb[0].mxu0
      %v1593 = vadd.f32 0.0, %v1592
      %v1594 = vpop.f32.mrb[0].mxu0
      %v1595 = vadd.f32 0.0, %v1594
      %v1596 = vpop.f32.mrb[0].mxu0
      %v1597 = vadd.f32 0.0, %v1596
      %1598 = vmatprep.mubr.bf16.mxu0 %v1527
      %1599 = vmatmul.mubr.bf16.gmra.mrb[0].mxu0 %v1526
      %v1600 = vpop.f32.mrb[0].mxu0
      %v1601 = vadd.f32 0.0, %v1600
      %v1602 = vpop.f32.mrb[0].mxu0
      %v1603 = vadd.f32 0.0, %v1602
      %v1604 = vpop.f32.mrb[0].mxu0
      %v1605 = vadd.f32 0.0, %v1604
      %v1606 = vpop.f32.mrb[0].mxu0
      %v1607 = vadd.f32 0.0, %v1606
      %1608 = vdwg.mxu0
      %1625 = vrot.lane.b32.xlu0 %v1571, 1
      %v1626 = vpop.permute.xlu0 %1625
      %1627 = vrot.lane.b32.xlu0 %v1573, 1
      %v1628 = vpop.permute.xlu0 %1627
      %1629 = vrot.lane.b32.xlu0 %v1575, 1
      %v1630 = vpop.permute.xlu0 %1629
      %1631 = vrot.lane.b32.xlu0 %v1577, 1
      %v1632 = vpop.permute.xlu0 %1631
      %1633 = vrot.lane.b32.xlu0 %v1581, 1
      %v1634 = vpop.permute.xlu0 %1633
      %1635 = vrot.lane.b32.xlu0 %v1583, 1
      %v1636 = vpop.permute.xlu0 %1635
      %1637 = vrot.lane.b32.xlu0 %v1585, 1
      %v1638 = vpop.permute.xlu0 %1637
      %1639 = vrot.lane.b32.xlu0 %v1587, 1
      %v1640 = vpop.permute.xlu0 %1639
      %1641 = vrot.lane.b32.xlu0 %v1591, 1
      %v1642 = vpop.permute.xlu0 %1641
      %1643 = vrot.lane.b32.xlu0 %v1593, 1
      %v1644 = vpop.permute.xlu0 %1643
      %1645 = vrot.lane.b32.xlu0 %v1595, 1
      %v1646 = vpop.permute.xlu0 %1645
      %1647 = vrot.lane.b32.xlu0 %v1597, 1
      %v1648 = vpop.permute.xlu0 %1647
      %1649 = vrot.lane.b32.xlu0 %v1601, 1
      %v1650 = vpop.permute.xlu0 %1649
      %1651 = vrot.lane.b32.xlu0 %v1603, 1
      %v1652 = vpop.permute.xlu0 %1651
      %1653 = vrot.lane.b32.xlu0 %v1605, 1
      %v1654 = vpop.permute.xlu0 %1653
      %1655 = vrot.lane.b32.xlu0 %v1607, 1
      %v1656 = vpop.permute.xlu0 %1655
      %vm1657 = vcmask 7168
      %v1658 = vsel %vm1657, %v1626, %v1628
      %v1659 = vsel %vm1657, %v1630, %v1632
      %v1660 = vsel %vm1657, %v1634, %v1636
      %v1661 = vsel %vm1657, %v1638, %v1640
      %v1662 = vsel %vm1657, %v1642, %v1644
      %v1663 = vsel %vm1657, %v1646, %v1648
      %v1664 = vsel %vm1657, %v1650, %v1652
      %v1665 = vsel %vm1657, %v1654, %v1656
      %v1682 = vsel %vm1657, 0.0, %v1626
      %v1683 = vsel %vm1657, 0.0, %v1630
      %v1684 = vsel %vm1657, 0.0, %v1634
      %v1685 = vsel %vm1657, 0.0, %v1638
      %v1686 = vsel %vm1657, 0.0, %v1642
      %v1687 = vsel %vm1657, 0.0, %v1646
      %v1688 = vsel %vm1657, 0.0, %v1650
      %v1689 = vsel %vm1657, 0.0, %v1654
      %v1690 = vsel %vm987, %v1682, 0.0
      %v1691 = vsel %vm988, %v1658, 0.0
      %v1692 = vsel %vm987, %v1683, 0.0
      %v1693 = vsel %vm988, %v1659, 0.0
      %v1694 = vsel %vm987, %v1684, 0.0
      %v1695 = vsel %vm988, %v1660, 0.0
      %v1696 = vsel %vm987, %v1685, 0.0
      %v1697 = vsel %vm988, %v1661, 0.0
      %v1698 = vsel %vm987, %v1686, 0.0
      %v1699 = vsel %vm988, %v1662, 0.0
      %v1700 = vsel %vm987, %v1687, 0.0
      %v1701 = vsel %vm988, %v1663, 0.0
      %v1702 = vsel %vm987, %v1688, 0.0
      %v1703 = vsel %vm988, %v1664, 0.0
      %v1704 = vsel %vm987, %v1689, 0.0
      %v1705 = vsel %vm988, %v1665, 0.0
      %v1706 = vadd.f32 %v1471, %v1690
      %v1707 = vadd.f32 %v1472, %v1691
      %v1708 = vadd.f32 %v1473, %v1692
      %v1709 = vadd.f32 %v1474, %v1693
      %v1710 = vadd.f32 %v1475, %v1694
      %v1711 = vadd.f32 %v1476, %v1695
      %v1712 = vadd.f32 %v1477, %v1696
      %v1713 = vadd.f32 %v1478, %v1697
      %v1714 = vadd.f32 %v1479, %v1698
      %v1715 = vadd.f32 %v1480, %v1699
      %v1716 = vadd.f32 %v1481, %v1700
      %v1717 = vadd.f32 %v1482, %v1701
      %v1718 = vadd.f32 %v1483, %v1702
      %v1719 = vadd.f32 %v1484, %v1703
      %v1720 = vadd.f32 %v1485, %v1704
      %v1721 = vadd.f32 %v1486, %v1705
      %s1722 = scalar_lea.vmem %s5, 256
      %v1723 = vld [vmem:[%s1722] sm:$0xff]
      %v1724 = vld [vmem:[%s1722 + $0x8] sm:$0xff]
      %v1725 = vld [vmem:[%s1722 + $0x10] sm:$0xff]
      %v1726 = vld [vmem:[%s1722 + $0x18] sm:$0xff]
      %v1727 = vld [vmem:[%s1722 + $0x20] sm:$0xff]
      %v1728 = vld [vmem:[%s1722 + $0x28] sm:$0xff]
      %v1729 = vld [vmem:[%s1722 + $0x30] sm:$0xff]
      %v1730 = vld [vmem:[%s1722 + $0x38] sm:$0xff]
      %v1739 = vunpack.c.l.b16 %v1723
      %v1740 = vunpack.c.h.b16 %v1723
      %v1741 = vunpack.c.l.b16 %v1724
      %v1742 = vunpack.c.h.b16 %v1724
      %v1743 = vunpack.c.l.b16 %v1725
      %v1744 = vunpack.c.h.b16 %v1725
      %v1745 = vunpack.c.l.b16 %v1726
      %v1746 = vunpack.c.h.b16 %v1726
      %v1747 = vunpack.c.l.b16 %v1727
      %v1748 = vunpack.c.h.b16 %v1727
      %v1749 = vunpack.c.l.b16 %v1728
      %v1750 = vunpack.c.h.b16 %v1728
      %v1751 = vunpack.c.l.b16 %v1729
      %v1752 = vunpack.c.h.b16 %v1729
      %v1753 = vunpack.c.l.b16 %v1730
      %v1754 = vunpack.c.h.b16 %v1730
      %v1755 = vpack.c.b16 %v1741, %v1739
      %v1756 = vpack.c.b16 %v1742, %v1740
      %v1757 = vpack.c.b16 %v1745, %v1743
      %v1758 = vpack.c.b16 %v1746, %v1744
      %v1759 = vpack.c.b16 %v1749, %v1747
      %v1760 = vpack.c.b16 %v1750, %v1748
      %v1761 = vpack.c.b16 %v1753, %v1751
      %v1762 = vpack.c.b16 %v1754, %v1752
      %1771 = vmatprep.subr.bf16.mxu0 %v760
      %1772 = vmatpush1.bf16.msra.mxu0 %v759
      %1773 = vmatprep.subr.bf16.mxu0 %v762
      %1774 = vmatpush1.bf16.msra.mxu0 %v761
      %1775 = vmatprep.subr.bf16.mxu0 %v764
      %1776 = vmatpush1.bf16.msra.mxu0 %v763
      %1777 = vmatprep.subr.bf16.mxu0 %v766
      %1778 = vmatpush1.bf16.msra.mxu0 %v765
      %1779 = vmatprep.subr.bf16.mxu0 %v768
      %1780 = vmatpush1.bf16.msra.mxu0 %v767
      %1781 = vmatprep.subr.bf16.mxu0 %v770
      %1782 = vmatpush1.bf16.msra.mxu0 %v769
      %1783 = vmatprep.subr.bf16.mxu0 %v772
      %1784 = vmatpush1.bf16.msra.mxu0 %v771
      %1785 = vmatprep.subr.bf16.mxu0 %v774
      %1786 = vmatpush1.bf16.msra.mxu0 %v773
      %1787 = vmatprep.subr.bf16.mxu0 %v776
      %1788 = vmatpush1.bf16.msra.mxu0 %v775
      %1789 = vmatprep.subr.bf16.mxu0 %v778
      %1790 = vmatpush1.bf16.msra.mxu0 %v777
      %1791 = vmatprep.subr.bf16.mxu0 %v780
      %1792 = vmatpush1.bf16.msra.mxu0 %v779
      %1793 = vmatprep.subr.bf16.mxu0 %v782
      %1794 = vmatpush1.bf16.msra.mxu0 %v781
      %1795 = vmatprep.subr.bf16.mxu0 %v784
      %1796 = vmatpush1.bf16.msra.mxu0 %v783
      %1797 = vmatprep.subr.bf16.mxu0 %v786
      %1798 = vmatpush1.bf16.msra.mxu0 %v785
      %1799 = vmatprep.subr.bf16.mxu0 %v788
      %1800 = vmatpush1.bf16.msra.mxu0 %v787
      %1801 = vmatprep.subr.bf16.mxu0 %v790
      %1802 = vmatpush1.bf16.msra.mxu0 %v789
      %1803 = vmatprep.mubr.bf16.mxu0 %v1756
      %1804 = vmatmul.mubr.bf16.gmra.mrb[0].mxu0 %v1755
      %v1805 = vpop.f32.mrb[0].mxu0
      %v1806 = vadd.f32 0.0, %v1805
      %v1807 = vpop.f32.mrb[0].mxu0
      %v1808 = vadd.f32 0.0, %v1807
      %v1809 = vpop.f32.mrb[0].mxu0
      %v1810 = vadd.f32 0.0, %v1809
      %v1811 = vpop.f32.mrb[0].mxu0
      %v1812 = vadd.f32 0.0, %v1811
      %1813 = vmatprep.mubr.bf16.mxu0 %v1758
      %1814 = vmatmul.mubr.bf16.gmra.mrb[0].mxu0 %v1757
      %v1815 = vpop.f32.mrb[0].mxu0
      %v1816 = vadd.f32 0.0, %v1815
      %v1817 = vpop.f32.mrb[0].mxu0
      %v1818 = vadd.f32 0.0, %v1817
      %v1819 = vpop.f32.mrb[0].mxu0
      %v1820 = vadd.f32 0.0, %v1819
      %v1821 = vpop.f32.mrb[0].mxu0
      %v1822 = vadd.f32 0.0, %v1821
      %1823 = vmatprep.mubr.bf16.mxu0 %v1760
      %1824 = vmatmul.mubr.bf16.gmra.mrb[0].mxu0 %v1759
      %v1825 = vpop.f32.mrb[0].mxu0
      %v1826 = vadd.f32 0.0, %v1825
      %v1827 = vpop.f32.mrb[0].mxu0
      %v1828 = vadd.f32 0.0, %v1827
      %v1829 = vpop.f32.mrb[0].mxu0
      %v1830 = vadd.f32 0.0, %v1829
      %v1831 = vpop.f32.mrb[0].mxu0
      %v1832 = vadd.f32 0.0, %v1831
      %1833 = vmatprep.mubr.bf16.mxu0 %v1762
      %1834 = vmatmul.mubr.bf16.gmra.mrb[0].mxu0 %v1761
      %v1835 = vpop.f32.mrb[0].mxu0
      %v1836 = vadd.f32 0.0, %v1835
      %v1837 = vpop.f32.mrb[0].mxu0
      %v1838 = vadd.f32 0.0, %v1837
      %v1839 = vpop.f32.mrb[0].mxu0
      %v1840 = vadd.f32 0.0, %v1839
      %v1841 = vpop.f32.mrb[0].mxu0
      %v1842 = vadd.f32 0.0, %v1841
      %1843 = vdwg.mxu0
      %v1844 = vadd.f32 %v1706, %v1806
      %v1845 = vadd.f32 %v1707, %v1808
      %v1846 = vadd.f32 %v1708, %v1810
      %v1847 = vadd.f32 %v1709, %v1812
      %v1848 = vadd.f32 %v1710, %v1816
      %v1849 = vadd.f32 %v1711, %v1818
      %v1850 = vadd.f32 %v1712, %v1820
      %v1851 = vadd.f32 %v1713, %v1822
      %v1852 = vadd.f32 %v1714, %v1826
      %v1853 = vadd.f32 %v1715, %v1828
      %v1854 = vadd.f32 %v1716, %v1830
      %v1855 = vadd.f32 %v1717, %v1832
      %v1856 = vadd.f32 %v1718, %v1836
      %v1857 = vadd.f32 %v1719, %v1838
      %v1858 = vadd.f32 %v1720, %v1840
      %v1859 = vadd.f32 %v1721, %v1842
      %s1860 = scalar_lea.vmem %s5, 320
      %v1861 = vld [vmem:[%s1860] sm:$0xff]
      %v1862 = vld [vmem:[%s1860 + $0x8] sm:$0xff]
      %v1863 = vld [vmem:[%s1860 + $0x10] sm:$0xff]
      %v1864 = vld [vmem:[%s1860 + $0x18] sm:$0xff]
      %v1865 = vld [vmem:[%s1860 + $0x20] sm:$0xff]
      %v1866 = vld [vmem:[%s1860 + $0x28] sm:$0xff]
      %v1867 = vld [vmem:[%s1860 + $0x30] sm:$0xff]
      %v1868 = vld [vmem:[%s1860 + $0x38] sm:$0xff]
      %v1877 = vunpack.c.l.b16 %v1861
      %v1878 = vunpack.c.h.b16 %v1861
      %v1879 = vunpack.c.l.b16 %v1862
      %v1880 = vunpack.c.h.b16 %v1862
      %v1881 = vunpack.c.l.b16 %v1863
      %v1882 = vunpack.c.h.b16 %v1863
      %v1883 = vunpack.c.l.b16 %v1864
      %v1884 = vunpack.c.h.b16 %v1864
      %v1885 = vunpack.c.l.b16 %v1865
      %v1886 = vunpack.c.h.b16 %v1865
      %v1887 = vunpack.c.l.b16 %v1866
      %v1888 = vunpack.c.h.b16 %v1866
      %v1889 = vunpack.c.l.b16 %v1867
      %v1890 = vunpack.c.h.b16 %v1867
      %v1891 = vunpack.c.l.b16 %v1868
      %v1892 = vunpack.c.h.b16 %v1868
      %v1893 = vpack.c.b16 %v1879, %v1877
      %v1894 = vpack.c.b16 %v1880, %v1878
      %v1895 = vpack.c.b16 %v1883, %v1881
      %v1896 = vpack.c.b16 %v1884, %v1882
      %v1897 = vpack.c.b16 %v1887, %v1885
      %v1898 = vpack.c.b16 %v1888, %v1886
      %v1899 = vpack.c.b16 %v1891, %v1889
      %v1900 = vpack.c.b16 %v1892, %v1890
      %1909 = vmatprep.subr.bf16.mxu0 %v760
      %1910 = vmatpush1.bf16.msra.mxu0 %v759
      %1911 = vmatprep.subr.bf16.mxu0 %v762
      %1912 = vmatpush1.bf16.msra.mxu0 %v761
      %1913 = vmatprep.subr.bf16.mxu0 %v764
      %1914 = vmatpush1.bf16.msra.mxu0 %v763
      %1915 = vmatprep.subr.bf16.mxu0 %v766
      %1916 = vmatpush1.bf16.msra.mxu0 %v765
      %1917 = vmatprep.subr.bf16.mxu0 %v768
      %1918 = vmatpush1.bf16.msra.mxu0 %v767
      %1919 = vmatprep.subr.bf16.mxu0 %v770
      %1920 = vmatpush1.bf16.msra.mxu0 %v769
      %1921 = vmatprep.subr.bf16.mxu0 %v772
      %1922 = vmatpush1.bf16.msra.mxu0 %v771
      %1923 = vmatprep.subr.bf16.mxu0 %v774
      %1924 = vmatpush1.bf16.msra.mxu0 %v773
      %1925 = vmatprep.subr.bf16.mxu0 %v776
      %1926 = vmatpush1.bf16.msra.mxu0 %v775
      %1927 = vmatprep.subr.bf16.mxu0 %v778
      %1928 = vmatpush1.bf16.msra.mxu0 %v777
      %1929 = vmatprep.subr.bf16.mxu0 %v780
      %1930 = vmatpush1.bf16.msra.mxu0 %v779
      %1931 = vmatprep.subr.bf16.mxu0 %v782
      %1932 = vmatpush1.bf16.msra.mxu0 %v781
      %1933 = vmatprep.subr.bf16.mxu0 %v784
      %1934 = vmatpush1.bf16.msra.mxu0 %v783
      %1935 = vmatprep.subr.bf16.mxu0 %v786
      %1936 = vmatpush1.bf16.msra.mxu0 %v785
      %1937 = vmatprep.subr.bf16.mxu0 %v788
      %1938 = vmatpush1.bf16.msra.mxu0 %v787
      %1939 = vmatprep.subr.bf16.mxu0 %v790
      %1940 = vmatpush1.bf16.msra.mxu0 %v789
      %1941 = vmatprep.mubr.bf16.mxu0 %v1894
      %1942 = vmatmul.mubr.bf16.gmra.mrb[0].mxu0 %v1893
      %v1943 = vpop.f32.mrb[0].mxu0
      %v1944 = vadd.f32 0.0, %v1943
      %v1945 = vpop.f32.mrb[0].mxu0
      %v1946 = vadd.f32 0.0, %v1945
      %v1947 = vpop.f32.mrb[0].mxu0
      %v1948 = vadd.f32 0.0, %v1947
      %v1949 = vpop.f32.mrb[0].mxu0
      %v1950 = vadd.f32 0.0, %v1949
      %1951 = vmatprep.mubr.bf16.mxu0 %v1896
      %1952 = vmatmul.mubr.bf16.gmra.mrb[0].mxu0 %v1895
      %v1953 = vpop.f32.mrb[0].mxu0
      %v1954 = vadd.f32 0.0, %v1953
      %v1955 = vpop.f32.mrb[0].mxu0
      %v1956 = vadd.f32 0.0, %v1955
      %v1957 = vpop.f32.mrb[0].mxu0
      %v1958 = vadd.f32 0.0, %v1957
      %v1959 = vpop.f32.mrb[0].mxu0
      %v1960 = vadd.f32 0.0, %v1959
      %1961 = vmatprep.mubr.bf16.mxu0 %v1898
      %1962 = vmatmul.mubr.bf16.gmra.mrb[0].mxu0 %v1897
      %v1963 = vpop.f32.mrb[0].mxu0
      %v1964 = vadd.f32 0.0, %v1963
      %v1965 = vpop.f32.mrb[0].mxu0
      %v1966 = vadd.f32 0.0, %v1965
      %v1967 = vpop.f32.mrb[0].mxu0
      %v1968 = vadd.f32 0.0, %v1967
      %v1969 = vpop.f32.mrb[0].mxu0
      %v1970 = vadd.f32 0.0, %v1969
      %1971 = vmatprep.mubr.bf16.mxu0 %v1900
      %1972 = vmatmul.mubr.bf16.gmra.mrb[0].mxu0 %v1899
      %v1973 = vpop.f32.mrb[0].mxu0
      %v1974 = vadd.f32 0.0, %v1973
      %v1975 = vpop.f32.mrb[0].mxu0
      %v1976 = vadd.f32 0.0, %v1975
      %v1977 = vpop.f32.mrb[0].mxu0
      %v1978 = vadd.f32 0.0, %v1977
      %v1979 = vpop.f32.mrb[0].mxu0
      %v1980 = vadd.f32 0.0, %v1979
      %1981 = vdwg.mxu0
      %1998 = vrot.lane.b32.xlu0 %v1944, 127
      %v1999 = vpop.permute.xlu0 %1998
      %2000 = vrot.lane.b32.xlu0 %v1946, 127
      %v2001 = vpop.permute.xlu0 %2000
      %2002 = vrot.lane.b32.xlu0 %v1948, 127
      %v2003 = vpop.permute.xlu0 %2002
      %2004 = vrot.lane.b32.xlu0 %v1950, 127
      %v2005 = vpop.permute.xlu0 %2004
      %2006 = vrot.lane.b32.xlu0 %v1954, 127
      %v2007 = vpop.permute.xlu0 %2006
      %2008 = vrot.lane.b32.xlu0 %v1956, 127
      %v2009 = vpop.permute.xlu0 %2008
      %2010 = vrot.lane.b32.xlu0 %v1958, 127
      %v2011 = vpop.permute.xlu0 %2010
      %2012 = vrot.lane.b32.xlu0 %v1960, 127
      %v2013 = vpop.permute.xlu0 %2012
      %2014 = vrot.lane.b32.xlu0 %v1964, 127
      %v2015 = vpop.permute.xlu0 %2014
      %2016 = vrot.lane.b32.xlu0 %v1966, 127
      %v2017 = vpop.permute.xlu0 %2016
      %2018 = vrot.lane.b32.xlu0 %v1968, 127
      %v2019 = vpop.permute.xlu0 %2018
      %2020 = vrot.lane.b32.xlu0 %v1970, 127
      %v2021 = vpop.permute.xlu0 %2020
      %2022 = vrot.lane.b32.xlu0 %v1974, 127
      %v2023 = vpop.permute.xlu0 %2022
      %2024 = vrot.lane.b32.xlu0 %v1976, 127
      %v2025 = vpop.permute.xlu0 %2024
      %2026 = vrot.lane.b32.xlu0 %v1978, 127
      %v2027 = vpop.permute.xlu0 %2026
      %2028 = vrot.lane.b32.xlu0 %v1980, 127
      %v2029 = vpop.permute.xlu0 %2028
      %vm2030 = vcmask 1039360
      %v2031 = vsel %vm2030, %v1999, %v2001
      %v2032 = vsel %vm2030, %v2003, %v2005
      %v2033 = vsel %vm2030, %v2007, %v2009
      %v2034 = vsel %vm2030, %v2011, %v2013
      %v2035 = vsel %vm2030, %v2015, %v2017
      %v2036 = vsel %vm2030, %v2019, %v2021
      %v2037 = vsel %vm2030, %v2023, %v2025
      %v2038 = vsel %vm2030, %v2027, %v2029
      %v2055 = vsel %vm2030, %v2001, 0.0
      %v2056 = vsel %vm2030, %v2005, 0.0
      %v2057 = vsel %vm2030, %v2009, 0.0
      %v2058 = vsel %vm2030, %v2013, 0.0
      %v2059 = vsel %vm2030, %v2017, 0.0
      %v2060 = vsel %vm2030, %v2021, 0.0
      %v2061 = vsel %vm2030, %v2025, 0.0
      %v2062 = vsel %vm2030, %v2029, 0.0
      %v2063 = vsel %vm1453, %v2031, 0.0
      %v2064 = vsel %vm1454, %v2055, 0.0
      %v2065 = vsel %vm1453, %v2032, 0.0
      %v2066 = vsel %vm1454, %v2056, 0.0
      %v2067 = vsel %vm1453, %v2033, 0.0
      %v2068 = vsel %vm1454, %v2057, 0.0
      %v2069 = vsel %vm1453, %v2034, 0.0
      %v2070 = vsel %vm1454, %v2058, 0.0
      %v2071 = vsel %vm1453, %v2035, 0.0
      %v2072 = vsel %vm1454, %v2059, 0.0
      %v2073 = vsel %vm1453, %v2036, 0.0
      %v2074 = vsel %vm1454, %v2060, 0.0
      %v2075 = vsel %vm1453, %v2037, 0.0
      %v2076 = vsel %vm1454, %v2061, 0.0
      %v2077 = vsel %vm1453, %v2038, 0.0
      %v2078 = vsel %vm1454, %v2062, 0.0
      %v2079 = vadd.f32 %v1844, %v2063
      %v2080 = vadd.f32 %v1845, %v2064
      %v2081 = vadd.f32 %v1846, %v2065
      %v2082 = vadd.f32 %v1847, %v2066
      %v2083 = vadd.f32 %v1848, %v2067
      %v2084 = vadd.f32 %v1849, %v2068
      %v2085 = vadd.f32 %v1850, %v2069
      %v2086 = vadd.f32 %v1851, %v2070
      %v2087 = vadd.f32 %v1852, %v2071
      %v2088 = vadd.f32 %v1853, %v2072
      %v2089 = vadd.f32 %v1854, %v2073
      %v2090 = vadd.f32 %v1855, %v2074
      %v2091 = vadd.f32 %v1856, %v2075
      %v2092 = vadd.f32 %v1857, %v2076
      %v2093 = vadd.f32 %v1858, %v2077
      %v2094 = vadd.f32 %v1859, %v2078
      %s2095 = scalar_lea.vmem %s5, 384
      %v2096 = vld [vmem:[%s2095] sm:$0xff]
      %v2097 = vld [vmem:[%s2095 + $0x8] sm:$0xff]
      %v2098 = vld [vmem:[%s2095 + $0x10] sm:$0xff]
      %v2099 = vld [vmem:[%s2095 + $0x18] sm:$0xff]
      %v2100 = vld [vmem:[%s2095 + $0x20] sm:$0xff]
      %v2101 = vld [vmem:[%s2095 + $0x28] sm:$0xff]
      %v2102 = vld [vmem:[%s2095 + $0x30] sm:$0xff]
      %v2103 = vld [vmem:[%s2095 + $0x38] sm:$0xff]
      %v2112 = vunpack.c.l.b16 %v2096
      %v2113 = vunpack.c.h.b16 %v2096
      %v2114 = vunpack.c.l.b16 %v2097
      %v2115 = vunpack.c.h.b16 %v2097
      %v2116 = vunpack.c.l.b16 %v2098
      %v2117 = vunpack.c.h.b16 %v2098
      %v2118 = vunpack.c.l.b16 %v2099
      %v2119 = vunpack.c.h.b16 %v2099
      %v2120 = vunpack.c.l.b16 %v2100
      %v2121 = vunpack.c.h.b16 %v2100
      %v2122 = vunpack.c.l.b16 %v2101
      %v2123 = vunpack.c.h.b16 %v2101
      %v2124 = vunpack.c.l.b16 %v2102
      %v2125 = vunpack.c.h.b16 %v2102
      %v2126 = vunpack.c.l.b16 %v2103
      %v2127 = vunpack.c.h.b16 %v2103
      %v2128 = vpack.c.b16 %v2114, %v2112
      %v2129 = vpack.c.b16 %v2115, %v2113
      %v2130 = vpack.c.b16 %v2118, %v2116
      %v2131 = vpack.c.b16 %v2119, %v2117
      %v2132 = vpack.c.b16 %v2122, %v2120
      %v2133 = vpack.c.b16 %v2123, %v2121
      %v2134 = vpack.c.b16 %v2126, %v2124
      %v2135 = vpack.c.b16 %v2127, %v2125
      %2144 = vmatprep.subr.bf16.mxu0 %v760
      %2145 = vmatpush1.bf16.msra.mxu0 %v759
      %2146 = vmatprep.subr.bf16.mxu0 %v762
      %2147 = vmatpush1.bf16.msra.mxu0 %v761
      %2148 = vmatprep.subr.bf16.mxu0 %v764
      %2149 = vmatpush1.bf16.msra.mxu0 %v763
      %2150 = vmatprep.subr.bf16.mxu0 %v766
      %2151 = vmatpush1.bf16.msra.mxu0 %v765
      %2152 = vmatprep.subr.bf16.mxu0 %v768
      %2153 = vmatpush1.bf16.msra.mxu0 %v767
      %2154 = vmatprep.subr.bf16.mxu0 %v770
      %2155 = vmatpush1.bf16.msra.mxu0 %v769
      %2156 = vmatprep.subr.bf16.mxu0 %v772
      %2157 = vmatpush1.bf16.msra.mxu0 %v771
      %2158 = vmatprep.subr.bf16.mxu0 %v774
      %2159 = vmatpush1.bf16.msra.mxu0 %v773
      %2160 = vmatprep.subr.bf16.mxu0 %v776
      %2161 = vmatpush1.bf16.msra.mxu0 %v775
      %2162 = vmatprep.subr.bf16.mxu0 %v778
      %2163 = vmatpush1.bf16.msra.mxu0 %v777
      %2164 = vmatprep.subr.bf16.mxu0 %v780
      %2165 = vmatpush1.bf16.msra.mxu0 %v779
      %2166 = vmatprep.subr.bf16.mxu0 %v782
      %2167 = vmatpush1.bf16.msra.mxu0 %v781
      %2168 = vmatprep.subr.bf16.mxu0 %v784
      %2169 = vmatpush1.bf16.msra.mxu0 %v783
      %2170 = vmatprep.subr.bf16.mxu0 %v786
      %2171 = vmatpush1.bf16.msra.mxu0 %v785
      %2172 = vmatprep.subr.bf16.mxu0 %v788
      %2173 = vmatpush1.bf16.msra.mxu0 %v787
      %2174 = vmatprep.subr.bf16.mxu0 %v790
      %2175 = vmatpush1.bf16.msra.mxu0 %v789
      %2176 = vmatprep.mubr.bf16.mxu0 %v2129
      %2177 = vmatmul.mubr.bf16.gmra.mrb[0].mxu0 %v2128
      %v2178 = vpop.f32.mrb[0].mxu0
      %v2179 = vadd.f32 0.0, %v2178
      %v2180 = vpop.f32.mrb[0].mxu0
      %v2181 = vadd.f32 0.0, %v2180
      %v2182 = vpop.f32.mrb[0].mxu0
      %v2183 = vadd.f32 0.0, %v2182
      %v2184 = vpop.f32.mrb[0].mxu0
      %v2185 = vadd.f32 0.0, %v2184
      %2186 = vmatprep.mubr.bf16.mxu0 %v2131
      %2187 = vmatmul.mubr.bf16.gmra.mrb[0].mxu0 %v2130
      %v2188 = vpop.f32.mrb[0].mxu0
      %v2189 = vadd.f32 0.0, %v2188
      %v2190 = vpop.f32.mrb[0].mxu0
      %v2191 = vadd.f32 0.0, %v2190
      %v2192 = vpop.f32.mrb[0].mxu0
      %v2193 = vadd.f32 0.0, %v2192
      %v2194 = vpop.f32.mrb[0].mxu0
      %v2195 = vadd.f32 0.0, %v2194
      %2196 = vmatprep.mubr.bf16.mxu0 %v2133
      %2197 = vmatmul.mubr.bf16.gmra.mrb[0].mxu0 %v2132
      %v2198 = vpop.f32.mrb[0].mxu0
      %v2199 = vadd.f32 0.0, %v2198
      %v2200 = vpop.f32.mrb[0].mxu0
      %v2201 = vadd.f32 0.0, %v2200
      %v2202 = vpop.f32.mrb[0].mxu0
      %v2203 = vadd.f32 0.0, %v2202
      %v2204 = vpop.f32.mrb[0].mxu0
      %v2205 = vadd.f32 0.0, %v2204
      %2206 = vmatprep.mubr.bf16.mxu0 %v2135
      %2207 = vmatmul.mubr.bf16.gmra.mrb[0].mxu0 %v2134
      %v2208 = vpop.f32.mrb[0].mxu0
      %v2209 = vadd.f32 0.0, %v2208
      %v2210 = vpop.f32.mrb[0].mxu0
      %v2211 = vadd.f32 0.0, %v2210
      %v2212 = vpop.f32.mrb[0].mxu0
      %v2213 = vadd.f32 0.0, %v2212
      %v2214 = vpop.f32.mrb[0].mxu0
      %v2215 = vadd.f32 0.0, %v2214
      %2216 = vdwg.mxu0
      %2233 = vrot.lane.b32.xlu0 %v2179, 113
      %v2234 = vpop.permute.xlu0 %2233
      %2235 = vrot.lane.b32.xlu0 %v2181, 113
      %v2236 = vpop.permute.xlu0 %2235
      %2237 = vrot.lane.b32.xlu0 %v2183, 113
      %v2238 = vpop.permute.xlu0 %2237
      %2239 = vrot.lane.b32.xlu0 %v2185, 113
      %v2240 = vpop.permute.xlu0 %2239
      %2241 = vrot.lane.b32.xlu0 %v2189, 113
      %v2242 = vpop.permute.xlu0 %2241
      %2243 = vrot.lane.b32.xlu0 %v2191, 113
      %v2244 = vpop.permute.xlu0 %2243
      %2245 = vrot.lane.b32.xlu0 %v2193, 113
      %v2246 = vpop.permute.xlu0 %2245
      %2247 = vrot.lane.b32.xlu0 %v2195, 113
      %v2248 = vpop.permute.xlu0 %2247
      %2249 = vrot.lane.b32.xlu0 %v2199, 113
      %v2250 = vpop.permute.xlu0 %2249
      %2251 = vrot.lane.b32.xlu0 %v2201, 113
      %v2252 = vpop.permute.xlu0 %2251
      %2253 = vrot.lane.b32.xlu0 %v2203, 113
      %v2254 = vpop.permute.xlu0 %2253
      %2255 = vrot.lane.b32.xlu0 %v2205, 113
      %v2256 = vpop.permute.xlu0 %2255
      %2257 = vrot.lane.b32.xlu0 %v2209, 113
      %v2258 = vpop.permute.xlu0 %2257
      %2259 = vrot.lane.b32.xlu0 %v2211, 113
      %v2260 = vpop.permute.xlu0 %2259
      %2261 = vrot.lane.b32.xlu0 %v2213, 113
      %v2262 = vpop.permute.xlu0 %2261
      %2263 = vrot.lane.b32.xlu0 %v2215, 113
      %v2264 = vpop.permute.xlu0 %2263
      %vm2265 = vcmask 924672
      %v2266 = vsel %vm2265, %v2234, %v2236
      %v2267 = vsel %vm2265, %v2238, %v2240
      %v2268 = vsel %vm2265, %v2242, %v2244
      %v2269 = vsel %vm2265, %v2246, %v2248
      %v2270 = vsel %vm2265, %v2250, %v2252
      %v2271 = vsel %vm2265, %v2254, %v2256
      %v2272 = vsel %vm2265, %v2258, %v2260
      %v2273 = vsel %vm2265, %v2262, %v2264
      %v2290 = vsel %vm2265, %v2236, 0.0
      %v2291 = vsel %vm2265, %v2240, 0.0
      %v2292 = vsel %vm2265, %v2244, 0.0
      %v2293 = vsel %vm2265, %v2248, 0.0
      %v2294 = vsel %vm2265, %v2252, 0.0
      %v2295 = vsel %vm2265, %v2256, 0.0
      %v2296 = vsel %vm2265, %v2260, 0.0
      %v2297 = vsel %vm2265, %v2264, 0.0
      %v2298 = vsel %vm987, %v2266, 0.0
      %v2299 = vsel %vm988, %v2290, 0.0
      %v2300 = vsel %vm987, %v2267, 0.0
      %v2301 = vsel %vm988, %v2291, 0.0
      %v2302 = vsel %vm987, %v2268, 0.0
      %v2303 = vsel %vm988, %v2292, 0.0
      %v2304 = vsel %vm987, %v2269, 0.0
      %v2305 = vsel %vm988, %v2293, 0.0
      %v2306 = vsel %vm987, %v2270, 0.0
      %v2307 = vsel %vm988, %v2294, 0.0
      %v2308 = vsel %vm987, %v2271, 0.0
      %v2309 = vsel %vm988, %v2295, 0.0
      %v2310 = vsel %vm987, %v2272, 0.0
      %v2311 = vsel %vm988, %v2296, 0.0
      %v2312 = vsel %vm987, %v2273, 0.0
      %v2313 = vsel %vm988, %v2297, 0.0
      %v2314 = vadd.f32 %v2079, %v2298
      %v2315 = vadd.f32 %v2080, %v2299
      %v2316 = vadd.f32 %v2081, %v2300
      %v2317 = vadd.f32 %v2082, %v2301
      %v2318 = vadd.f32 %v2083, %v2302
      %v2319 = vadd.f32 %v2084, %v2303
      %v2320 = vadd.f32 %v2085, %v2304
      %v2321 = vadd.f32 %v2086, %v2305
      %v2322 = vadd.f32 %v2087, %v2306
      %v2323 = vadd.f32 %v2088, %v2307
      %v2324 = vadd.f32 %v2089, %v2308
      %v2325 = vadd.f32 %v2090, %v2309
      %v2326 = vadd.f32 %v2091, %v2310
      %v2327 = vadd.f32 %v2092, %v2311
      %v2328 = vadd.f32 %v2093, %v2312
      %v2329 = vadd.f32 %v2094, %v2313
      %s2330 = scalar_lea.vmem %s5, 448
      %v2331 = vld [vmem:[%s2330] sm:$0xff]
      %v2332 = vld [vmem:[%s2330 + $0x8] sm:$0xff]
      %v2333 = vld [vmem:[%s2330 + $0x10] sm:$0xff]
      %v2334 = vld [vmem:[%s2330 + $0x18] sm:$0xff]
      %v2335 = vld [vmem:[%s2330 + $0x20] sm:$0xff]
      %v2336 = vld [vmem:[%s2330 + $0x28] sm:$0xff]
      %v2337 = vld [vmem:[%s2330 + $0x30] sm:$0xff]
      %v2338 = vld [vmem:[%s2330 + $0x38] sm:$0xff]
      %v2347 = vunpack.c.l.b16 %v2331
      %v2348 = vunpack.c.h.b16 %v2331
      %v2349 = vunpack.c.l.b16 %v2332
      %v2350 = vunpack.c.h.b16 %v2332
      %v2351 = vunpack.c.l.b16 %v2333
      %v2352 = vunpack.c.h.b16 %v2333
      %v2353 = vunpack.c.l.b16 %v2334
      %v2354 = vunpack.c.h.b16 %v2334
      %v2355 = vunpack.c.l.b16 %v2335
      %v2356 = vunpack.c.h.b16 %v2335
      %v2357 = vunpack.c.l.b16 %v2336
      %v2358 = vunpack.c.h.b16 %v2336
      %v2359 = vunpack.c.l.b16 %v2337
      %v2360 = vunpack.c.h.b16 %v2337
      %v2361 = vunpack.c.l.b16 %v2338
      %v2362 = vunpack.c.h.b16 %v2338
      %v2363 = vpack.c.b16 %v2349, %v2347
      %v2364 = vpack.c.b16 %v2350, %v2348
      %v2365 = vpack.c.b16 %v2353, %v2351
      %v2366 = vpack.c.b16 %v2354, %v2352
      %v2367 = vpack.c.b16 %v2357, %v2355
      %v2368 = vpack.c.b16 %v2358, %v2356
      %v2369 = vpack.c.b16 %v2361, %v2359
      %v2370 = vpack.c.b16 %v2362, %v2360
      %2379 = vmatprep.subr.bf16.mxu0 %v760
      %2380 = vmatpush1.bf16.msra.mxu0 %v759
      %2381 = vmatprep.subr.bf16.mxu0 %v762
      %2382 = vmatpush1.bf16.msra.mxu0 %v761
      %2383 = vmatprep.subr.bf16.mxu0 %v764
      %2384 = vmatpush1.bf16.msra.mxu0 %v763
      %2385 = vmatprep.subr.bf16.mxu0 %v766
      %2386 = vmatpush1.bf16.msra.mxu0 %v765
      %2387 = vmatprep.subr.bf16.mxu0 %v768
      %2388 = vmatpush1.bf16.msra.mxu0 %v767
      %2389 = vmatprep.subr.bf16.mxu0 %v770
      %2390 = vmatpush1.bf16.msra.mxu0 %v769
      %2391 = vmatprep.subr.bf16.mxu0 %v772
      %2392 = vmatpush1.bf16.msra.mxu0 %v771
      %2393 = vmatprep.subr.bf16.mxu0 %v774
      %2394 = vmatpush1.bf16.msra.mxu0 %v773
      %2395 = vmatprep.subr.bf16.mxu0 %v776
      %2396 = vmatpush1.bf16.msra.mxu0 %v775
      %2397 = vmatprep.subr.bf16.mxu0 %v778
      %2398 = vmatpush1.bf16.msra.mxu0 %v777
      %2399 = vmatprep.subr.bf16.mxu0 %v780
      %2400 = vmatpush1.bf16.msra.mxu0 %v779
      %2401 = vmatprep.subr.bf16.mxu0 %v782
      %2402 = vmatpush1.bf16.msra.mxu0 %v781
      %2403 = vmatprep.subr.bf16.mxu0 %v784
      %2404 = vmatpush1.bf16.msra.mxu0 %v783
      %2405 = vmatprep.subr.bf16.mxu0 %v786
      %2406 = vmatpush1.bf16.msra.mxu0 %v785
      %2407 = vmatprep.subr.bf16.mxu0 %v788
      %2408 = vmatpush1.bf16.msra.mxu0 %v787
      %2409 = vmatprep.subr.bf16.mxu0 %v790
      %2410 = vmatpush1.bf16.msra.mxu0 %v789
      %2411 = vmatprep.mubr.bf16.mxu0 %v2364
      %2412 = vmatmul.mubr.bf16.gmra.mrb[0].mxu0 %v2363
      %v2413 = vpop.f32.mrb[0].mxu0
      %v2414 = vadd.f32 0.0, %v2413
      %v2415 = vpop.f32.mrb[0].mxu0
      %v2416 = vadd.f32 0.0, %v2415
      %v2417 = vpop.f32.mrb[0].mxu0
      %v2418 = vadd.f32 0.0, %v2417
      %v2419 = vpop.f32.mrb[0].mxu0
      %v2420 = vadd.f32 0.0, %v2419
      %2421 = vmatprep.mubr.bf16.mxu0 %v2366
      %2422 = vmatmul.mubr.bf16.gmra.mrb[0].mxu0 %v2365
      %v2423 = vpop.f32.mrb[0].mxu0
      %v2424 = vadd.f32 0.0, %v2423
      %v2425 = vpop.f32.mrb[0].mxu0
      %v2426 = vadd.f32 0.0, %v2425
      %v2427 = vpop.f32.mrb[0].mxu0
      %v2428 = vadd.f32 0.0, %v2427
      %v2429 = vpop.f32.mrb[0].mxu0
      %v2430 = vadd.f32 0.0, %v2429
      %2431 = vmatprep.mubr.bf16.mxu0 %v2368
      %2432 = vmatmul.mubr.bf16.gmra.mrb[0].mxu0 %v2367
      %v2433 = vpop.f32.mrb[0].mxu0
      %v2434 = vadd.f32 0.0, %v2433
      %v2435 = vpop.f32.mrb[0].mxu0
      %v2436 = vadd.f32 0.0, %v2435
      %v2437 = vpop.f32.mrb[0].mxu0
      %v2438 = vadd.f32 0.0, %v2437
      %v2439 = vpop.f32.mrb[0].mxu0
      %v2440 = vadd.f32 0.0, %v2439
      %2441 = vmatprep.mubr.bf16.mxu0 %v2370
      %2442 = vmatmul.mubr.bf16.gmra.mrb[0].mxu0 %v2369
      %v2443 = vpop.f32.mrb[0].mxu0
      %v2444 = vadd.f32 0.0, %v2443
      %v2445 = vpop.f32.mrb[0].mxu0
      %v2446 = vadd.f32 0.0, %v2445
      %v2447 = vpop.f32.mrb[0].mxu0
      %v2448 = vadd.f32 0.0, %v2447
      %v2449 = vpop.f32.mrb[0].mxu0
      %v2450 = vadd.f32 0.0, %v2449
      %2451 = vdwg.mxu0
      %2468 = vrot.lane.b32.xlu0 %v2414, 112
      %v2469 = vpop.permute.xlu0 %2468
      %2470 = vrot.lane.b32.xlu0 %v2416, 112
      %v2471 = vpop.permute.xlu0 %2470
      %2472 = vrot.lane.b32.xlu0 %v2418, 112
      %v2473 = vpop.permute.xlu0 %2472
      %2474 = vrot.lane.b32.xlu0 %v2420, 112
      %v2475 = vpop.permute.xlu0 %2474
      %2476 = vrot.lane.b32.xlu0 %v2424, 112
      %v2477 = vpop.permute.xlu0 %2476
      %2478 = vrot.lane.b32.xlu0 %v2426, 112
      %v2479 = vpop.permute.xlu0 %2478
      %2480 = vrot.lane.b32.xlu0 %v2428, 112
      %v2481 = vpop.permute.xlu0 %2480
      %2482 = vrot.lane.b32.xlu0 %v2430, 112
      %v2483 = vpop.permute.xlu0 %2482
      %2484 = vrot.lane.b32.xlu0 %v2434, 112
      %v2485 = vpop.permute.xlu0 %2484
      %2486 = vrot.lane.b32.xlu0 %v2436, 112
      %v2487 = vpop.permute.xlu0 %2486
      %2488 = vrot.lane.b32.xlu0 %v2438, 112
      %v2489 = vpop.permute.xlu0 %2488
      %2490 = vrot.lane.b32.xlu0 %v2440, 112
      %v2491 = vpop.permute.xlu0 %2490
      %2492 = vrot.lane.b32.xlu0 %v2444, 112
      %v2493 = vpop.permute.xlu0 %2492
      %2494 = vrot.lane.b32.xlu0 %v2446, 112
      %v2495 = vpop.permute.xlu0 %2494
      %2496 = vrot.lane.b32.xlu0 %v2448, 112
      %v2497 = vpop.permute.xlu0 %2496
      %2498 = vrot.lane.b32.xlu0 %v2450, 112
      %v2499 = vpop.permute.xlu0 %2498
      %vm2500 = vcmask 916480
      %v2501 = vsel %vm2500, %v2469, %v2471
      %v2502 = vsel %vm2500, %v2473, %v2475
      %v2503 = vsel %vm2500, %v2477, %v2479
      %v2504 = vsel %vm2500, %v2481, %v2483
      %v2505 = vsel %vm2500, %v2485, %v2487
      %v2506 = vsel %vm2500, %v2489, %v2491
      %v2507 = vsel %vm2500, %v2493, %v2495
      %v2508 = vsel %vm2500, %v2497, %v2499
      %v2525 = vsel %vm2500, %v2471, 0.0
      %v2526 = vsel %vm2500, %v2475, 0.0
      %v2527 = vsel %vm2500, %v2479, 0.0
      %v2528 = vsel %vm2500, %v2483, 0.0
      %v2529 = vsel %vm2500, %v2487, 0.0
      %v2530 = vsel %vm2500, %v2491, 0.0
      %v2531 = vsel %vm2500, %v2495, 0.0
      %v2532 = vsel %vm2500, %v2499, 0.0
      %v2533 = vadd.f32 %v2314, %v2501
      %v2534 = vadd.f32 %v2315, %v2525
      %v2535 = vadd.f32 %v2316, %v2502
      %v2536 = vadd.f32 %v2317, %v2526
      %v2537 = vadd.f32 %v2318, %v2503
      %v2538 = vadd.f32 %v2319, %v2527
      %v2539 = vadd.f32 %v2320, %v2504
      %v2540 = vadd.f32 %v2321, %v2528
      %v2541 = vadd.f32 %v2322, %v2505
      %v2542 = vadd.f32 %v2323, %v2529
      %v2543 = vadd.f32 %v2324, %v2506
      %v2544 = vadd.f32 %v2325, %v2530
      %v2545 = vadd.f32 %v2326, %v2507
      %v2546 = vadd.f32 %v2327, %v2531
      %v2547 = vadd.f32 %v2328, %v2508
      %v2548 = vadd.f32 %v2329, %v2532
      %s2549 = scalar_lea.vmem %s5, 512
      %v2550 = vld [vmem:[%s2549] sm:$0xff]
      %v2551 = vld [vmem:[%s2549 + $0x8] sm:$0xff]
      %v2552 = vld [vmem:[%s2549 + $0x10] sm:$0xff]
      %v2553 = vld [vmem:[%s2549 + $0x18] sm:$0xff]
      %v2554 = vld [vmem:[%s2549 + $0x20] sm:$0xff]
      %v2555 = vld [vmem:[%s2549 + $0x28] sm:$0xff]
      %v2556 = vld [vmem:[%s2549 + $0x30] sm:$0xff]
      %v2557 = vld [vmem:[%s2549 + $0x38] sm:$0xff]
      %v2566 = vunpack.c.l.b16 %v2550
      %v2567 = vunpack.c.h.b16 %v2550
      %v2568 = vunpack.c.l.b16 %v2551
      %v2569 = vunpack.c.h.b16 %v2551
      %v2570 = vunpack.c.l.b16 %v2552
      %v2571 = vunpack.c.h.b16 %v2552
      %v2572 = vunpack.c.l.b16 %v2553
      %v2573 = vunpack.c.h.b16 %v2553
      %v2574 = vunpack.c.l.b16 %v2554
      %v2575 = vunpack.c.h.b16 %v2554
      %v2576 = vunpack.c.l.b16 %v2555
      %v2577 = vunpack.c.h.b16 %v2555
      %v2578 = vunpack.c.l.b16 %v2556
      %v2579 = vunpack.c.h.b16 %v2556
      %v2580 = vunpack.c.l.b16 %v2557
      %v2581 = vunpack.c.h.b16 %v2557
      %v2582 = vpack.c.b16 %v2568, %v2566
      %v2583 = vpack.c.b16 %v2569, %v2567
      %v2584 = vpack.c.b16 %v2572, %v2570
      %v2585 = vpack.c.b16 %v2573, %v2571
      %v2586 = vpack.c.b16 %v2576, %v2574
      %v2587 = vpack.c.b16 %v2577, %v2575
      %v2588 = vpack.c.b16 %v2580, %v2578
      %v2589 = vpack.c.b16 %v2581, %v2579
      %2598 = vmatprep.subr.bf16.mxu0 %v760
      %2599 = vmatpush1.bf16.msra.mxu0 %v759
      %2600 = vmatprep.subr.bf16.mxu0 %v762
      %2601 = vmatpush1.bf16.msra.mxu0 %v761
      %2602 = vmatprep.subr.bf16.mxu0 %v764
      %2603 = vmatpush1.bf16.msra.mxu0 %v763
      %2604 = vmatprep.subr.bf16.mxu0 %v766
      %2605 = vmatpush1.bf16.msra.mxu0 %v765
      %2606 = vmatprep.subr.bf16.mxu0 %v768
      %2607 = vmatpush1.bf16.msra.mxu0 %v767
      %2608 = vmatprep.subr.bf16.mxu0 %v770
      %2609 = vmatpush1.bf16.msra.mxu0 %v769
      %2610 = vmatprep.subr.bf16.mxu0 %v772
      %2611 = vmatpush1.bf16.msra.mxu0 %v771
      %2612 = vmatprep.subr.bf16.mxu0 %v774
      %2613 = vmatpush1.bf16.msra.mxu0 %v773
      %2614 = vmatprep.subr.bf16.mxu0 %v776
      %2615 = vmatpush1.bf16.msra.mxu0 %v775
      %2616 = vmatprep.subr.bf16.mxu0 %v778
      %2617 = vmatpush1.bf16.msra.mxu0 %v777
      %2618 = vmatprep.subr.bf16.mxu0 %v780
      %2619 = vmatpush1.bf16.msra.mxu0 %v779
      %2620 = vmatprep.subr.bf16.mxu0 %v782
      %2621 = vmatpush1.bf16.msra.mxu0 %v781
      %2622 = vmatprep.subr.bf16.mxu0 %v784
      %2623 = vmatpush1.bf16.msra.mxu0 %v783
      %2624 = vmatprep.subr.bf16.mxu0 %v786
      %2625 = vmatpush1.bf16.msra.mxu0 %v785
      %2626 = vmatprep.subr.bf16.mxu0 %v788
      %2627 = vmatpush1.bf16.msra.mxu0 %v787
      %2628 = vmatprep.subr.bf16.mxu0 %v790
      %2629 = vmatpush1.bf16.msra.mxu0 %v789
      %2630 = vmatprep.mubr.bf16.mxu0 %v2583
      %2631 = vmatmul.mubr.bf16.gmra.mrb[0].mxu0 %v2582
      %v2632 = vpop.f32.mrb[0].mxu0
      %v2633 = vadd.f32 0.0, %v2632
      %v2634 = vpop.f32.mrb[0].mxu0
      %v2635 = vadd.f32 0.0, %v2634
      %v2636 = vpop.f32.mrb[0].mxu0
      %v2637 = vadd.f32 0.0, %v2636
      %v2638 = vpop.f32.mrb[0].mxu0
      %v2639 = vadd.f32 0.0, %v2638
      %2640 = vmatprep.mubr.bf16.mxu0 %v2585
      %2641 = vmatmul.mubr.bf16.gmra.mrb[0].mxu0 %v2584
      %v2642 = vpop.f32.mrb[0].mxu0
      %v2643 = vadd.f32 0.0, %v2642
      %v2644 = vpop.f32.mrb[0].mxu0
      %v2645 = vadd.f32 0.0, %v2644
      %v2646 = vpop.f32.mrb[0].mxu0
      %v2647 = vadd.f32 0.0, %v2646
      %v2648 = vpop.f32.mrb[0].mxu0
      %v2649 = vadd.f32 0.0, %v2648
      %2650 = vmatprep.mubr.bf16.mxu0 %v2587
      %2651 = vmatmul.mubr.bf16.gmra.mrb[0].mxu0 %v2586
      %v2652 = vpop.f32.mrb[0].mxu0
      %v2653 = vadd.f32 0.0, %v2652
      %v2654 = vpop.f32.mrb[0].mxu0
      %v2655 = vadd.f32 0.0, %v2654
      %v2656 = vpop.f32.mrb[0].mxu0
      %v2657 = vadd.f32 0.0, %v2656
      %v2658 = vpop.f32.mrb[0].mxu0
      %v2659 = vadd.f32 0.0, %v2658
      %2660 = vmatprep.mubr.bf16.mxu0 %v2589
      %2661 = vmatmul.mubr.bf16.gmra.mrb[0].mxu0 %v2588
      %v2662 = vpop.f32.mrb[0].mxu0
      %v2663 = vadd.f32 0.0, %v2662
      %v2664 = vpop.f32.mrb[0].mxu0
      %v2665 = vadd.f32 0.0, %v2664
      %v2666 = vpop.f32.mrb[0].mxu0
      %v2667 = vadd.f32 0.0, %v2666
      %v2668 = vpop.f32.mrb[0].mxu0
      %v2669 = vadd.f32 0.0, %v2668
      %2670 = vdwg.mxu0
      %2687 = vrot.lane.b32.xlu0 %v2633, 111
      %v2688 = vpop.permute.xlu0 %2687
      %2689 = vrot.lane.b32.xlu0 %v2635, 111
      %v2690 = vpop.permute.xlu0 %2689
      %2691 = vrot.lane.b32.xlu0 %v2637, 111
      %v2692 = vpop.permute.xlu0 %2691
      %2693 = vrot.lane.b32.xlu0 %v2639, 111
      %v2694 = vpop.permute.xlu0 %2693
      %2695 = vrot.lane.b32.xlu0 %v2643, 111
      %v2696 = vpop.permute.xlu0 %2695
      %2697 = vrot.lane.b32.xlu0 %v2645, 111
      %v2698 = vpop.permute.xlu0 %2697
      %2699 = vrot.lane.b32.xlu0 %v2647, 111
      %v2700 = vpop.permute.xlu0 %2699
      %2701 = vrot.lane.b32.xlu0 %v2649, 111
      %v2702 = vpop.permute.xlu0 %2701
      %2703 = vrot.lane.b32.xlu0 %v2653, 111
      %v2704 = vpop.permute.xlu0 %2703
      %2705 = vrot.lane.b32.xlu0 %v2655, 111
      %v2706 = vpop.permute.xlu0 %2705
      %2707 = vrot.lane.b32.xlu0 %v2657, 111
      %v2708 = vpop.permute.xlu0 %2707
      %2709 = vrot.lane.b32.xlu0 %v2659, 111
      %v2710 = vpop.permute.xlu0 %2709
      %2711 = vrot.lane.b32.xlu0 %v2663, 111
      %v2712 = vpop.permute.xlu0 %2711
      %2713 = vrot.lane.b32.xlu0 %v2665, 111
      %v2714 = vpop.permute.xlu0 %2713
      %2715 = vrot.lane.b32.xlu0 %v2667, 111
      %v2716 = vpop.permute.xlu0 %2715
      %2717 = vrot.lane.b32.xlu0 %v2669, 111
      %v2718 = vpop.permute.xlu0 %2717
      %vm2719 = vcmask 908288
      %v2720 = vsel %vm2719, %v2688, %v2690
      %v2721 = vsel %vm2719, %v2692, %v2694
      %v2722 = vsel %vm2719, %v2696, %v2698
      %v2723 = vsel %vm2719, %v2700, %v2702
      %v2724 = vsel %vm2719, %v2704, %v2706
      %v2725 = vsel %vm2719, %v2708, %v2710
      %v2726 = vsel %vm2719, %v2712, %v2714
      %v2727 = vsel %vm2719, %v2716, %v2718
      %v2744 = vsel %vm2719, %v2690, 0.0
      %v2745 = vsel %vm2719, %v2694, 0.0
      %v2746 = vsel %vm2719, %v2698, 0.0
      %v2747 = vsel %vm2719, %v2702, 0.0
      %v2748 = vsel %vm2719, %v2706, 0.0
      %v2749 = vsel %vm2719, %v2710, 0.0
      %v2750 = vsel %vm2719, %v2714, 0.0
      %v2751 = vsel %vm2719, %v2718, 0.0
      %v2752 = vsel %vm1453, %v2720, 0.0
      %v2753 = vsel %vm1454, %v2744, 0.0
      %v2754 = vsel %vm1453, %v2721, 0.0
      %v2755 = vsel %vm1454, %v2745, 0.0
      %v2756 = vsel %vm1453, %v2722, 0.0
      %v2757 = vsel %vm1454, %v2746, 0.0
      %v2758 = vsel %vm1453, %v2723, 0.0
      %v2759 = vsel %vm1454, %v2747, 0.0
      %v2760 = vsel %vm1453, %v2724, 0.0
      %v2761 = vsel %vm1454, %v2748, 0.0
      %v2762 = vsel %vm1453, %v2725, 0.0
      %v2763 = vsel %vm1454, %v2749, 0.0
      %v2764 = vsel %vm1453, %v2726, 0.0
      %v2765 = vsel %vm1454, %v2750, 0.0
      %v2766 = vsel %vm1453, %v2727, 0.0
      %v2767 = vsel %vm1454, %v2751, 0.0
      %v2768 = vadd.f32 %v2533, %v2752
      %v2769 = vadd.f32 %v2534, %v2753
      %v2770 = vadd.f32 %v2535, %v2754
      %v2771 = vadd.f32 %v2536, %v2755
      %v2772 = vadd.f32 %v2537, %v2756
      %v2773 = vadd.f32 %v2538, %v2757
      %v2774 = vadd.f32 %v2539, %v2758
      %v2775 = vadd.f32 %v2540, %v2759
      %v2776 = vadd.f32 %v2541, %v2760
      %v2777 = vadd.f32 %v2542, %v2761
      %v2778 = vadd.f32 %v2543, %v2762
      %v2779 = vadd.f32 %v2544, %v2763
      %v2780 = vadd.f32 %v2545, %v2764
      %v2781 = vadd.f32 %v2546, %v2765
      %v2782 = vadd.f32 %v2547, %v2766
      %v2783 = vadd.f32 %v2548, %v2767
      %v2784 = vld [vmem:[%s6] sm:$0xff]
      %v2785 = vld [vmem:[%s6 + $0x8] sm:$0xff]
      %v2786 = vld [vmem:[%s6 + $0x10] sm:$0xff]
      %v2787 = vld [vmem:[%s6 + $0x18] sm:$0xff]
      %v2788 = vld [vmem:[%s6 + $0x20] sm:$0xff]
      %v2789 = vld [vmem:[%s6 + $0x28] sm:$0xff]
      %v2790 = vld [vmem:[%s6 + $0x30] sm:$0xff]
      %v2791 = vld [vmem:[%s6 + $0x38] sm:$0xff]
      %2793 = vset.pattern.permute.xlu0 0
      %2794 = vperm.xlu0 %2793, %v2784
      %v2795 = vpop.permute.xlu0 %2794
      %2798 = vset.pattern.permute.xlu0 0
      %2799 = vperm.xlu0 %2798, %v2785
      %v2800 = vpop.permute.xlu0 %2799
      %2803 = vset.pattern.permute.xlu0 0
      %2804 = vperm.xlu0 %2803, %v2786
      %v2805 = vpop.permute.xlu0 %2804
      %2808 = vset.pattern.permute.xlu0 0
      %2809 = vperm.xlu0 %2808, %v2787
      %v2810 = vpop.permute.xlu0 %2809
      %2813 = vset.pattern.permute.xlu0 0
      %2814 = vperm.xlu0 %2813, %v2788
      %v2815 = vpop.permute.xlu0 %2814
      %2818 = vset.pattern.permute.xlu0 0
      %2819 = vperm.xlu0 %2818, %v2789
      %v2820 = vpop.permute.xlu0 %2819
      %2823 = vset.pattern.permute.xlu0 0
      %2824 = vperm.xlu0 %2823, %v2790
      %v2825 = vpop.permute.xlu0 %2824
      %2828 = vset.pattern.permute.xlu0 0
      %2829 = vperm.xlu0 %2828, %v2791
      %v2830 = vpop.permute.xlu0 %2829
      %v2832 = vadd.f32 %v2768, %v2795
      %v2833 = vadd.f32 %v2769, %v2795
      %v2834 = vadd.f32 %v2770, %v2800
      %v2835 = vadd.f32 %v2771, %v2800
      %v2836 = vadd.f32 %v2772, %v2805
      %v2837 = vadd.f32 %v2773, %v2805
      %v2838 = vadd.f32 %v2774, %v2810
      %v2839 = vadd.f32 %v2775, %v2810
      %v2840 = vadd.f32 %v2776, %v2815
      %v2841 = vadd.f32 %v2777, %v2815
      %v2842 = vadd.f32 %v2778, %v2820
      %v2843 = vadd.f32 %v2779, %v2820
      %v2844 = vadd.f32 %v2780, %v2825
      %v2845 = vadd.f32 %v2781, %v2825
      %v2846 = vadd.f32 %v2782, %v2830
      %v2847 = vadd.f32 %v2783, %v2830
      %v2848 = vmax.f32 %v2832, 0.0
      %v2849 = vmax.f32 %v2833, 0.0
      %v2850 = vmax.f32 %v2834, 0.0
      %v2851 = vmax.f32 %v2835, 0.0
      %v2852 = vmax.f32 %v2836, 0.0
      %v2853 = vmax.f32 %v2837, 0.0
      %v2854 = vmax.f32 %v2838, 0.0
      %v2855 = vmax.f32 %v2839, 0.0
      %v2856 = vmax.f32 %v2840, 0.0
      %v2857 = vmax.f32 %v2841, 0.0
      %v2858 = vmax.f32 %v2842, 0.0
      %v2859 = vmax.f32 %v2843, 0.0
      %v2860 = vmax.f32 %v2844, 0.0
      %v2861 = vmax.f32 %v2845, 0.0
      %v2862 = vmax.f32 %v2846, 0.0
      %v2863 = vmax.f32 %v2847, 0.0
      %v2864 = vpack.c.bf16 %v576, %v574
      %v2865 = vpack.c.bf16 %v577, %v575
      %v2866 = vpack.c.bf16 %v580, %v578
      %v2867 = vpack.c.bf16 %v581, %v579
      %v2872 = vunpack.c.l.b16 %v2864
      %v2873 = vunpack.c.l.b16 %v2865
      %v2874 = vunpack.c.h.b16 %v2864
      %v2875 = vunpack.c.h.b16 %v2865
      %v2876 = vunpack.c.l.b16 %v2866
      %v2877 = vunpack.c.l.b16 %v2867
      %v2878 = vunpack.c.h.b16 %v2866
      %v2879 = vunpack.c.h.b16 %v2867
      %v2880 = vpack.c.b16 %v2873, %v2872
      %v2881 = vpack.c.b16 %v2875, %v2874
      %v2882 = vpack.c.b16 %v2877, %v2876
      %v2883 = vpack.c.b16 %v2879, %v2878
      %2888 = vst [vmem:[%s333] sm:$0xff] %v2880
      %2889 = vst [vmem:[%s333 + $0x8] sm:$0xff] %v2881
      %2890 = vst [vmem:[%s333 + $0x10] sm:$0xff] %v2882
      %2891 = vst [vmem:[%s333 + $0x18] sm:$0xff] %v2883
      %v2892 = vpack.c.bf16 %v2850, %v2848
      %v2893 = vpack.c.bf16 %v2851, %v2849
      %v2894 = vpack.c.bf16 %v2854, %v2852
      %v2895 = vpack.c.bf16 %v2855, %v2853
      %v2896 = vpack.c.bf16 %v2858, %v2856
      %v2897 = vpack.c.bf16 %v2859, %v2857
      %v2898 = vpack.c.bf16 %v2862, %v2860
      %v2899 = vpack.c.bf16 %v2863, %v2861
      %v2908 = vunpack.c.l.b16 %v2892
      %v2909 = vunpack.c.l.b16 %v2893
      %v2910 = vunpack.c.h.b16 %v2892
      %v2911 = vunpack.c.h.b16 %v2893
      %v2912 = vunpack.c.l.b16 %v2894
      %v2913 = vunpack.c.l.b16 %v2895
      %v2914 = vunpack.c.h.b16 %v2894
      %v2915 = vunpack.c.h.b16 %v2895
      %v2916 = vunpack.c.l.b16 %v2896
      %v2917 = vunpack.c.l.b16 %v2897
      %v2918 = vunpack.c.h.b16 %v2896
      %v2919 = vunpack.c.h.b16 %v2897
      %v2920 = vunpack.c.l.b16 %v2898
      %v2921 = vunpack.c.l.b16 %v2899
      %v2922 = vunpack.c.h.b16 %v2898
      %v2923 = vunpack.c.h.b16 %v2899
      %v2924 = vpack.c.b16 %v2909, %v2908
      %v2925 = vpack.c.b16 %v2911, %v2910
      %v2926 = vpack.c.b16 %v2913, %v2912
      %v2927 = vpack.c.b16 %v2915, %v2914
      %v2928 = vpack.c.b16 %v2917, %v2916
      %v2929 = vpack.c.b16 %v2919, %v2918
      %v2930 = vpack.c.b16 %v2921, %v2920
      %v2931 = vpack.c.b16 %v2923, %v2922
      %2940 = vst [vmem:[%s333 + $0x20] sm:$0xff] %v2924
      %2941 = vst [vmem:[%s333 + $0x28] sm:$0xff] %v2925
      %2942 = vst [vmem:[%s333 + $0x30] sm:$0xff] %v2926
      %2943 = vst [vmem:[%s333 + $0x38] sm:$0xff] %v2927
      %2944 = vst [vmem:[%s333 + $0x40] sm:$0xff] %v2928
      %2945 = vst [vmem:[%s333 + $0x48] sm:$0xff] %v2929
      %2946 = vst [vmem:[%s333 + $0x50] sm:$0xff] %v2930
      %2947 = vst [vmem:[%s333 + $0x58] sm:$0xff] %v2931
      %v2948 = vadd.f32 %v574, %v575
      %2949 = vadd.xlane.f32.xlu0 %v2948
      %v2950 = vpop.xlane.xlu0 %2949
      %v2951 = vadd.f32 %v576, %v577
      %2952 = vadd.xlane.f32.xlu0 %v2951
      %v2953 = vpop.xlane.xlu0 %2952
      %v2954 = vadd.f32 %v578, %v579
      %2955 = vadd.xlane.f32.xlu0 %v2954
      %v2956 = vpop.xlane.xlu0 %2955
      %v2957 = vadd.f32 %v580, %v581
      %2958 = vadd.xlane.f32.xlu0 %v2957
      %v2959 = vpop.xlane.xlu0 %2958
      %2960 = vst.msk [vmem:[%s338] sm:$0xff] %vm1657, %v2950
      %2961 = vst.msk [vmem:[%s338 + $0x8] sm:$0xff] %vm1657, %v2953
      %2962 = vst.msk [vmem:[%s338 + $0x10] sm:$0xff] %vm1657, %v2956
      %2963 = vst.msk [vmem:[%s338 + $0x18] sm:$0xff] %vm1657, %v2959
      %v2964 = vadd.f32 %v2848, %v2849
      %2965 = vadd.xlane.f32.xlu0 %v2964
      %v2966 = vpop.xlane.xlu0 %2965
      %v2967 = vadd.f32 %v2850, %v2851
      %2968 = vadd.xlane.f32.xlu0 %v2967
      %v2969 = vpop.xlane.xlu0 %2968
      %v2970 = vadd.f32 %v2852, %v2853
      %2971 = vadd.xlane.f32.xlu0 %v2970
      %v2972 = vpop.xlane.xlu0 %2971
      %v2973 = vadd.f32 %v2854, %v2855
      %2974 = vadd.xlane.f32.xlu0 %v2973
      %v2975 = vpop.xlane.xlu0 %2974
      %v2976 = vadd.f32 %v2856, %v2857
      %2977 = vadd.xlane.f32.xlu0 %v2976
      %v2978 = vpop.xlane.xlu0 %2977
      %v2979 = vadd.f32 %v2858, %v2859
      %2980 = vadd.xlane.f32.xlu0 %v2979
      %v2981 = vpop.xlane.xlu0 %2980
      %v2982 = vadd.f32 %v2860, %v2861
      %2983 = vadd.xlane.f32.xlu0 %v2982
      %v2984 = vpop.xlane.xlu0 %2983
      %v2985 = vadd.f32 %v2862, %v2863
      %2986 = vadd.xlane.f32.xlu0 %v2985
      %v2987 = vpop.xlane.xlu0 %2986
      %2988 = vst.msk [vmem:[%s338 + $0x20] sm:$0xff] %vm1657, %v2966
      %2989 = vst.msk [vmem:[%s338 + $0x28] sm:$0xff] %vm1657, %v2969
      %2990 = vst.msk [vmem:[%s338 + $0x30] sm:$0xff] %vm1657, %v2972
      %2991 = vst.msk [vmem:[%s338 + $0x38] sm:$0xff] %vm1657, %v2975
      %2992 = vst.msk [vmem:[%s338 + $0x40] sm:$0xff] %vm1657, %v2978
      %2993 = vst.msk [vmem:[%s338 + $0x48] sm:$0xff] %vm1657, %v2981
      %2994 = vst.msk [vmem:[%s338 + $0x50] sm:$0xff] %vm1657, %v2984
      %2995 = vst.msk [vmem:[%s338 + $0x58] sm:$0xff] %vm1657, %v2987
      %p2996 = scmp.lt.s32.totalorder %s20, 1
      %s2997 = scalar_select %p2996, %s20, 1
      %s2998 = smul.addr %s2997, 24
      %s2999 = smul.addr %s2998, 4
      %s3000 = scalar_lea.vmem %s7, %s2999
      %p3001 = scmp.lt.s32.totalorder %s20, 1
      %s3002 = scalar_select %p3001, %s20, 1
      %s3003 = smul.addr %s3002, 12
      %s3004 = smul.addr %s3003, 8
      %s3005 = scalar_lea.vmem %s8, %s3004
      // Predicated region
      $region49: #{gama_part_decoder.2} parent=47 // pred_check
        %p3006 = pneg %p195
      $region50: #{gama_part_decoder.2} parent=47 // pred_check_branch
        %3008 = sbr.rel (%p3006) target = $region52
      $region51: #{gama_part_decoder.2} parent=47 // pred_region
        _
      $region52: #{gama_part_decoder.2} parent=47 // pred_fallthru
        _
      // Predicated region
      $region53: #{gama_part_decoder.2} parent=47 // pred_check
        %p3009 = pneg %p221
      $region54: #{gama_part_decoder.2} parent=47 // pred_check_branch
        %3011 = sbr.rel (%p3009) target = $region56
      $region55: #{gama_part_decoder.2} parent=47 // pred_region
        _
      $region56: #{gama_part_decoder.2} parent=47 // pred_fallthru
        _
    $region48: #{gama_part_decoder.2} parent=5 // pred_fallthru
      _
    %p3012 = scmp.le.s32.totalorder 2, %s15
    // Predicated region
    $region57: #{gama_part_decoder.2} parent=5 // pred_check
      %p3013 = pneg %p3012
    $region58: #{gama_part_decoder.2} parent=5 // pred_check_branch
      %3015 = sbr.rel (%p3013) target = $region60
    $region59: #{gama_part_decoder.2} parent=5 // pred_region
      %s3016 = ssub.s32 %s15, 2
      // Predicated region
      $region61: #{gama_part_decoder.2} parent=59 // pred_check
        %p3017 = pneg %p201
      $region62: #{gama_part_decoder.2} parent=59 // pred_check_branch
        %3019 = sbr.rel (%p3017) target = $region64
      $region63: #{gama_part_decoder.2} parent=59 // pred_region
        %p3020 = scmp.lt.s32.totalorder %s21, 1
        %s3021 = scalar_select %p3020, %s21, 1
        %s3022 = smul.addr %s3021, 24
        %s3023 = smul.addr %s3022, 4
        %s3024 = scalar_lea.vmem %s7, %s3023
      $region64: #{gama_part_decoder.2} parent=59 // pred_fallthru
        _
      // Predicated region
      $region65: #{gama_part_decoder.2} parent=59 // pred_check
        %p3025 = pneg %p227
      $region66: #{gama_part_decoder.2} parent=59 // pred_check_branch
        %3027 = sbr.rel (%p3025) target = $region68
      $region67: #{gama_part_decoder.2} parent=59 // pred_region
        %p3028 = scmp.lt.s32.totalorder %s21, 1
        %s3029 = scalar_select %p3028, %s21, 1
        %s3030 = smul.addr %s3029, 12
        %s3031 = smul.addr %s3030, 8
        %s3032 = scalar_lea.vmem %s8, %s3031
      $region68: #{gama_part_decoder.2} parent=59 // pred_fallthru
        _
    $region60: #{gama_part_decoder.2} parent=5 // pred_fallthru
      _
  $region6: #{gama_part_decoder.2} parent=0 // loop_footer
    %s19 = sadd.s32 1, %s15
  $region7: #{gama_part_decoder.2} parent=0 // loop_footer_branch
    %14 = sbr.rel target = $region3
  $region8: #{gama_part_decoder.2} parent=0 // loop_exit
    _

</llo_original>
